<compile_context>
chip_gen: v6e
topology: v6e:2x2x1
jax: 0.10.0
libtpu: 0.0.40
codegen_flags: <defaults>
</compile_context>

<pallas_src>
import functools

import jax
import jax.numpy as jnp
from jax.experimental import pallas as pl
from jax.experimental.pallas import tpu as pltpu


def _round_up(x, m):
    return ((x + m - 1) // m) * m


def protonet_head_kernel(x_ref, w1_ref, b1_ref, w2_ref, b2_ref, o_ref, *, hw, c):
    # x_ref : (tb, hw*c) bf16/f32  -- channels-last feature-map tile, flattened
    # w1_ref: (c, 512)   bf16 (1/HW pool scale pre-folded), b1_ref: (1, 512) f32
    # w2_ref: (512, 128) bf16,                              b2_ref: (1, 128) f32
    # o_ref : (tb, 128)  f32

    # Global average pool: hw static, lane-aligned (c = 2048 = 16*128) slice-adds,
    # accumulated in f32 (the 1/hw scale is folded into w1).
    pooled = x_ref[:, 0:c].astype(jnp.float32)                       # (tb, c)
    for s in range(1, hw):
        pooled = pooled + x_ref[:, s * c:(s + 1) * c].astype(jnp.float32)

    # fc1 -> ReLU (bf16 MXU operands, f32 accumulation / bias / ReLU).
    h = jnp.dot(pooled.astype(jnp.bfloat16), w1_ref[...],
                preferred_element_type=jnp.float32) + b1_ref[...]    # (tb, 512)
    h = jnp.maximum(h, 0.0)

    # fc2
    o = jnp.dot(h.astype(jnp.bfloat16), w2_ref[...],
                preferred_element_type=jnp.float32) + b2_ref[...]    # (tb, 128)
    o_ref[...] = o.astype(o_ref.dtype)


def protonet_forward(x, w1, b1, w2, b2, *, tb=None):
    """ProtoNet head: global-avg-pool (if HW > 1) -> fc1 -> ReLU -> fc2.

    x : backbone features, preferably channels-last (B, HW, 2048) in bf16 (no extra
        HBM pass).  Also accepts (B, 2048) pooled features, or (B, 2048, H, W) NCHW
        (the latter pays one extra HBM relayout pass; avoid on the hot path).
    w1: (2048, 512), b1: (512,), w2: (512, 128), b2: (128,)   [(in, out) layout]
    Returns (B, 128) float32.
    """
    if x.ndim == 4:
        # NCHW fallback: costs one full extra HBM read+write of the feature map.
        B, C, H, W = x.shape
        x = jnp.transpose(x.reshape(B, C, H * W), (0, 2, 1))         # (B, HW, C)
    if x.ndim == 2:
        x = x[:, None, :]                                            # (B, 1, C)
    B, HW, C = x.shape
    assert C == 2048, C

    # Free contiguous reshape to a lane-dense 2-D block (HW*C is a multiple of 128):
    # no bf16 sublane padding of the HW dim, so VMEM footprint == budget.
    xk = x.reshape(B, HW * C)
    itemsize = jnp.dtype(xk.dtype).itemsize
    row_bytes = HW * C * itemsize

    # Fold the 1/HW pool scale into fc1's weight; bf16 MXU operands, f32 biases.
    w1k = (w1 * (1.0 / float(HW))).astype(jnp.bfloat16)              # (2048, 512)
    w2k = w2.astype(jnp.bfloat16)                                    # (512, 128)
    b1k = b1.reshape(1, 512).astype(jnp.float32)
    b2k = b2.reshape(1, 128).astype(jnp.float32)

    # Chip-aware VMEM caps: conservative on v7x (64 MiB / TensorCore), larger on
    # v5e / v6e (128 MiB).
    try:
        vmem_cap = pltpu.get_tpu_info().vmem_capacity_bytes
    except Exception:  # no TPU info available -> assume smallest (v7x-like)
        vmem_cap = 64 << 20
    small_vmem = vmem_cap <= (64 << 20)
    x_buf_cap = (8 << 20) if small_vmem else (20 << 20)              # per x buffer
    vmem_limit_cap = (48 << 20) if small_vmem else (96 << 20)

    # Batch tile: multiple of 16 (bf16 sublane pack), capped by the per-buffer
    # budget; on v7x keep >= 2 grid steps so both TensorCores get work.
    max_tb = max(16, (x_buf_cap // row_bytes) // 16 * 16)
    if tb is None:
        if B <= 16:
            tb = B                                   # single block == full dim
        else:
            tb = min(256, max_tb)
            if small_vmem:
                tb = min(tb, max(16, _round_up(-(-B // 2), 16)))
    tb = int(tb)
    if tb >= B:
        tb = B                     # block dim == full array dim (always legal)
    elif tb % 8 != 0:
        tb = max(8, (tb // 8) * 8)

    grid = (pl.cdiv(B, tb),)       # ragged last block is masked by Pallas

    # VMEM budget: double-buffered x / out blocks + (worst case double-buffered)
    # resident weights + scratch headroom.
    x_blk = tb * row_bytes
    out_blk = tb * 128 * 4
    w_bytes = (2048 * 512 + 512 * 128) * 2 + (512 + 128) * 4
    vmem_bytes = 2 * (x_blk + out_blk + w_bytes) + (4 << 20)
    vmem_bytes = int(min(max(vmem_bytes, 16 << 20), vmem_limit_cap))

    cost = pl.CostEstimate(
        flops=2 * B * 2048 * 512 + 2 * B * 512 * 128 + B * HW * 2048,
        transcendentals=0,
        bytes_accessed=B * row_bytes + w_bytes + B * 128 * 4,
    )

    kernel = functools.partial(protonet_head_kernel, hw=HW, c=C)

    return pl.pallas_call(
        kernel,
        out_shape=jax.ShapeDtypeStruct((B, 128), jnp.float32),       # no pad / slice
        grid=grid,
        in_specs=[
            pl.BlockSpec((tb, HW * C), lambda i: (i, 0)),            # x: tiled over batch
            pl.BlockSpec((2048, 512), lambda i: (0, 0)),             # w1: VMEM-resident
            pl.BlockSpec((1, 512), lambda i: (0, 0)),                # b1: VMEM-resident
            pl.BlockSpec((512, 128), lambda i: (0, 0)),              # w2: VMEM-resident
            pl.BlockSpec((1, 128), lambda i: (0, 0)),                # b2: VMEM-resident
        ],
        out_specs=pl.BlockSpec((tb, 128), lambda i: (i, 0)),
        compiler_params=pltpu.CompilerParams(
            dimension_semantics=("parallel",),
            vmem_limit_bytes=vmem_bytes,
        ),
        cost_estimate=cost,
    )(xk, w1k, b1k, w2k, b2k)


def init_params(key):
    # Deterministic init mimicking nn.Linear default (uniform +/- 1/sqrt(fan_in)).
    k1, k2, k3, k4 = jax.random.split(key, 4)
    lim1 = 1.0 / (2048.0 ** 0.5)
    lim2 = 1.0 / (512.0 ** 0.5)
    # stored as (in, out), i.e. the transpose of PyTorch's (out, in) weight
    w1 = jax.random.uniform(k1, (2048, 512), jnp.float32, -lim1, lim1)
    b1 = jax.random.uniform(k2, (512,), jnp.float32, -lim1, lim1)
    w2 = jax.random.uniform(k3, (512, 128), jnp.float32, -lim2, lim2)
    b2 = jax.random.uniform(k4, (128,), jnp.float32, -lim2, lim2)
    return w1, b1, w2, b2


if __name__ == "__main__":
    key = jax.random.PRNGKey(0)
    kx, kp = jax.random.split(key)

    # Channels-last bf16 feature map as the (hypothetical) fused backbone epilogue
    # would emit it: B=2, HW=16 (4x4 spatial), C=2048.
    B, HW, C = 2, 16, 2048
    x_f32 = jax.random.normal(kx, (B, HW, C), jnp.float32)
    x = x_f32.astype(jnp.bfloat16)        # backbone emits bf16 channels-last directly

    w1, b1, w2, b2 = init_params(kp)

    out = protonet_forward(x, w1, b1, w2, b2)
    out = jax.block_until_ready(out)

    # Pure-JAX f32 reference of the same math over the SAME bf16 features.
    feats = jnp.mean(x.astype(jnp.float32), axis=1)                  # (B, 2048)
    ref = jnp.maximum(feats @ w1 + b1, 0.0) @ w2 + b2                # (B, 128)
    assert out.shape == (B, 128)
    # bf16 MXU operands (f32 accumulation) -> small deviation from the f32 reference.
    assert jnp.allclose(out, ref, atol=2e-2, rtol=2e-2)

    print("KERNEL_OK")
</pallas_src>

<mosaic_0001>
module attributes {stable_mosaic.version = 11 : i64} {
  func.func @protonet_head_kernel(%arg0: i32, %arg1: memref<2x32768xbf16, #tpu.memory_space<vmem>>, %arg2: memref<2048x512xbf16, #tpu.memory_space<vmem>>, %arg3: memref<1x512xf32, #tpu.memory_space<vmem>>, %arg4: memref<512x128xbf16, #tpu.memory_space<vmem>>, %arg5: memref<1x128xf32, #tpu.memory_space<vmem>>, %arg6: memref<2x128xf32, #tpu.memory_space<vmem>>) attributes {dimension_semantics = [#tpu.dimension_semantics<parallel>], iteration_bounds = array<i64: 1>, scalar_prefetch = 0 : i64, scratch_operands = 0 : i64, tpu.core_type = #tpu.core_type<tc>, window_params = [{transform_indices = @transform_0, window_bounds = array<i64: 2, 32768>}, {pipeline_mode = #tpu.pipeline_mode<synchronous>, transform_indices = @transform_1, window_bounds = array<i64: 2048, 512>}, {pipeline_mode = #tpu.pipeline_mode<synchronous>, transform_indices = @transform_2, window_bounds = array<i64: 1, 512>}, {pipeline_mode = #tpu.pipeline_mode<synchronous>, transform_indices = @transform_3, window_bounds = array<i64: 512, 128>}, {pipeline_mode = #tpu.pipeline_mode<synchronous>, transform_indices = @transform_4, window_bounds = array<i64: 1, 128>}, {transform_indices = @transform_5, window_bounds = array<i64: 2, 128>}]} {
    %c0 = arith.constant 0 : index
    %c0_0 = arith.constant 0 : index
    %0 = vector.load %arg1[%c0, %c0_0] : memref<2x32768xbf16, #tpu.memory_space<vmem>>, vector<2x2048xbf16>
    %1 = arith.extf %0 : vector<2x2048xbf16> to vector<2x2048xf32>
    %c0_1 = arith.constant 0 : index
    %c2048 = arith.constant 2048 : index
    %2 = vector.load %arg1[%c0_1, %c2048] : memref<2x32768xbf16, #tpu.memory_space<vmem>>, vector<2x2048xbf16>
    %3 = arith.extf %2 : vector<2x2048xbf16> to vector<2x2048xf32>
    %4 = arith.addf %1, %3 : vector<2x2048xf32>
    %c0_2 = arith.constant 0 : index
    %c4096 = arith.constant 4096 : index
    %5 = vector.load %arg1[%c0_2, %c4096] : memref<2x32768xbf16, #tpu.memory_space<vmem>>, vector<2x2048xbf16>
    %6 = arith.extf %5 : vector<2x2048xbf16> to vector<2x2048xf32>
    %7 = arith.addf %4, %6 : vector<2x2048xf32>
    %c0_3 = arith.constant 0 : index
    %c6144 = arith.constant 6144 : index
    %8 = vector.load %arg1[%c0_3, %c6144] : memref<2x32768xbf16, #tpu.memory_space<vmem>>, vector<2x2048xbf16>
    %9 = arith.extf %8 : vector<2x2048xbf16> to vector<2x2048xf32>
    %10 = arith.addf %7, %9 : vector<2x2048xf32>
    %c0_4 = arith.constant 0 : index
    %c8192 = arith.constant 8192 : index
    %11 = vector.load %arg1[%c0_4, %c8192] : memref<2x32768xbf16, #tpu.memory_space<vmem>>, vector<2x2048xbf16>
    %12 = arith.extf %11 : vector<2x2048xbf16> to vector<2x2048xf32>
    %13 = arith.addf %10, %12 : vector<2x2048xf32>
    %c0_5 = arith.constant 0 : index
    %c10240 = arith.constant 10240 : index
    %14 = vector.load %arg1[%c0_5, %c10240] : memref<2x32768xbf16, #tpu.memory_space<vmem>>, vector<2x2048xbf16>
    %15 = arith.extf %14 : vector<2x2048xbf16> to vector<2x2048xf32>
    %16 = arith.addf %13, %15 : vector<2x2048xf32>
    %c0_6 = arith.constant 0 : index
    %c12288 = arith.constant 12288 : index
    %17 = vector.load %arg1[%c0_6, %c12288] : memref<2x32768xbf16, #tpu.memory_space<vmem>>, vector<2x2048xbf16>
    %18 = arith.extf %17 : vector<2x2048xbf16> to vector<2x2048xf32>
    %19 = arith.addf %16, %18 : vector<2x2048xf32>
    %c0_7 = arith.constant 0 : index
    %c14336 = arith.constant 14336 : index
    %20 = vector.load %arg1[%c0_7, %c14336] : memref<2x32768xbf16, #tpu.memory_space<vmem>>, vector<2x2048xbf16>
    %21 = arith.extf %20 : vector<2x2048xbf16> to vector<2x2048xf32>
    %22 = arith.addf %19, %21 : vector<2x2048xf32>
    %c0_8 = arith.constant 0 : index
    %c16384 = arith.constant 16384 : index
    %23 = vector.load %arg1[%c0_8, %c16384] : memref<2x32768xbf16, #tpu.memory_space<vmem>>, vector<2x2048xbf16>
    %24 = arith.extf %23 : vector<2x2048xbf16> to vector<2x2048xf32>
    %25 = arith.addf %22, %24 : vector<2x2048xf32>
    %c0_9 = arith.constant 0 : index
    %c18432 = arith.constant 18432 : index
    %26 = vector.load %arg1[%c0_9, %c18432] : memref<2x32768xbf16, #tpu.memory_space<vmem>>, vector<2x2048xbf16>
    %27 = arith.extf %26 : vector<2x2048xbf16> to vector<2x2048xf32>
    %28 = arith.addf %25, %27 : vector<2x2048xf32>
    %c0_10 = arith.constant 0 : index
    %c20480 = arith.constant 20480 : index
    %29 = vector.load %arg1[%c0_10, %c20480] : memref<2x32768xbf16, #tpu.memory_space<vmem>>, vector<2x2048xbf16>
    %30 = arith.extf %29 : vector<2x2048xbf16> to vector<2x2048xf32>
    %31 = arith.addf %28, %30 : vector<2x2048xf32>
    %c0_11 = arith.constant 0 : index
    %c22528 = arith.constant 22528 : index
    %32 = vector.load %arg1[%c0_11, %c22528] : memref<2x32768xbf16, #tpu.memory_space<vmem>>, vector<2x2048xbf16>
    %33 = arith.extf %32 : vector<2x2048xbf16> to vector<2x2048xf32>
    %34 = arith.addf %31, %33 : vector<2x2048xf32>
    %c0_12 = arith.constant 0 : index
    %c24576 = arith.constant 24576 : index
    %35 = vector.load %arg1[%c0_12, %c24576] : memref<2x32768xbf16, #tpu.memory_space<vmem>>, vector<2x2048xbf16>
    %36 = arith.extf %35 : vector<2x2048xbf16> to vector<2x2048xf32>
    %37 = arith.addf %34, %36 : vector<2x2048xf32>
    %c0_13 = arith.constant 0 : index
    %c26624 = arith.constant 26624 : index
    %38 = vector.load %arg1[%c0_13, %c26624] : memref<2x32768xbf16, #tpu.memory_space<vmem>>, vector<2x2048xbf16>
    %39 = arith.extf %38 : vector<2x2048xbf16> to vector<2x2048xf32>
    %40 = arith.addf %37, %39 : vector<2x2048xf32>
    %c0_14 = arith.constant 0 : index
    %c28672 = arith.constant 28672 : index
    %41 = vector.load %arg1[%c0_14, %c28672] : memref<2x32768xbf16, #tpu.memory_space<vmem>>, vector<2x2048xbf16>
    %42 = arith.extf %41 : vector<2x2048xbf16> to vector<2x2048xf32>
    %43 = arith.addf %40, %42 : vector<2x2048xf32>
    %c0_15 = arith.constant 0 : index
    %c30720 = arith.constant 30720 : index
    %44 = vector.load %arg1[%c0_15, %c30720] : memref<2x32768xbf16, #tpu.memory_space<vmem>>, vector<2x2048xbf16>
    %45 = arith.extf %44 : vector<2x2048xbf16> to vector<2x2048xf32>
    %46 = arith.addf %43, %45 : vector<2x2048xf32>
    %47 = arith.truncf %46 : vector<2x2048xf32> to vector<2x2048xbf16>
    %c0_16 = arith.constant 0 : index
    %c0_17 = arith.constant 0 : index
    %48 = vector.load %arg2[%c0_16, %c0_17] : memref<2048x512xbf16, #tpu.memory_space<vmem>>, vector<2048x512xbf16>
    %cst = arith.constant dense<0.000000e+00> : vector<2x512xf32>
    %49 = tpu.matmul %47, %48, %cst {dimension_numbers = #tpu.dot_dimension_numbers<[1], [0], [0], [1], [0, 0, 1, 1], [], []>} : vector<2x2048xbf16>, vector<2048x512xbf16>, vector<2x512xf32> -> vector<2x512xf32>
    %c0_18 = arith.constant 0 : index
    %c0_19 = arith.constant 0 : index
    %50 = vector.load %arg3[%c0_18, %c0_19] : memref<1x512xf32, #tpu.memory_space<vmem>>, vector<1x512xf32>
    %51 = vector.broadcast %50 : vector<1x512xf32> to vector<2x512xf32>
    %52 = arith.addf %49, %51 : vector<2x512xf32>
    %cst_20 = arith.constant 0.000000e+00 : f32
    %53 = vector.broadcast %cst_20 : f32 to vector<2x512xf32>
    %54 = arith.maximumf %52, %53 : vector<2x512xf32>
    %55 = arith.truncf %54 : vector<2x512xf32> to vector<2x512xbf16>
    %c0_21 = arith.constant 0 : index
    %c0_22 = arith.constant 0 : index
    %56 = vector.load %arg4[%c0_21, %c0_22] : memref<512x128xbf16, #tpu.memory_space<vmem>>, vector<512x128xbf16>
    %cst_23 = arith.constant dense<0.000000e+00> : vector<2x128xf32>
    %57 = tpu.matmul %55, %56, %cst_23 {dimension_numbers = #tpu.dot_dimension_numbers<[1], [0], [0], [1], [0, 0, 1, 1], [], []>} : vector<2x512xbf16>, vector<512x128xbf16>, vector<2x128xf32> -> vector<2x128xf32>
    %c0_24 = arith.constant 0 : index
    %c0_25 = arith.constant 0 : index
    %58 = vector.load %arg5[%c0_24, %c0_25] : memref<1x128xf32, #tpu.memory_space<vmem>>, vector<1x128xf32>
    %59 = vector.broadcast %58 : vector<1x128xf32> to vector<2x128xf32>
    %60 = arith.addf %57, %59 : vector<2x128xf32>
    %c0_26 = arith.constant 0 : index
    %c0_27 = arith.constant 0 : index
    %61 = vector.load %arg6[%c0_26, %c0_27] : memref<2x128xf32, #tpu.memory_space<vmem>>, vector<2x128xf32>
    tpu.vector_store %arg6[%c0_26, %c0_27], %60 {strides = array<i32>} : memref<2x128xf32, #tpu.memory_space<vmem>>, vector<2x128xf32>,
    return
  }
  func.func @transform_0(%arg0: i32) -> (i32, i32) {
    %c0_i32 = arith.constant 0 : i32
    %c0_i32_0 = arith.constant 0 : i32
    return %arg0, %c0_i32 : i32, i32
  }
  func.func @transform_1(%arg0: i32) -> (i32, i32) {
    %c0_i32 = arith.constant 0 : i32
    %c0_i32_0 = arith.constant 0 : i32
    %c0_i32_1 = arith.constant 0 : i32
    return %c0_i32, %c0_i32_0 : i32, i32
  }
  func.func @transform_2(%arg0: i32) -> (i32, i32) {
    %c0_i32 = arith.constant 0 : i32
    %c0_i32_0 = arith.constant 0 : i32
    %c0_i32_1 = arith.constant 0 : i32
    return %c0_i32, %c0_i32_0 : i32, i32
  }
  func.func @transform_3(%arg0: i32) -> (i32, i32) {
    %c0_i32 = arith.constant 0 : i32
    %c0_i32_0 = arith.constant 0 : i32
    %c0_i32_1 = arith.constant 0 : i32
    return %c0_i32, %c0_i32_0 : i32, i32
  }
  func.func @transform_4(%arg0: i32) -> (i32, i32) {
    %c0_i32 = arith.constant 0 : i32
    %c0_i32_0 = arith.constant 0 : i32
    %c0_i32_1 = arith.constant 0 : i32
    return %c0_i32, %c0_i32_0 : i32, i32
  }
  func.func @transform_5(%arg0: i32) -> (i32, i32) {
    %c0_i32 = arith.constant 0 : i32
    %c0_i32_0 = arith.constant 0 : i32
    return %arg0, %c0_i32 : i32, i32
  }
}

</mosaic_0001>

<llo_original>
// kernel: tpu_custom_call.1
$region0: #{tpu_custom_call.1}
  #allocation0 [shape = 'u32[]', space=smem, size = 0x4, offset = 0x4, fixed_abs, tag = 'smem constant byte address 0x4 - core index']
  #allocation1 [shape = 'u32[144,128]{1,0:T(1,128)}', space=vmem, size = 0x12000, scoped, tag = 'internal scratch']
  %s0 = inlined_call_operand.hbm [shape: bf16[2,32768], index: 0, kind: input, shape index: {}]
  %s1 = inlined_call_operand.hbm [shape: bf16[2048,512], index: 1, kind: input, shape index: {}]
  %s2 = inlined_call_operand.hbm [shape: f32[1,512], index: 2, kind: input, shape index: {}]
  %s3 = inlined_call_operand.hbm [shape: bf16[512,128], index: 3, kind: input, shape index: {}]
  %s4 = inlined_call_operand.hbm [shape: f32[1,128], index: 4, kind: input, shape index: {}]
  %s5 = inlined_call_operand.hbm [shape: f32[2,128], index: 5, kind: output, shape index: {}]
  %s6 = sld [smem:[#allocation0]]
  $region50: #{tpu_custom_call.1} parent=0
    _
  %s8 = ssub.s32 1, %s6
  %s9 = scalar_select 0, %s8, %s6
  $region1: #{tpu_custom_call.1} parent=0
    #allocation2 [shape = 'u8[131072]{0}', space=vmem, size = 0x20000, scoped, tag = 'input window, operand 0, single buffered']
    #allocation3 [shape = 's32[1]{0}', space=sflag, size = 0x4, scoped, tag = 'scoped memory for tpu_custom_call.1']
    #allocation4 [shape = 's32[1]{0}', space=sflag, size = 0x4, scoped, tag = 'scoped memory for tpu_custom_call.1']
    #allocation5 [shape = 'u8[2097152]{0}', space=vmem, size = 0x200000, scoped, tag = 'input window, operand 1, single buffered']
    #allocation6 [shape = 's32[1]{0}', space=sflag, size = 0x4, scoped, tag = 'scoped memory for tpu_custom_call.1']
    #allocation7 [shape = 'u8[2048]{0}', space=vmem, size = 0x800, scoped, tag = 'input window, operand 2, single buffered']
    #allocation8 [shape = 'u8[131072]{0}', space=vmem, size = 0x20000, scoped, tag = 'input window, operand 3, single buffered']
    #allocation9 [shape = 's32[1]{0}', space=sflag, size = 0x4, scoped, tag = 'scoped memory for tpu_custom_call.1']
    #allocation10 [shape = 'u8[512]{0}', space=vmem, size = 0x400, scoped, tag = 'input window, operand 4, single buffered']
    #allocation11 [shape = 'u8[1024]{0}', space=vmem, size = 0x400, scoped, tag = 'output window, operand 0, single buffered']
    %10 = vsyncpa [#allocation3], 0
    %11 = vsyncpa [#allocation6], 0
    %12 = vsyncpa [#allocation9], 0
    %13 = vsyncpa [#allocation4], 0
    // Predicated region
    $region2: #{tpu_custom_call.1} parent=1 // pred_check
      _
    $region3: #{tpu_custom_call.1} parent=1 // pred_check_branch
      %15 = sbr.rel (0) target = $region5
    $region4: #{tpu_custom_call.1} parent=1 // pred_region
      %s17 = ssub.s32 4096, 4096
      %18 = vsyncadd [#allocation3], %s17
      %s20 = sshll.u32 [#allocation2], 4
      %s21 = int_to_ptr.vmem [resolvable:$true] %s20
      %23 = dma.hbm_to_vmem [thread:$0]  %s0, 4096, %s21, [#allocation3]
    $region5: #{tpu_custom_call.1} parent=1 // pred_fallthru
      _
    // Predicated region
    $region6: #{tpu_custom_call.1} parent=1 // pred_check
      _
    $region7: #{tpu_custom_call.1} parent=1 // pred_check_branch
      %25 = sbr.rel (0) target = $region9
    $region8: #{tpu_custom_call.1} parent=1 // pred_region
      %s27 = ssub.s32 65536, 65536
      %28 = vsyncadd [#allocation6], %s27
      %s29 = sshll.u32 [#allocation5], 4
      %s30 = int_to_ptr.vmem [resolvable:$true] %s29
      %35 = dma.hbm_to_vmem [thread:$0]  %s1, 65536, %s30, [#allocation6], 256, 256, 16
    $region9: #{tpu_custom_call.1} parent=1 // pred_fallthru
      _
    // Predicated region
    $region10: #{tpu_custom_call.1} parent=1 // pred_check
      _
    $region11: #{tpu_custom_call.1} parent=1 // pred_check_branch
      %37 = sbr.rel (0) target = $region13
    $region12: #{tpu_custom_call.1} parent=1 // pred_region
      %s39 = ssub.s32 64, 64
      %40 = vsyncadd [#allocation6], %s39
      %s42 = sshll.u32 [#allocation7], 4
      %s43 = int_to_ptr.vmem [resolvable:$true] %s42
      %45 = dma.hbm_to_vmem [thread:$0]  %s2, 64, %s43, [#allocation6]
    $region13: #{tpu_custom_call.1} parent=1 // pred_fallthru
      _
    // Predicated region
    $region14: #{tpu_custom_call.1} parent=1 // pred_check
      _
    $region15: #{tpu_custom_call.1} parent=1 // pred_check_branch
      %47 = sbr.rel (0) target = $region17
    $region16: #{tpu_custom_call.1} parent=1 // pred_region
      %s49 = ssub.s32 4096, 4096
      %50 = vsyncadd [#allocation9], %s49
      %s51 = sshll.u32 [#allocation8], 4
      %s52 = int_to_ptr.vmem [resolvable:$true] %s51
      %57 = dma.hbm_to_vmem [thread:$0]  %s3, 4096, %s52, [#allocation9], 64, 64, 4
    $region17: #{tpu_custom_call.1} parent=1 // pred_fallthru
      _
    // Predicated region
    $region18: #{tpu_custom_call.1} parent=1 // pred_check
      _
    $region19: #{tpu_custom_call.1} parent=1 // pred_check_branch
      %59 = sbr.rel (0) target = $region21
    $region20: #{tpu_custom_call.1} parent=1 // pred_region
      %s61 = ssub.s32 16, 16
      %62 = vsyncadd [#allocation9], %s61
      %s64 = sshll.u32 [#allocation10], 4
      %s65 = int_to_ptr.vmem [resolvable:$true] %s64
      %67 = dma.hbm_to_vmem [thread:$0]  %s4, 16, %s65, [#allocation9]
    $region21: #{tpu_custom_call.1} parent=1 // pred_fallthru
      _
    // Predicated region
    $region22: #{tpu_custom_call.1} parent=1 // pred_check
      _
    $region23: #{tpu_custom_call.1} parent=1 // pred_check_branch
      %69 = sbr.rel (0) target = $region25
    $region24: #{tpu_custom_call.1} parent=1 // pred_region
      %70 = dma.done [#allocation3], 4096
    $region25: #{tpu_custom_call.1} parent=1 // pred_fallthru
      _
    // Predicated region
    $region26: #{tpu_custom_call.1} parent=1 // pred_check
      _
    $region27: #{tpu_custom_call.1} parent=1 // pred_check_branch
      %72 = sbr.rel (0) target = $region29
    $region28: #{tpu_custom_call.1} parent=1 // pred_region
      %73 = dma.done [#allocation6], 65536
    $region29: #{tpu_custom_call.1} parent=1 // pred_fallthru
      _
    // Predicated region
    $region30: #{tpu_custom_call.1} parent=1 // pred_check
      _
    $region31: #{tpu_custom_call.1} parent=1 // pred_check_branch
      %75 = sbr.rel (0) target = $region33
    $region32: #{tpu_custom_call.1} parent=1 // pred_region
      %76 = dma.done [#allocation6], 64
    $region33: #{tpu_custom_call.1} parent=1 // pred_fallthru
      _
    // Predicated region
    $region34: #{tpu_custom_call.1} parent=1 // pred_check
      _
    $region35: #{tpu_custom_call.1} parent=1 // pred_check_branch
      %78 = sbr.rel (0) target = $region37
    $region36: #{tpu_custom_call.1} parent=1 // pred_region
      %79 = dma.done [#allocation9], 4096
    $region37: #{tpu_custom_call.1} parent=1 // pred_fallthru
      _
    // Predicated region
    $region38: #{tpu_custom_call.1} parent=1 // pred_check
      _
    $region39: #{tpu_custom_call.1} parent=1 // pred_check_branch
      %81 = sbr.rel (0) target = $region41
    $region40: #{tpu_custom_call.1} parent=1 // pred_region
      %82 = dma.done [#allocation9], 16
    $region41: #{tpu_custom_call.1} parent=1 // pred_fallthru
      _
    %v84 = vld [vmem:[#allocation2] sm:$0xff]
    %v85 = vld [vmem:[#allocation2 + $0x8] sm:$0xff]
    %v86 = vunpack.c.l.bf16 %v84
    %v87 = vunpack.c.h.bf16 %v84
    %v88 = vunpack.c.l.bf16 %v85
    %v89 = vunpack.c.h.bf16 %v85
    %v90 = vld [vmem:[#allocation2 + $0x10] sm:$0xff]
    %v91 = vld [vmem:[#allocation2 + $0x18] sm:$0xff]
    %v92 = vunpack.c.l.bf16 %v90
    %v93 = vunpack.c.h.bf16 %v90
    %v94 = vunpack.c.l.bf16 %v91
    %v95 = vunpack.c.h.bf16 %v91
    %v96 = vadd.f32 %v86, %v92
    %v97 = vadd.f32 %v87, %v93
    %v98 = vadd.f32 %v88, %v94
    %v99 = vadd.f32 %v89, %v95
    %v100 = vld [vmem:[#allocation2 + $0x20] sm:$0xff]
    %v101 = vld [vmem:[#allocation2 + $0x28] sm:$0xff]
    %v102 = vunpack.c.l.bf16 %v100
    %v103 = vunpack.c.h.bf16 %v100
    %v104 = vunpack.c.l.bf16 %v101
    %v105 = vunpack.c.h.bf16 %v101
    %v106 = vadd.f32 %v96, %v102
    %v107 = vadd.f32 %v97, %v103
    %v108 = vadd.f32 %v98, %v104
    %v109 = vadd.f32 %v99, %v105
    %v110 = vld [vmem:[#allocation2 + $0x30] sm:$0xff]
    %v111 = vld [vmem:[#allocation2 + $0x38] sm:$0xff]
    %v112 = vunpack.c.l.bf16 %v110
    %v113 = vunpack.c.h.bf16 %v110
    %v114 = vunpack.c.l.bf16 %v111
    %v115 = vunpack.c.h.bf16 %v111
    %v116 = vadd.f32 %v106, %v112
    %v117 = vadd.f32 %v107, %v113
    %v118 = vadd.f32 %v108, %v114
    %v119 = vadd.f32 %v109, %v115
    %v120 = vld [vmem:[#allocation2 + $0x40] sm:$0xff]
    %v121 = vld [vmem:[#allocation2 + $0x48] sm:$0xff]
    %v122 = vunpack.c.l.bf16 %v120
    %v123 = vunpack.c.h.bf16 %v120
    %v124 = vunpack.c.l.bf16 %v121
    %v125 = vunpack.c.h.bf16 %v121
    %v126 = vadd.f32 %v116, %v122
    %v127 = vadd.f32 %v117, %v123
    %v128 = vadd.f32 %v118, %v124
    %v129 = vadd.f32 %v119, %v125
    %v130 = vld [vmem:[#allocation2 + $0x50] sm:$0xff]
    %v131 = vld [vmem:[#allocation2 + $0x58] sm:$0xff]
    %v132 = vunpack.c.l.bf16 %v130
    %v133 = vunpack.c.h.bf16 %v130
    %v134 = vunpack.c.l.bf16 %v131
    %v135 = vunpack.c.h.bf16 %v131
    %v136 = vadd.f32 %v126, %v132
    %v137 = vadd.f32 %v127, %v133
    %v138 = vadd.f32 %v128, %v134
    %v139 = vadd.f32 %v129, %v135
    %v140 = vld [vmem:[#allocation2 + $0x60] sm:$0xff]
    %v141 = vld [vmem:[#allocation2 + $0x68] sm:$0xff]
    %v142 = vunpack.c.l.bf16 %v140
    %v143 = vunpack.c.h.bf16 %v140
    %v144 = vunpack.c.l.bf16 %v141
    %v145 = vunpack.c.h.bf16 %v141
    %v146 = vadd.f32 %v136, %v142
    %v147 = vadd.f32 %v137, %v143
    %v148 = vadd.f32 %v138, %v144
    %v149 = vadd.f32 %v139, %v145
    %v150 = vld [vmem:[#allocation2 + $0x70] sm:$0xff]
    %v151 = vld [vmem:[#allocation2 + $0x78] sm:$0xff]
    %v152 = vunpack.c.l.bf16 %v150
    %v153 = vunpack.c.h.bf16 %v150
    %v154 = vunpack.c.l.bf16 %v151
    %v155 = vunpack.c.h.bf16 %v151
    %v156 = vadd.f32 %v146, %v152
    %v157 = vadd.f32 %v147, %v153
    %v158 = vadd.f32 %v148, %v154
    %v159 = vadd.f32 %v149, %v155
    %v160 = vld [vmem:[#allocation2 + $0x80] sm:$0xff]
    %v161 = vld [vmem:[#allocation2 + $0x88] sm:$0xff]
    %v162 = vunpack.c.l.bf16 %v160
    %v163 = vunpack.c.h.bf16 %v160
    %v164 = vunpack.c.l.bf16 %v161
    %v165 = vunpack.c.h.bf16 %v161
    %v166 = vadd.f32 %v156, %v162
    %v167 = vadd.f32 %v157, %v163
    %v168 = vadd.f32 %v158, %v164
    %v169 = vadd.f32 %v159, %v165
    %v170 = vld [vmem:[#allocation2 + $0x90] sm:$0xff]
    %v171 = vld [vmem:[#allocation2 + $0x98] sm:$0xff]
    %v172 = vunpack.c.l.bf16 %v170
    %v173 = vunpack.c.h.bf16 %v170
    %v174 = vunpack.c.l.bf16 %v171
    %v175 = vunpack.c.h.bf16 %v171
    %v176 = vadd.f32 %v166, %v172
    %v177 = vadd.f32 %v167, %v173
    %v178 = vadd.f32 %v168, %v174
    %v179 = vadd.f32 %v169, %v175
    %v180 = vld [vmem:[#allocation2 + $0xa0] sm:$0xff]
    %v181 = vld [vmem:[#allocation2 + $0xa8] sm:$0xff]
    %v182 = vunpack.c.l.bf16 %v180
    %v183 = vunpack.c.h.bf16 %v180
    %v184 = vunpack.c.l.bf16 %v181
    %v185 = vunpack.c.h.bf16 %v181
    %v186 = vadd.f32 %v176, %v182
    %v187 = vadd.f32 %v177, %v183
    %v188 = vadd.f32 %v178, %v184
    %v189 = vadd.f32 %v179, %v185
    %v190 = vld [vmem:[#allocation2 + $0xb0] sm:$0xff]
    %v191 = vld [vmem:[#allocation2 + $0xb8] sm:$0xff]
    %v192 = vunpack.c.l.bf16 %v190
    %v193 = vunpack.c.h.bf16 %v190
    %v194 = vunpack.c.l.bf16 %v191
    %v195 = vunpack.c.h.bf16 %v191
    %v196 = vadd.f32 %v186, %v192
    %v197 = vadd.f32 %v187, %v193
    %v198 = vadd.f32 %v188, %v194
    %v199 = vadd.f32 %v189, %v195
    %v200 = vld [vmem:[#allocation2 + $0xc0] sm:$0xff]
    %v201 = vld [vmem:[#allocation2 + $0xc8] sm:$0xff]
    %v202 = vunpack.c.l.bf16 %v200
    %v203 = vunpack.c.h.bf16 %v200
    %v204 = vunpack.c.l.bf16 %v201
    %v205 = vunpack.c.h.bf16 %v201
    %v206 = vadd.f32 %v196, %v202
    %v207 = vadd.f32 %v197, %v203
    %v208 = vadd.f32 %v198, %v204
    %v209 = vadd.f32 %v199, %v205
    %v210 = vld [vmem:[#allocation2 + $0xd0] sm:$0xff]
    %v211 = vld [vmem:[#allocation2 + $0xd8] sm:$0xff]
    %v212 = vunpack.c.l.bf16 %v210
    %v213 = vunpack.c.h.bf16 %v210
    %v214 = vunpack.c.l.bf16 %v211
    %v215 = vunpack.c.h.bf16 %v211
    %v216 = vadd.f32 %v206, %v212
    %v217 = vadd.f32 %v207, %v213
    %v218 = vadd.f32 %v208, %v214
    %v219 = vadd.f32 %v209, %v215
    %v220 = vld [vmem:[#allocation2 + $0xe0] sm:$0xff]
    %v221 = vld [vmem:[#allocation2 + $0xe8] sm:$0xff]
    %v222 = vunpack.c.l.bf16 %v220
    %v223 = vunpack.c.h.bf16 %v220
    %v224 = vunpack.c.l.bf16 %v221
    %v225 = vunpack.c.h.bf16 %v221
    %v226 = vadd.f32 %v216, %v222
    %v227 = vadd.f32 %v217, %v223
    %v228 = vadd.f32 %v218, %v224
    %v229 = vadd.f32 %v219, %v225
    %v230 = vld [vmem:[#allocation2 + $0xf0] sm:$0xff]
    %v231 = vld [vmem:[#allocation2 + $0xf8] sm:$0xff]
    %v232 = vunpack.c.l.bf16 %v230
    %v233 = vunpack.c.h.bf16 %v230
    %v234 = vunpack.c.l.bf16 %v231
    %v235 = vunpack.c.h.bf16 %v231
    %v236 = vadd.f32 %v226, %v232
    %v237 = vadd.f32 %v227, %v233
    %v238 = vadd.f32 %v228, %v234
    %v239 = vadd.f32 %v229, %v235
    %v244 = vcombine.high %v236, %v236
    %v246 = vunpack.c.l.s4 1983009808
    %v247 = vunpack.c.0.s8 %v246
    %v248 = vlaneseq
    %v249 = vshrl.u32 %v248, 7
    %v250 = vsub.s32 %v247, %v249
    %v251 = vrot.slane %v236, %v250
    %v253 = vunpack.c.l.s4 1983009808
    %v254 = vunpack.c.0.s8 %v253
    %v255 = vlaneseq
    %v256 = vshrl.u32 %v255, 7
    %v257 = vsub.s32 %v254, %v256
    %v258 = vrot.slane %v244, %v257
    %v259 = vcombine.high %v251, %v251
    %v260 = vcombine.high %v258, %v258
    %v261 = vcombine.high %v237, %v237
    %v263 = vunpack.c.l.s4 1983009808
    %v264 = vunpack.c.0.s8 %v263
    %v265 = vlaneseq
    %v266 = vshrl.u32 %v265, 7
    %v267 = vsub.s32 %v264, %v266
    %v268 = vrot.slane %v237, %v267
    %v270 = vunpack.c.l.s4 1983009808
    %v271 = vunpack.c.0.s8 %v270
    %v272 = vlaneseq
    %v273 = vshrl.u32 %v272, 7
    %v274 = vsub.s32 %v271, %v273
    %v275 = vrot.slane %v261, %v274
    %v276 = vcombine.high %v268, %v268
    %v277 = vcombine.high %v275, %v275
    %v278 = vcombine.high %v238, %v238
    %v280 = vunpack.c.l.s4 1983009808
    %v281 = vunpack.c.0.s8 %v280
    %v282 = vlaneseq
    %v283 = vshrl.u32 %v282, 7
    %v284 = vsub.s32 %v281, %v283
    %v285 = vrot.slane %v238, %v284
    %v287 = vunpack.c.l.s4 1983009808
    %v288 = vunpack.c.0.s8 %v287
    %v289 = vlaneseq
    %v290 = vshrl.u32 %v289, 7
    %v291 = vsub.s32 %v288, %v290
    %v292 = vrot.slane %v278, %v291
    %v293 = vcombine.high %v285, %v285
    %v294 = vcombine.high %v292, %v292
    %v295 = vcombine.high %v239, %v239
    %v297 = vunpack.c.l.s4 1983009808
    %v298 = vunpack.c.0.s8 %v297
    %v299 = vlaneseq
    %v300 = vshrl.u32 %v299, 7
    %v301 = vsub.s32 %v298, %v300
    %v302 = vrot.slane %v239, %v301
    %v304 = vunpack.c.l.s4 1983009808
    %v305 = vunpack.c.0.s8 %v304
    %v306 = vlaneseq
    %v307 = vshrl.u32 %v306, 7
    %v308 = vsub.s32 %v305, %v307
    %v309 = vrot.slane %v295, %v308
    %v310 = vcombine.high %v302, %v302
    %v311 = vcombine.high %v309, %v309
    %v328 = vpack.c.bf16 %v251, %v251
    %v329 = vpack.c.bf16 %v259, %v259
    %v330 = vpack.c.bf16 %v258, %v258
    %v331 = vpack.c.bf16 %v260, %v260
    %v332 = vpack.c.bf16 %v268, %v268
    %v333 = vpack.c.bf16 %v276, %v276
    %v334 = vpack.c.bf16 %v275, %v275
    %v335 = vpack.c.bf16 %v277, %v277
    %v336 = vpack.c.bf16 %v285, %v285
    %v337 = vpack.c.bf16 %v293, %v293
    %v338 = vpack.c.bf16 %v292, %v292
    %v339 = vpack.c.bf16 %v294, %v294
    %v340 = vpack.c.bf16 %v302, %v302
    %v341 = vpack.c.bf16 %v310, %v310
    %v342 = vpack.c.bf16 %v309, %v309
    %v343 = vpack.c.bf16 %v311, %v311
    %v344 = vld [vmem:[#allocation5] sm:$0xff]
    %v345 = vld [vmem:[#allocation5 + $0x8] sm:$0xff]
    %v346 = vld [vmem:[#allocation5 + $0x10] sm:$0xff]
    %v347 = vld [vmem:[#allocation5 + $0x18] sm:$0xff]
    %v348 = vld [vmem:[#allocation5 + $0x20] sm:$0xff]
    %v349 = vld [vmem:[#allocation5 + $0x28] sm:$0xff]
    %v350 = vld [vmem:[#allocation5 + $0x30] sm:$0xff]
    %v351 = vld [vmem:[#allocation5 + $0x38] sm:$0xff]
    %v352 = vld [vmem:[#allocation5 + $0x40] sm:$0xff]
    %v353 = vld [vmem:[#allocation5 + $0x48] sm:$0xff]
    %v354 = vld [vmem:[#allocation5 + $0x50] sm:$0xff]
    %v355 = vld [vmem:[#allocation5 + $0x58] sm:$0xff]
    %v356 = vld [vmem:[#allocation5 + $0x60] sm:$0xff]
    %v357 = vld [vmem:[#allocation5 + $0x68] sm:$0xff]
    %v358 = vld [vmem:[#allocation5 + $0x70] sm:$0xff]
    %v359 = vld [vmem:[#allocation5 + $0x78] sm:$0xff]
    %v360 = vld [vmem:[#allocation5 + $0x80] sm:$0xff]
    %v361 = vld [vmem:[#allocation5 + $0x88] sm:$0xff]
    %v362 = vld [vmem:[#allocation5 + $0x90] sm:$0xff]
    %v363 = vld [vmem:[#allocation5 + $0x98] sm:$0xff]
    %v364 = vld [vmem:[#allocation5 + $0xa0] sm:$0xff]
    %v365 = vld [vmem:[#allocation5 + $0xa8] sm:$0xff]
    %v366 = vld [vmem:[#allocation5 + $0xb0] sm:$0xff]
    %v367 = vld [vmem:[#allocation5 + $0xb8] sm:$0xff]
    %v368 = vld [vmem:[#allocation5 + $0xc0] sm:$0xff]
    %v369 = vld [vmem:[#allocation5 + $0xc8] sm:$0xff]
    %v370 = vld [vmem:[#allocation5 + $0xd0] sm:$0xff]
    %v371 = vld [vmem:[#allocation5 + $0xd8] sm:$0xff]
    %v372 = vld [vmem:[#allocation5 + $0xe0] sm:$0xff]
    %v373 = vld [vmem:[#allocation5 + $0xe8] sm:$0xff]
    %v374 = vld [vmem:[#allocation5 + $0xf0] sm:$0xff]
    %v375 = vld [vmem:[#allocation5 + $0xf8] sm:$0xff]
    %v376 = vld [vmem:[#allocation5 + $0x100] sm:$0xff]
    %v377 = vld [vmem:[#allocation5 + $0x108] sm:$0xff]
    %v378 = vld [vmem:[#allocation5 + $0x110] sm:$0xff]
    %v379 = vld [vmem:[#allocation5 + $0x118] sm:$0xff]
    %v380 = vld [vmem:[#allocation5 + $0x120] sm:$0xff]
    %v381 = vld [vmem:[#allocation5 + $0x128] sm:$0xff]
    %v382 = vld [vmem:[#allocation5 + $0x130] sm:$0xff]
    %v383 = vld [vmem:[#allocation5 + $0x138] sm:$0xff]
    %v384 = vld [vmem:[#allocation5 + $0x140] sm:$0xff]
    %v385 = vld [vmem:[#allocation5 + $0x148] sm:$0xff]
    %v386 = vld [vmem:[#allocation5 + $0x150] sm:$0xff]
    %v387 = vld [vmem:[#allocation5 + $0x158] sm:$0xff]
    %v388 = vld [vmem:[#allocation5 + $0x160] sm:$0xff]
    %v389 = vld [vmem:[#allocation5 + $0x168] sm:$0xff]
    %v390 = vld [vmem:[#allocation5 + $0x170] sm:$0xff]
    %v391 = vld [vmem:[#allocation5 + $0x178] sm:$0xff]
    %v392 = vld [vmem:[#allocation5 + $0x180] sm:$0xff]
    %v393 = vld [vmem:[#allocation5 + $0x188] sm:$0xff]
    %v394 = vld [vmem:[#allocation5 + $0x190] sm:$0xff]
    %v395 = vld [vmem:[#allocation5 + $0x198] sm:$0xff]
    %v396 = vld [vmem:[#allocation5 + $0x1a0] sm:$0xff]
    %v397 = vld [vmem:[#allocation5 + $0x1a8] sm:$0xff]
    %v398 = vld [vmem:[#allocation5 + $0x1b0] sm:$0xff]
    %v399 = vld [vmem:[#allocation5 + $0x1b8] sm:$0xff]
    %v400 = vld [vmem:[#allocation5 + $0x1c0] sm:$0xff]
    %v401 = vld [vmem:[#allocation5 + $0x1c8] sm:$0xff]
    %v402 = vld [vmem:[#allocation5 + $0x1d0] sm:$0xff]
    %v403 = vld [vmem:[#allocation5 + $0x1d8] sm:$0xff]
    %v404 = vld [vmem:[#allocation5 + $0x1e0] sm:$0xff]
    %v405 = vld [vmem:[#allocation5 + $0x1e8] sm:$0xff]
    %v406 = vld [vmem:[#allocation5 + $0x1f0] sm:$0xff]
    %v407 = vld [vmem:[#allocation5 + $0x1f8] sm:$0xff]
    %v408 = vld [vmem:[#allocation5 + $0x200] sm:$0xff]
    %v409 = vld [vmem:[#allocation5 + $0x208] sm:$0xff]
    %v410 = vld [vmem:[#allocation5 + $0x210] sm:$0xff]
    %v411 = vld [vmem:[#allocation5 + $0x218] sm:$0xff]
    %v412 = vld [vmem:[#allocation5 + $0x220] sm:$0xff]
    %v413 = vld [vmem:[#allocation5 + $0x228] sm:$0xff]
    %v414 = vld [vmem:[#allocation5 + $0x230] sm:$0xff]
    %v415 = vld [vmem:[#allocation5 + $0x238] sm:$0xff]
    %v416 = vld [vmem:[#allocation5 + $0x240] sm:$0xff]
    %v417 = vld [vmem:[#allocation5 + $0x248] sm:$0xff]
    %v418 = vld [vmem:[#allocation5 + $0x250] sm:$0xff]
    %v419 = vld [vmem:[#allocation5 + $0x258] sm:$0xff]
    %v420 = vld [vmem:[#allocation5 + $0x260] sm:$0xff]
    %v421 = vld [vmem:[#allocation5 + $0x268] sm:$0xff]
    %v422 = vld [vmem:[#allocation5 + $0x270] sm:$0xff]
    %v423 = vld [vmem:[#allocation5 + $0x278] sm:$0xff]
    %v424 = vld [vmem:[#allocation5 + $0x280] sm:$0xff]
    %v425 = vld [vmem:[#allocation5 + $0x288] sm:$0xff]
    %v426 = vld [vmem:[#allocation5 + $0x290] sm:$0xff]
    %v427 = vld [vmem:[#allocation5 + $0x298] sm:$0xff]
    %v428 = vld [vmem:[#allocation5 + $0x2a0] sm:$0xff]
    %v429 = vld [vmem:[#allocation5 + $0x2a8] sm:$0xff]
    %v430 = vld [vmem:[#allocation5 + $0x2b0] sm:$0xff]
    %v431 = vld [vmem:[#allocation5 + $0x2b8] sm:$0xff]
    %v432 = vld [vmem:[#allocation5 + $0x2c0] sm:$0xff]
    %v433 = vld [vmem:[#allocation5 + $0x2c8] sm:$0xff]
    %v434 = vld [vmem:[#allocation5 + $0x2d0] sm:$0xff]
    %v435 = vld [vmem:[#allocation5 + $0x2d8] sm:$0xff]
    %v436 = vld [vmem:[#allocation5 + $0x2e0] sm:$0xff]
    %v437 = vld [vmem:[#allocation5 + $0x2e8] sm:$0xff]
    %v438 = vld [vmem:[#allocation5 + $0x2f0] sm:$0xff]
    %v439 = vld [vmem:[#allocation5 + $0x2f8] sm:$0xff]
    %v440 = vld [vmem:[#allocation5 + $0x300] sm:$0xff]
    %v441 = vld [vmem:[#allocation5 + $0x308] sm:$0xff]
    %v442 = vld [vmem:[#allocation5 + $0x310] sm:$0xff]
    %v443 = vld [vmem:[#allocation5 + $0x318] sm:$0xff]
    %v444 = vld [vmem:[#allocation5 + $0x320] sm:$0xff]
    %v445 = vld [vmem:[#allocation5 + $0x328] sm:$0xff]
    %v446 = vld [vmem:[#allocation5 + $0x330] sm:$0xff]
    %v447 = vld [vmem:[#allocation5 + $0x338] sm:$0xff]
    %v448 = vld [vmem:[#allocation5 + $0x340] sm:$0xff]
    %v449 = vld [vmem:[#allocation5 + $0x348] sm:$0xff]
    %v450 = vld [vmem:[#allocation5 + $0x350] sm:$0xff]
    %v451 = vld [vmem:[#allocation5 + $0x358] sm:$0xff]
    %v452 = vld [vmem:[#allocation5 + $0x360] sm:$0xff]
    %v453 = vld [vmem:[#allocation5 + $0x368] sm:$0xff]
    %v454 = vld [vmem:[#allocation5 + $0x370] sm:$0xff]
    %v455 = vld [vmem:[#allocation5 + $0x378] sm:$0xff]
    %v456 = vld [vmem:[#allocation5 + $0x380] sm:$0xff]
    %v457 = vld [vmem:[#allocation5 + $0x388] sm:$0xff]
    %v458 = vld [vmem:[#allocation5 + $0x390] sm:$0xff]
    %v459 = vld [vmem:[#allocation5 + $0x398] sm:$0xff]
    %v460 = vld [vmem:[#allocation5 + $0x3a0] sm:$0xff]
    %v461 = vld [vmem:[#allocation5 + $0x3a8] sm:$0xff]
    %v462 = vld [vmem:[#allocation5 + $0x3b0] sm:$0xff]
    %v463 = vld [vmem:[#allocation5 + $0x3b8] sm:$0xff]
    %v464 = vld [vmem:[#allocation5 + $0x3c0] sm:$0xff]
    %v465 = vld [vmem:[#allocation5 + $0x3c8] sm:$0xff]
    %v466 = vld [vmem:[#allocation5 + $0x3d0] sm:$0xff]
    %v467 = vld [vmem:[#allocation5 + $0x3d8] sm:$0xff]
    %v468 = vld [vmem:[#allocation5 + $0x3e0] sm:$0xff]
    %v469 = vld [vmem:[#allocation5 + $0x3e8] sm:$0xff]
    %v470 = vld [vmem:[#allocation5 + $0x3f0] sm:$0xff]
    %v471 = vld [vmem:[#allocation5 + $0x3f8] sm:$0xff]
    %v472 = vld [vmem:[#allocation5 + $0x400] sm:$0xff]
    %v473 = vld [vmem:[#allocation5 + $0x408] sm:$0xff]
    %v474 = vld [vmem:[#allocation5 + $0x410] sm:$0xff]
    %v475 = vld [vmem:[#allocation5 + $0x418] sm:$0xff]
    %v476 = vld [vmem:[#allocation5 + $0x420] sm:$0xff]
    %v477 = vld [vmem:[#allocation5 + $0x428] sm:$0xff]
    %v478 = vld [vmem:[#allocation5 + $0x430] sm:$0xff]
    %v479 = vld [vmem:[#allocation5 + $0x438] sm:$0xff]
    %v480 = vld [vmem:[#allocation5 + $0x440] sm:$0xff]
    %v481 = vld [vmem:[#allocation5 + $0x448] sm:$0xff]
    %v482 = vld [vmem:[#allocation5 + $0x450] sm:$0xff]
    %v483 = vld [vmem:[#allocation5 + $0x458] sm:$0xff]
    %v484 = vld [vmem:[#allocation5 + $0x460] sm:$0xff]
    %v485 = vld [vmem:[#allocation5 + $0x468] sm:$0xff]
    %v486 = vld [vmem:[#allocation5 + $0x470] sm:$0xff]
    %v487 = vld [vmem:[#allocation5 + $0x478] sm:$0xff]
    %v488 = vld [vmem:[#allocation5 + $0x480] sm:$0xff]
    %v489 = vld [vmem:[#allocation5 + $0x488] sm:$0xff]
    %v490 = vld [vmem:[#allocation5 + $0x490] sm:$0xff]
    %v491 = vld [vmem:[#allocation5 + $0x498] sm:$0xff]
    %v492 = vld [vmem:[#allocation5 + $0x4a0] sm:$0xff]
    %v493 = vld [vmem:[#allocation5 + $0x4a8] sm:$0xff]
    %v494 = vld [vmem:[#allocation5 + $0x4b0] sm:$0xff]
    %v495 = vld [vmem:[#allocation5 + $0x4b8] sm:$0xff]
    %v496 = vld [vmem:[#allocation5 + $0x4c0] sm:$0xff]
    %v497 = vld [vmem:[#allocation5 + $0x4c8] sm:$0xff]
    %v498 = vld [vmem:[#allocation5 + $0x4d0] sm:$0xff]
    %v499 = vld [vmem:[#allocation5 + $0x4d8] sm:$0xff]
    %v500 = vld [vmem:[#allocation5 + $0x4e0] sm:$0xff]
    %v501 = vld [vmem:[#allocation5 + $0x4e8] sm:$0xff]
    %v502 = vld [vmem:[#allocation5 + $0x4f0] sm:$0xff]
    %v503 = vld [vmem:[#allocation5 + $0x4f8] sm:$0xff]
    %v504 = vld [vmem:[#allocation5 + $0x500] sm:$0xff]
    %v505 = vld [vmem:[#allocation5 + $0x508] sm:$0xff]
    %v506 = vld [vmem:[#allocation5 + $0x510] sm:$0xff]
    %v507 = vld [vmem:[#allocation5 + $0x518] sm:$0xff]
    %v508 = vld [vmem:[#allocation5 + $0x520] sm:$0xff]
    %v509 = vld [vmem:[#allocation5 + $0x528] sm:$0xff]
    %v510 = vld [vmem:[#allocation5 + $0x530] sm:$0xff]
    %v511 = vld [vmem:[#allocation5 + $0x538] sm:$0xff]
    %v512 = vld [vmem:[#allocation5 + $0x540] sm:$0xff]
    %v513 = vld [vmem:[#allocation5 + $0x548] sm:$0xff]
    %v514 = vld [vmem:[#allocation5 + $0x550] sm:$0xff]
    %v515 = vld [vmem:[#allocation5 + $0x558] sm:$0xff]
    %v516 = vld [vmem:[#allocation5 + $0x560] sm:$0xff]
    %v517 = vld [vmem:[#allocation5 + $0x568] sm:$0xff]
    %v518 = vld [vmem:[#allocation5 + $0x570] sm:$0xff]
    %v519 = vld [vmem:[#allocation5 + $0x578] sm:$0xff]
    %v520 = vld [vmem:[#allocation5 + $0x580] sm:$0xff]
    %v521 = vld [vmem:[#allocation5 + $0x588] sm:$0xff]
    %v522 = vld [vmem:[#allocation5 + $0x590] sm:$0xff]
    %v523 = vld [vmem:[#allocation5 + $0x598] sm:$0xff]
    %v524 = vld [vmem:[#allocation5 + $0x5a0] sm:$0xff]
    %v525 = vld [vmem:[#allocation5 + $0x5a8] sm:$0xff]
    %v526 = vld [vmem:[#allocation5 + $0x5b0] sm:$0xff]
    %v527 = vld [vmem:[#allocation5 + $0x5b8] sm:$0xff]
    %v528 = vld [vmem:[#allocation5 + $0x5c0] sm:$0xff]
    %v529 = vld [vmem:[#allocation5 + $0x5c8] sm:$0xff]
    %v530 = vld [vmem:[#allocation5 + $0x5d0] sm:$0xff]
    %v531 = vld [vmem:[#allocation5 + $0x5d8] sm:$0xff]
    %v532 = vld [vmem:[#allocation5 + $0x5e0] sm:$0xff]
    %v533 = vld [vmem:[#allocation5 + $0x5e8] sm:$0xff]
    %v534 = vld [vmem:[#allocation5 + $0x5f0] sm:$0xff]
    %v535 = vld [vmem:[#allocation5 + $0x5f8] sm:$0xff]
    %v536 = vld [vmem:[#allocation5 + $0x600] sm:$0xff]
    %v537 = vld [vmem:[#allocation5 + $0x608] sm:$0xff]
    %v538 = vld [vmem:[#allocation5 + $0x610] sm:$0xff]
    %v539 = vld [vmem:[#allocation5 + $0x618] sm:$0xff]
    %v540 = vld [vmem:[#allocation5 + $0x620] sm:$0xff]
    %v541 = vld [vmem:[#allocation5 + $0x628] sm:$0xff]
    %v542 = vld [vmem:[#allocation5 + $0x630] sm:$0xff]
    %v543 = vld [vmem:[#allocation5 + $0x638] sm:$0xff]
    %v544 = vld [vmem:[#allocation5 + $0x640] sm:$0xff]
    %v545 = vld [vmem:[#allocation5 + $0x648] sm:$0xff]
    %v546 = vld [vmem:[#allocation5 + $0x650] sm:$0xff]
    %v547 = vld [vmem:[#allocation5 + $0x658] sm:$0xff]
    %v548 = vld [vmem:[#allocation5 + $0x660] sm:$0xff]
    %v549 = vld [vmem:[#allocation5 + $0x668] sm:$0xff]
    %v550 = vld [vmem:[#allocation5 + $0x670] sm:$0xff]
    %v551 = vld [vmem:[#allocation5 + $0x678] sm:$0xff]
    %v552 = vld [vmem:[#allocation5 + $0x680] sm:$0xff]
    %v553 = vld [vmem:[#allocation5 + $0x688] sm:$0xff]
    %v554 = vld [vmem:[#allocation5 + $0x690] sm:$0xff]
    %v555 = vld [vmem:[#allocation5 + $0x698] sm:$0xff]
    %v556 = vld [vmem:[#allocation5 + $0x6a0] sm:$0xff]
    %v557 = vld [vmem:[#allocation5 + $0x6a8] sm:$0xff]
    %v558 = vld [vmem:[#allocation5 + $0x6b0] sm:$0xff]
    %v559 = vld [vmem:[#allocation5 + $0x6b8] sm:$0xff]
    %v560 = vld [vmem:[#allocation5 + $0x6c0] sm:$0xff]
    %v561 = vld [vmem:[#allocation5 + $0x6c8] sm:$0xff]
    %v562 = vld [vmem:[#allocation5 + $0x6d0] sm:$0xff]
    %v563 = vld [vmem:[#allocation5 + $0x6d8] sm:$0xff]
    %v564 = vld [vmem:[#allocation5 + $0x6e0] sm:$0xff]
    %v565 = vld [vmem:[#allocation5 + $0x6e8] sm:$0xff]
    %v566 = vld [vmem:[#allocation5 + $0x6f0] sm:$0xff]
    %v567 = vld [vmem:[#allocation5 + $0x6f8] sm:$0xff]
    %v568 = vld [vmem:[#allocation5 + $0x700] sm:$0xff]
    %v569 = vld [vmem:[#allocation5 + $0x708] sm:$0xff]
    %v570 = vld [vmem:[#allocation5 + $0x710] sm:$0xff]
    %v571 = vld [vmem:[#allocation5 + $0x718] sm:$0xff]
    %v572 = vld [vmem:[#allocation5 + $0x720] sm:$0xff]
    %v573 = vld [vmem:[#allocation5 + $0x728] sm:$0xff]
    %v574 = vld [vmem:[#allocation5 + $0x730] sm:$0xff]
    %v575 = vld [vmem:[#allocation5 + $0x738] sm:$0xff]
    %v576 = vld [vmem:[#allocation5 + $0x740] sm:$0xff]
    %v577 = vld [vmem:[#allocation5 + $0x748] sm:$0xff]
    %v578 = vld [vmem:[#allocation5 + $0x750] sm:$0xff]
    %v579 = vld [vmem:[#allocation5 + $0x758] sm:$0xff]
    %v580 = vld [vmem:[#allocation5 + $0x760] sm:$0xff]
    %v581 = vld [vmem:[#allocation5 + $0x768] sm:$0xff]
    %v582 = vld [vmem:[#allocation5 + $0x770] sm:$0xff]
    %v583 = vld [vmem:[#allocation5 + $0x778] sm:$0xff]
    %v584 = vld [vmem:[#allocation5 + $0x780] sm:$0xff]
    %v585 = vld [vmem:[#allocation5 + $0x788] sm:$0xff]
    %v586 = vld [vmem:[#allocation5 + $0x790] sm:$0xff]
    %v587 = vld [vmem:[#allocation5 + $0x798] sm:$0xff]
    %v588 = vld [vmem:[#allocation5 + $0x7a0] sm:$0xff]
    %v589 = vld [vmem:[#allocation5 + $0x7a8] sm:$0xff]
    %v590 = vld [vmem:[#allocation5 + $0x7b0] sm:$0xff]
    %v591 = vld [vmem:[#allocation5 + $0x7b8] sm:$0xff]
    %v592 = vld [vmem:[#allocation5 + $0x7c0] sm:$0xff]
    %v593 = vld [vmem:[#allocation5 + $0x7c8] sm:$0xff]
    %v594 = vld [vmem:[#allocation5 + $0x7d0] sm:$0xff]
    %v595 = vld [vmem:[#allocation5 + $0x7d8] sm:$0xff]
    %v596 = vld [vmem:[#allocation5 + $0x7e0] sm:$0xff]
    %v597 = vld [vmem:[#allocation5 + $0x7e8] sm:$0xff]
    %v598 = vld [vmem:[#allocation5 + $0x7f0] sm:$0xff]
    %v599 = vld [vmem:[#allocation5 + $0x7f8] sm:$0xff]
    %v600 = vld [vmem:[#allocation5 + $0x800] sm:$0xff]
    %v601 = vld [vmem:[#allocation5 + $0x808] sm:$0xff]
    %v602 = vld [vmem:[#allocation5 + $0x810] sm:$0xff]
    %v603 = vld [vmem:[#allocation5 + $0x818] sm:$0xff]
    %v604 = vld [vmem:[#allocation5 + $0x820] sm:$0xff]
    %v605 = vld [vmem:[#allocation5 + $0x828] sm:$0xff]
    %v606 = vld [vmem:[#allocation5 + $0x830] sm:$0xff]
    %v607 = vld [vmem:[#allocation5 + $0x838] sm:$0xff]
    %v608 = vld [vmem:[#allocation5 + $0x840] sm:$0xff]
    %v609 = vld [vmem:[#allocation5 + $0x848] sm:$0xff]
    %v610 = vld [vmem:[#allocation5 + $0x850] sm:$0xff]
    %v611 = vld [vmem:[#allocation5 + $0x858] sm:$0xff]
    %v612 = vld [vmem:[#allocation5 + $0x860] sm:$0xff]
    %v613 = vld [vmem:[#allocation5 + $0x868] sm:$0xff]
    %v614 = vld [vmem:[#allocation5 + $0x870] sm:$0xff]
    %v615 = vld [vmem:[#allocation5 + $0x878] sm:$0xff]
    %v616 = vld [vmem:[#allocation5 + $0x880] sm:$0xff]
    %v617 = vld [vmem:[#allocation5 + $0x888] sm:$0xff]
    %v618 = vld [vmem:[#allocation5 + $0x890] sm:$0xff]
    %v619 = vld [vmem:[#allocation5 + $0x898] sm:$0xff]
    %v620 = vld [vmem:[#allocation5 + $0x8a0] sm:$0xff]
    %v621 = vld [vmem:[#allocation5 + $0x8a8] sm:$0xff]
    %v622 = vld [vmem:[#allocation5 + $0x8b0] sm:$0xff]
    %v623 = vld [vmem:[#allocation5 + $0x8b8] sm:$0xff]
    %v624 = vld [vmem:[#allocation5 + $0x8c0] sm:$0xff]
    %v625 = vld [vmem:[#allocation5 + $0x8c8] sm:$0xff]
    %v626 = vld [vmem:[#allocation5 + $0x8d0] sm:$0xff]
    %v627 = vld [vmem:[#allocation5 + $0x8d8] sm:$0xff]
    %v628 = vld [vmem:[#allocation5 + $0x8e0] sm:$0xff]
    %v629 = vld [vmem:[#allocation5 + $0x8e8] sm:$0xff]
    %v630 = vld [vmem:[#allocation5 + $0x8f0] sm:$0xff]
    %v631 = vld [vmem:[#allocation5 + $0x8f8] sm:$0xff]
    %v632 = vld [vmem:[#allocation5 + $0x900] sm:$0xff]
    %v633 = vld [vmem:[#allocation5 + $0x908] sm:$0xff]
    %v634 = vld [vmem:[#allocation5 + $0x910] sm:$0xff]
    %v635 = vld [vmem:[#allocation5 + $0x918] sm:$0xff]
    %v636 = vld [vmem:[#allocation5 + $0x920] sm:$0xff]
    %v637 = vld [vmem:[#allocation5 + $0x928] sm:$0xff]
    %v638 = vld [vmem:[#allocation5 + $0x930] sm:$0xff]
    %v639 = vld [vmem:[#allocation5 + $0x938] sm:$0xff]
    %v640 = vld [vmem:[#allocation5 + $0x940] sm:$0xff]
    %v641 = vld [vmem:[#allocation5 + $0x948] sm:$0xff]
    %v642 = vld [vmem:[#allocation5 + $0x950] sm:$0xff]
    %v643 = vld [vmem:[#allocation5 + $0x958] sm:$0xff]
    %v644 = vld [vmem:[#allocation5 + $0x960] sm:$0xff]
    %v645 = vld [vmem:[#allocation5 + $0x968] sm:$0xff]
    %v646 = vld [vmem:[#allocation5 + $0x970] sm:$0xff]
    %v647 = vld [vmem:[#allocation5 + $0x978] sm:$0xff]
    %v648 = vld [vmem:[#allocation5 + $0x980] sm:$0xff]
    %v649 = vld [vmem:[#allocation5 + $0x988] sm:$0xff]
    %v650 = vld [vmem:[#allocation5 + $0x990] sm:$0xff]
    %v651 = vld [vmem:[#allocation5 + $0x998] sm:$0xff]
    %v652 = vld [vmem:[#allocation5 + $0x9a0] sm:$0xff]
    %v653 = vld [vmem:[#allocation5 + $0x9a8] sm:$0xff]
    %v654 = vld [vmem:[#allocation5 + $0x9b0] sm:$0xff]
    %v655 = vld [vmem:[#allocation5 + $0x9b8] sm:$0xff]
    %v656 = vld [vmem:[#allocation5 + $0x9c0] sm:$0xff]
    %v657 = vld [vmem:[#allocation5 + $0x9c8] sm:$0xff]
    %v658 = vld [vmem:[#allocation5 + $0x9d0] sm:$0xff]
    %v659 = vld [vmem:[#allocation5 + $0x9d8] sm:$0xff]
    %v660 = vld [vmem:[#allocation5 + $0x9e0] sm:$0xff]
    %v661 = vld [vmem:[#allocation5 + $0x9e8] sm:$0xff]
    %v662 = vld [vmem:[#allocation5 + $0x9f0] sm:$0xff]
    %v663 = vld [vmem:[#allocation5 + $0x9f8] sm:$0xff]
    %v664 = vld [vmem:[#allocation5 + $0xa00] sm:$0xff]
    %v665 = vld [vmem:[#allocation5 + $0xa08] sm:$0xff]
    %v666 = vld [vmem:[#allocation5 + $0xa10] sm:$0xff]
    %v667 = vld [vmem:[#allocation5 + $0xa18] sm:$0xff]
    %v668 = vld [vmem:[#allocation5 + $0xa20] sm:$0xff]
    %v669 = vld [vmem:[#allocation5 + $0xa28] sm:$0xff]
    %v670 = vld [vmem:[#allocation5 + $0xa30] sm:$0xff]
    %v671 = vld [vmem:[#allocation5 + $0xa38] sm:$0xff]
    %v672 = vld [vmem:[#allocation5 + $0xa40] sm:$0xff]
    %v673 = vld [vmem:[#allocation5 + $0xa48] sm:$0xff]
    %v674 = vld [vmem:[#allocation5 + $0xa50] sm:$0xff]
    %v675 = vld [vmem:[#allocation5 + $0xa58] sm:$0xff]
    %v676 = vld [vmem:[#allocation5 + $0xa60] sm:$0xff]
    %v677 = vld [vmem:[#allocation5 + $0xa68] sm:$0xff]
    %v678 = vld [vmem:[#allocation5 + $0xa70] sm:$0xff]
    %v679 = vld [vmem:[#allocation5 + $0xa78] sm:$0xff]
    %v680 = vld [vmem:[#allocation5 + $0xa80] sm:$0xff]
    %v681 = vld [vmem:[#allocation5 + $0xa88] sm:$0xff]
    %v682 = vld [vmem:[#allocation5 + $0xa90] sm:$0xff]
    %v683 = vld [vmem:[#allocation5 + $0xa98] sm:$0xff]
    %v684 = vld [vmem:[#allocation5 + $0xaa0] sm:$0xff]
    %v685 = vld [vmem:[#allocation5 + $0xaa8] sm:$0xff]
    %v686 = vld [vmem:[#allocation5 + $0xab0] sm:$0xff]
    %v687 = vld [vmem:[#allocation5 + $0xab8] sm:$0xff]
    %v688 = vld [vmem:[#allocation5 + $0xac0] sm:$0xff]
    %v689 = vld [vmem:[#allocation5 + $0xac8] sm:$0xff]
    %v690 = vld [vmem:[#allocation5 + $0xad0] sm:$0xff]
    %v691 = vld [vmem:[#allocation5 + $0xad8] sm:$0xff]
    %v692 = vld [vmem:[#allocation5 + $0xae0] sm:$0xff]
    %v693 = vld [vmem:[#allocation5 + $0xae8] sm:$0xff]
    %v694 = vld [vmem:[#allocation5 + $0xaf0] sm:$0xff]
    %v695 = vld [vmem:[#allocation5 + $0xaf8] sm:$0xff]
    %v696 = vld [vmem:[#allocation5 + $0xb00] sm:$0xff]
    %v697 = vld [vmem:[#allocation5 + $0xb08] sm:$0xff]
    %v698 = vld [vmem:[#allocation5 + $0xb10] sm:$0xff]
    %v699 = vld [vmem:[#allocation5 + $0xb18] sm:$0xff]
    %v700 = vld [vmem:[#allocation5 + $0xb20] sm:$0xff]
    %v701 = vld [vmem:[#allocation5 + $0xb28] sm:$0xff]
    %v702 = vld [vmem:[#allocation5 + $0xb30] sm:$0xff]
    %v703 = vld [vmem:[#allocation5 + $0xb38] sm:$0xff]
    %v704 = vld [vmem:[#allocation5 + $0xb40] sm:$0xff]
    %v705 = vld [vmem:[#allocation5 + $0xb48] sm:$0xff]
    %v706 = vld [vmem:[#allocation5 + $0xb50] sm:$0xff]
    %v707 = vld [vmem:[#allocation5 + $0xb58] sm:$0xff]
    %v708 = vld [vmem:[#allocation5 + $0xb60] sm:$0xff]
    %v709 = vld [vmem:[#allocation5 + $0xb68] sm:$0xff]
    %v710 = vld [vmem:[#allocation5 + $0xb70] sm:$0xff]
    %v711 = vld [vmem:[#allocation5 + $0xb78] sm:$0xff]
    %v712 = vld [vmem:[#allocation5 + $0xb80] sm:$0xff]
    %v713 = vld [vmem:[#allocation5 + $0xb88] sm:$0xff]
    %v714 = vld [vmem:[#allocation5 + $0xb90] sm:$0xff]
    %v715 = vld [vmem:[#allocation5 + $0xb98] sm:$0xff]
    %v716 = vld [vmem:[#allocation5 + $0xba0] sm:$0xff]
    %v717 = vld [vmem:[#allocation5 + $0xba8] sm:$0xff]
    %v718 = vld [vmem:[#allocation5 + $0xbb0] sm:$0xff]
    %v719 = vld [vmem:[#allocation5 + $0xbb8] sm:$0xff]
    %v720 = vld [vmem:[#allocation5 + $0xbc0] sm:$0xff]
    %v721 = vld [vmem:[#allocation5 + $0xbc8] sm:$0xff]
    %v722 = vld [vmem:[#allocation5 + $0xbd0] sm:$0xff]
    %v723 = vld [vmem:[#allocation5 + $0xbd8] sm:$0xff]
    %v724 = vld [vmem:[#allocation5 + $0xbe0] sm:$0xff]
    %v725 = vld [vmem:[#allocation5 + $0xbe8] sm:$0xff]
    %v726 = vld [vmem:[#allocation5 + $0xbf0] sm:$0xff]
    %v727 = vld [vmem:[#allocation5 + $0xbf8] sm:$0xff]
    %v728 = vld [vmem:[#allocation5 + $0xc00] sm:$0xff]
    %v729 = vld [vmem:[#allocation5 + $0xc08] sm:$0xff]
    %v730 = vld [vmem:[#allocation5 + $0xc10] sm:$0xff]
    %v731 = vld [vmem:[#allocation5 + $0xc18] sm:$0xff]
    %v732 = vld [vmem:[#allocation5 + $0xc20] sm:$0xff]
    %v733 = vld [vmem:[#allocation5 + $0xc28] sm:$0xff]
    %v734 = vld [vmem:[#allocation5 + $0xc30] sm:$0xff]
    %v735 = vld [vmem:[#allocation5 + $0xc38] sm:$0xff]
    %v736 = vld [vmem:[#allocation5 + $0xc40] sm:$0xff]
    %v737 = vld [vmem:[#allocation5 + $0xc48] sm:$0xff]
    %v738 = vld [vmem:[#allocation5 + $0xc50] sm:$0xff]
    %v739 = vld [vmem:[#allocation5 + $0xc58] sm:$0xff]
    %v740 = vld [vmem:[#allocation5 + $0xc60] sm:$0xff]
    %v741 = vld [vmem:[#allocation5 + $0xc68] sm:$0xff]
    %v742 = vld [vmem:[#allocation5 + $0xc70] sm:$0xff]
    %v743 = vld [vmem:[#allocation5 + $0xc78] sm:$0xff]
    %v744 = vld [vmem:[#allocation5 + $0xc80] sm:$0xff]
    %v745 = vld [vmem:[#allocation5 + $0xc88] sm:$0xff]
    %v746 = vld [vmem:[#allocation5 + $0xc90] sm:$0xff]
    %v747 = vld [vmem:[#allocation5 + $0xc98] sm:$0xff]
    %v748 = vld [vmem:[#allocation5 + $0xca0] sm:$0xff]
    %v749 = vld [vmem:[#allocation5 + $0xca8] sm:$0xff]
    %v750 = vld [vmem:[#allocation5 + $0xcb0] sm:$0xff]
    %v751 = vld [vmem:[#allocation5 + $0xcb8] sm:$0xff]
    %v752 = vld [vmem:[#allocation5 + $0xcc0] sm:$0xff]
    %v753 = vld [vmem:[#allocation5 + $0xcc8] sm:$0xff]
    %v754 = vld [vmem:[#allocation5 + $0xcd0] sm:$0xff]
    %v755 = vld [vmem:[#allocation5 + $0xcd8] sm:$0xff]
    %v756 = vld [vmem:[#allocation5 + $0xce0] sm:$0xff]
    %v757 = vld [vmem:[#allocation5 + $0xce8] sm:$0xff]
    %v758 = vld [vmem:[#allocation5 + $0xcf0] sm:$0xff]
    %v759 = vld [vmem:[#allocation5 + $0xcf8] sm:$0xff]
    %v760 = vld [vmem:[#allocation5 + $0xd00] sm:$0xff]
    %v761 = vld [vmem:[#allocation5 + $0xd08] sm:$0xff]
    %v762 = vld [vmem:[#allocation5 + $0xd10] sm:$0xff]
    %v763 = vld [vmem:[#allocation5 + $0xd18] sm:$0xff]
    %v764 = vld [vmem:[#allocation5 + $0xd20] sm:$0xff]
    %v765 = vld [vmem:[#allocation5 + $0xd28] sm:$0xff]
    %v766 = vld [vmem:[#allocation5 + $0xd30] sm:$0xff]
    %v767 = vld [vmem:[#allocation5 + $0xd38] sm:$0xff]
    %v768 = vld [vmem:[#allocation5 + $0xd40] sm:$0xff]
    %v769 = vld [vmem:[#allocation5 + $0xd48] sm:$0xff]
    %v770 = vld [vmem:[#allocation5 + $0xd50] sm:$0xff]
    %v771 = vld [vmem:[#allocation5 + $0xd58] sm:$0xff]
    %v772 = vld [vmem:[#allocation5 + $0xd60] sm:$0xff]
    %v773 = vld [vmem:[#allocation5 + $0xd68] sm:$0xff]
    %v774 = vld [vmem:[#allocation5 + $0xd70] sm:$0xff]
    %v775 = vld [vmem:[#allocation5 + $0xd78] sm:$0xff]
    %v776 = vld [vmem:[#allocation5 + $0xd80] sm:$0xff]
    %v777 = vld [vmem:[#allocation5 + $0xd88] sm:$0xff]
    %v778 = vld [vmem:[#allocation5 + $0xd90] sm:$0xff]
    %v779 = vld [vmem:[#allocation5 + $0xd98] sm:$0xff]
    %v780 = vld [vmem:[#allocation5 + $0xda0] sm:$0xff]
    %v781 = vld [vmem:[#allocation5 + $0xda8] sm:$0xff]
    %v782 = vld [vmem:[#allocation5 + $0xdb0] sm:$0xff]
    %v783 = vld [vmem:[#allocation5 + $0xdb8] sm:$0xff]
    %v784 = vld [vmem:[#allocation5 + $0xdc0] sm:$0xff]
    %v785 = vld [vmem:[#allocation5 + $0xdc8] sm:$0xff]
    %v786 = vld [vmem:[#allocation5 + $0xdd0] sm:$0xff]
    %v787 = vld [vmem:[#allocation5 + $0xdd8] sm:$0xff]
    %v788 = vld [vmem:[#allocation5 + $0xde0] sm:$0xff]
    %v789 = vld [vmem:[#allocation5 + $0xde8] sm:$0xff]
    %v790 = vld [vmem:[#allocation5 + $0xdf0] sm:$0xff]
    %v791 = vld [vmem:[#allocation5 + $0xdf8] sm:$0xff]
    %v792 = vld [vmem:[#allocation5 + $0xe00] sm:$0xff]
    %v793 = vld [vmem:[#allocation5 + $0xe08] sm:$0xff]
    %v794 = vld [vmem:[#allocation5 + $0xe10] sm:$0xff]
    %v795 = vld [vmem:[#allocation5 + $0xe18] sm:$0xff]
    %v796 = vld [vmem:[#allocation5 + $0xe20] sm:$0xff]
    %v797 = vld [vmem:[#allocation5 + $0xe28] sm:$0xff]
    %v798 = vld [vmem:[#allocation5 + $0xe30] sm:$0xff]
    %v799 = vld [vmem:[#allocation5 + $0xe38] sm:$0xff]
    %v800 = vld [vmem:[#allocation5 + $0xe40] sm:$0xff]
    %v801 = vld [vmem:[#allocation5 + $0xe48] sm:$0xff]
    %v802 = vld [vmem:[#allocation5 + $0xe50] sm:$0xff]
    %v803 = vld [vmem:[#allocation5 + $0xe58] sm:$0xff]
    %v804 = vld [vmem:[#allocation5 + $0xe60] sm:$0xff]
    %v805 = vld [vmem:[#allocation5 + $0xe68] sm:$0xff]
    %v806 = vld [vmem:[#allocation5 + $0xe70] sm:$0xff]
    %v807 = vld [vmem:[#allocation5 + $0xe78] sm:$0xff]
    %v808 = vld [vmem:[#allocation5 + $0xe80] sm:$0xff]
    %v809 = vld [vmem:[#allocation5 + $0xe88] sm:$0xff]
    %v810 = vld [vmem:[#allocation5 + $0xe90] sm:$0xff]
    %v811 = vld [vmem:[#allocation5 + $0xe98] sm:$0xff]
    %v812 = vld [vmem:[#allocation5 + $0xea0] sm:$0xff]
    %v813 = vld [vmem:[#allocation5 + $0xea8] sm:$0xff]
    %v814 = vld [vmem:[#allocation5 + $0xeb0] sm:$0xff]
    %v815 = vld [vmem:[#allocation5 + $0xeb8] sm:$0xff]
    %v816 = vld [vmem:[#allocation5 + $0xec0] sm:$0xff]
    %v817 = vld [vmem:[#allocation5 + $0xec8] sm:$0xff]
    %v818 = vld [vmem:[#allocation5 + $0xed0] sm:$0xff]
    %v819 = vld [vmem:[#allocation5 + $0xed8] sm:$0xff]
    %v820 = vld [vmem:[#allocation5 + $0xee0] sm:$0xff]
    %v821 = vld [vmem:[#allocation5 + $0xee8] sm:$0xff]
    %v822 = vld [vmem:[#allocation5 + $0xef0] sm:$0xff]
    %v823 = vld [vmem:[#allocation5 + $0xef8] sm:$0xff]
    %v824 = vld [vmem:[#allocation5 + $0xf00] sm:$0xff]
    %v825 = vld [vmem:[#allocation5 + $0xf08] sm:$0xff]
    %v826 = vld [vmem:[#allocation5 + $0xf10] sm:$0xff]
    %v827 = vld [vmem:[#allocation5 + $0xf18] sm:$0xff]
    %v828 = vld [vmem:[#allocation5 + $0xf20] sm:$0xff]
    %v829 = vld [vmem:[#allocation5 + $0xf28] sm:$0xff]
    %v830 = vld [vmem:[#allocation5 + $0xf30] sm:$0xff]
    %v831 = vld [vmem:[#allocation5 + $0xf38] sm:$0xff]
    %v832 = vld [vmem:[#allocation5 + $0xf40] sm:$0xff]
    %v833 = vld [vmem:[#allocation5 + $0xf48] sm:$0xff]
    %v834 = vld [vmem:[#allocation5 + $0xf50] sm:$0xff]
    %v835 = vld [vmem:[#allocation5 + $0xf58] sm:$0xff]
    %v836 = vld [vmem:[#allocation5 + $0xf60] sm:$0xff]
    %v837 = vld [vmem:[#allocation5 + $0xf68] sm:$0xff]
    %v838 = vld [vmem:[#allocation5 + $0xf70] sm:$0xff]
    %v839 = vld [vmem:[#allocation5 + $0xf78] sm:$0xff]
    %v840 = vld [vmem:[#allocation5 + $0xf80] sm:$0xff]
    %v841 = vld [vmem:[#allocation5 + $0xf88] sm:$0xff]
    %v842 = vld [vmem:[#allocation5 + $0xf90] sm:$0xff]
    %v843 = vld [vmem:[#allocation5 + $0xf98] sm:$0xff]
    %v844 = vld [vmem:[#allocation5 + $0xfa0] sm:$0xff]
    %v845 = vld [vmem:[#allocation5 + $0xfa8] sm:$0xff]
    %v846 = vld [vmem:[#allocation5 + $0xfb0] sm:$0xff]
    %v847 = vld [vmem:[#allocation5 + $0xfb8] sm:$0xff]
    %v848 = vld [vmem:[#allocation5 + $0xfc0] sm:$0xff]
    %v849 = vld [vmem:[#allocation5 + $0xfc8] sm:$0xff]
    %v850 = vld [vmem:[#allocation5 + $0xfd0] sm:$0xff]
    %v851 = vld [vmem:[#allocation5 + $0xfd8] sm:$0xff]
    %v852 = vld [vmem:[#allocation5 + $0xfe0] sm:$0xff]
    %v853 = vld [vmem:[#allocation5 + $0xfe8] sm:$0xff]
    %v854 = vld [vmem:[#allocation5 + $0xff0] sm:$0xff]
    %v855 = vld [vmem:[#allocation5 + $0xff8] sm:$0xff]
    %v856 = vld [vmem:[#allocation7] sm:$0xf]
    %v858 = vlaneseq
    %v859 = vshrl.u32 %v858, 7
    %v860 = vsub.s32 0, %v859
    %v861 = vrot.slane %v856, %v860
    %v862 = vlaneseq
    %v863 = vshrl.u32 %v862, 7
    %v864 = vsub.s32 1, %v863
    %v865 = vrot.slane %v856, %v864
    %v866 = vlaneseq
    %v867 = vshrl.u32 %v866, 7
    %v868 = vsub.s32 2, %v867
    %v869 = vrot.slane %v856, %v868
    %v870 = vlaneseq
    %v871 = vshrl.u32 %v870, 7
    %v872 = vsub.s32 3, %v871
    %v873 = vrot.slane %v856, %v872
    %v1390 = vunpack.c.l.b16 %v344
    %v1391 = vunpack.c.h.b16 %v344
    %v1392 = vunpack.c.l.b16 %v345
    %v1393 = vunpack.c.h.b16 %v345
    %v1394 = vunpack.c.l.b16 %v346
    %v1395 = vunpack.c.h.b16 %v346
    %v1396 = vunpack.c.l.b16 %v347
    %v1397 = vunpack.c.h.b16 %v347
    %v1398 = vunpack.c.l.b16 %v348
    %v1399 = vunpack.c.h.b16 %v348
    %v1400 = vunpack.c.l.b16 %v349
    %v1401 = vunpack.c.h.b16 %v349
    %v1402 = vunpack.c.l.b16 %v350
    %v1403 = vunpack.c.h.b16 %v350
    %v1404 = vunpack.c.l.b16 %v351
    %v1405 = vunpack.c.h.b16 %v351
    %v1406 = vunpack.c.l.b16 %v352
    %v1407 = vunpack.c.h.b16 %v352
    %v1408 = vunpack.c.l.b16 %v353
    %v1409 = vunpack.c.h.b16 %v353
    %v1410 = vunpack.c.l.b16 %v354
    %v1411 = vunpack.c.h.b16 %v354
    %v1412 = vunpack.c.l.b16 %v355
    %v1413 = vunpack.c.h.b16 %v355
    %v1414 = vunpack.c.l.b16 %v356
    %v1415 = vunpack.c.h.b16 %v356
    %v1416 = vunpack.c.l.b16 %v357
    %v1417 = vunpack.c.h.b16 %v357
    %v1418 = vunpack.c.l.b16 %v358
    %v1419 = vunpack.c.h.b16 %v358
    %v1420 = vunpack.c.l.b16 %v359
    %v1421 = vunpack.c.h.b16 %v359
    %v1422 = vunpack.c.l.b16 %v360
    %v1423 = vunpack.c.h.b16 %v360
    %v1424 = vunpack.c.l.b16 %v361
    %v1425 = vunpack.c.h.b16 %v361
    %v1426 = vunpack.c.l.b16 %v362
    %v1427 = vunpack.c.h.b16 %v362
    %v1428 = vunpack.c.l.b16 %v363
    %v1429 = vunpack.c.h.b16 %v363
    %v1430 = vunpack.c.l.b16 %v364
    %v1431 = vunpack.c.h.b16 %v364
    %v1432 = vunpack.c.l.b16 %v365
    %v1433 = vunpack.c.h.b16 %v365
    %v1434 = vunpack.c.l.b16 %v366
    %v1435 = vunpack.c.h.b16 %v366
    %v1436 = vunpack.c.l.b16 %v367
    %v1437 = vunpack.c.h.b16 %v367
    %v1438 = vunpack.c.l.b16 %v368
    %v1439 = vunpack.c.h.b16 %v368
    %v1440 = vunpack.c.l.b16 %v369
    %v1441 = vunpack.c.h.b16 %v369
    %v1442 = vunpack.c.l.b16 %v370
    %v1443 = vunpack.c.h.b16 %v370
    %v1444 = vunpack.c.l.b16 %v371
    %v1445 = vunpack.c.h.b16 %v371
    %v1446 = vunpack.c.l.b16 %v372
    %v1447 = vunpack.c.h.b16 %v372
    %v1448 = vunpack.c.l.b16 %v373
    %v1449 = vunpack.c.h.b16 %v373
    %v1450 = vunpack.c.l.b16 %v374
    %v1451 = vunpack.c.h.b16 %v374
    %v1452 = vunpack.c.l.b16 %v375
    %v1453 = vunpack.c.h.b16 %v375
    %v1454 = vunpack.c.l.b16 %v376
    %v1455 = vunpack.c.h.b16 %v376
    %v1456 = vunpack.c.l.b16 %v377
    %v1457 = vunpack.c.h.b16 %v377
    %v1458 = vunpack.c.l.b16 %v378
    %v1459 = vunpack.c.h.b16 %v378
    %v1460 = vunpack.c.l.b16 %v379
    %v1461 = vunpack.c.h.b16 %v379
    %v1462 = vunpack.c.l.b16 %v380
    %v1463 = vunpack.c.h.b16 %v380
    %v1464 = vunpack.c.l.b16 %v381
    %v1465 = vunpack.c.h.b16 %v381
    %v1466 = vunpack.c.l.b16 %v382
    %v1467 = vunpack.c.h.b16 %v382
    %v1468 = vunpack.c.l.b16 %v383
    %v1469 = vunpack.c.h.b16 %v383
    %v1470 = vunpack.c.l.b16 %v384
    %v1471 = vunpack.c.h.b16 %v384
    %v1472 = vunpack.c.l.b16 %v385
    %v1473 = vunpack.c.h.b16 %v385
    %v1474 = vunpack.c.l.b16 %v386
    %v1475 = vunpack.c.h.b16 %v386
    %v1476 = vunpack.c.l.b16 %v387
    %v1477 = vunpack.c.h.b16 %v387
    %v1478 = vunpack.c.l.b16 %v388
    %v1479 = vunpack.c.h.b16 %v388
    %v1480 = vunpack.c.l.b16 %v389
    %v1481 = vunpack.c.h.b16 %v389
    %v1482 = vunpack.c.l.b16 %v390
    %v1483 = vunpack.c.h.b16 %v390
    %v1484 = vunpack.c.l.b16 %v391
    %v1485 = vunpack.c.h.b16 %v391
    %v1486 = vunpack.c.l.b16 %v392
    %v1487 = vunpack.c.h.b16 %v392
    %v1488 = vunpack.c.l.b16 %v393
    %v1489 = vunpack.c.h.b16 %v393
    %v1490 = vunpack.c.l.b16 %v394
    %v1491 = vunpack.c.h.b16 %v394
    %v1492 = vunpack.c.l.b16 %v395
    %v1493 = vunpack.c.h.b16 %v395
    %v1494 = vunpack.c.l.b16 %v396
    %v1495 = vunpack.c.h.b16 %v396
    %v1496 = vunpack.c.l.b16 %v397
    %v1497 = vunpack.c.h.b16 %v397
    %v1498 = vunpack.c.l.b16 %v398
    %v1499 = vunpack.c.h.b16 %v398
    %v1500 = vunpack.c.l.b16 %v399
    %v1501 = vunpack.c.h.b16 %v399
    %v1502 = vunpack.c.l.b16 %v400
    %v1503 = vunpack.c.h.b16 %v400
    %v1504 = vunpack.c.l.b16 %v401
    %v1505 = vunpack.c.h.b16 %v401
    %v1506 = vunpack.c.l.b16 %v402
    %v1507 = vunpack.c.h.b16 %v402
    %v1508 = vunpack.c.l.b16 %v403
    %v1509 = vunpack.c.h.b16 %v403
    %v1510 = vunpack.c.l.b16 %v404
    %v1511 = vunpack.c.h.b16 %v404
    %v1512 = vunpack.c.l.b16 %v405
    %v1513 = vunpack.c.h.b16 %v405
    %v1514 = vunpack.c.l.b16 %v406
    %v1515 = vunpack.c.h.b16 %v406
    %v1516 = vunpack.c.l.b16 %v407
    %v1517 = vunpack.c.h.b16 %v407
    %v1518 = vunpack.c.l.b16 %v408
    %v1519 = vunpack.c.h.b16 %v408
    %v1520 = vunpack.c.l.b16 %v409
    %v1521 = vunpack.c.h.b16 %v409
    %v1522 = vunpack.c.l.b16 %v410
    %v1523 = vunpack.c.h.b16 %v410
    %v1524 = vunpack.c.l.b16 %v411
    %v1525 = vunpack.c.h.b16 %v411
    %v1526 = vunpack.c.l.b16 %v412
    %v1527 = vunpack.c.h.b16 %v412
    %v1528 = vunpack.c.l.b16 %v413
    %v1529 = vunpack.c.h.b16 %v413
    %v1530 = vunpack.c.l.b16 %v414
    %v1531 = vunpack.c.h.b16 %v414
    %v1532 = vunpack.c.l.b16 %v415
    %v1533 = vunpack.c.h.b16 %v415
    %v1534 = vunpack.c.l.b16 %v416
    %v1535 = vunpack.c.h.b16 %v416
    %v1536 = vunpack.c.l.b16 %v417
    %v1537 = vunpack.c.h.b16 %v417
    %v1538 = vunpack.c.l.b16 %v418
    %v1539 = vunpack.c.h.b16 %v418
    %v1540 = vunpack.c.l.b16 %v419
    %v1541 = vunpack.c.h.b16 %v419
    %v1542 = vunpack.c.l.b16 %v420
    %v1543 = vunpack.c.h.b16 %v420
    %v1544 = vunpack.c.l.b16 %v421
    %v1545 = vunpack.c.h.b16 %v421
    %v1546 = vunpack.c.l.b16 %v422
    %v1547 = vunpack.c.h.b16 %v422
    %v1548 = vunpack.c.l.b16 %v423
    %v1549 = vunpack.c.h.b16 %v423
    %v1550 = vunpack.c.l.b16 %v424
    %v1551 = vunpack.c.h.b16 %v424
    %v1552 = vunpack.c.l.b16 %v425
    %v1553 = vunpack.c.h.b16 %v425
    %v1554 = vunpack.c.l.b16 %v426
    %v1555 = vunpack.c.h.b16 %v426
    %v1556 = vunpack.c.l.b16 %v427
    %v1557 = vunpack.c.h.b16 %v427
    %v1558 = vunpack.c.l.b16 %v428
    %v1559 = vunpack.c.h.b16 %v428
    %v1560 = vunpack.c.l.b16 %v429
    %v1561 = vunpack.c.h.b16 %v429
    %v1562 = vunpack.c.l.b16 %v430
    %v1563 = vunpack.c.h.b16 %v430
    %v1564 = vunpack.c.l.b16 %v431
    %v1565 = vunpack.c.h.b16 %v431
    %v1566 = vunpack.c.l.b16 %v432
    %v1567 = vunpack.c.h.b16 %v432
    %v1568 = vunpack.c.l.b16 %v433
    %v1569 = vunpack.c.h.b16 %v433
    %v1570 = vunpack.c.l.b16 %v434
    %v1571 = vunpack.c.h.b16 %v434
    %v1572 = vunpack.c.l.b16 %v435
    %v1573 = vunpack.c.h.b16 %v435
    %v1574 = vunpack.c.l.b16 %v436
    %v1575 = vunpack.c.h.b16 %v436
    %v1576 = vunpack.c.l.b16 %v437
    %v1577 = vunpack.c.h.b16 %v437
    %v1578 = vunpack.c.l.b16 %v438
    %v1579 = vunpack.c.h.b16 %v438
    %v1580 = vunpack.c.l.b16 %v439
    %v1581 = vunpack.c.h.b16 %v439
    %v1582 = vunpack.c.l.b16 %v440
    %v1583 = vunpack.c.h.b16 %v440
    %v1584 = vunpack.c.l.b16 %v441
    %v1585 = vunpack.c.h.b16 %v441
    %v1586 = vunpack.c.l.b16 %v442
    %v1587 = vunpack.c.h.b16 %v442
    %v1588 = vunpack.c.l.b16 %v443
    %v1589 = vunpack.c.h.b16 %v443
    %v1590 = vunpack.c.l.b16 %v444
    %v1591 = vunpack.c.h.b16 %v444
    %v1592 = vunpack.c.l.b16 %v445
    %v1593 = vunpack.c.h.b16 %v445
    %v1594 = vunpack.c.l.b16 %v446
    %v1595 = vunpack.c.h.b16 %v446
    %v1596 = vunpack.c.l.b16 %v447
    %v1597 = vunpack.c.h.b16 %v447
    %v1598 = vunpack.c.l.b16 %v448
    %v1599 = vunpack.c.h.b16 %v448
    %v1600 = vunpack.c.l.b16 %v449
    %v1601 = vunpack.c.h.b16 %v449
    %v1602 = vunpack.c.l.b16 %v450
    %v1603 = vunpack.c.h.b16 %v450
    %v1604 = vunpack.c.l.b16 %v451
    %v1605 = vunpack.c.h.b16 %v451
    %v1606 = vunpack.c.l.b16 %v452
    %v1607 = vunpack.c.h.b16 %v452
    %v1608 = vunpack.c.l.b16 %v453
    %v1609 = vunpack.c.h.b16 %v453
    %v1610 = vunpack.c.l.b16 %v454
    %v1611 = vunpack.c.h.b16 %v454
    %v1612 = vunpack.c.l.b16 %v455
    %v1613 = vunpack.c.h.b16 %v455
    %v1614 = vunpack.c.l.b16 %v456
    %v1615 = vunpack.c.h.b16 %v456
    %v1616 = vunpack.c.l.b16 %v457
    %v1617 = vunpack.c.h.b16 %v457
    %v1618 = vunpack.c.l.b16 %v458
    %v1619 = vunpack.c.h.b16 %v458
    %v1620 = vunpack.c.l.b16 %v459
    %v1621 = vunpack.c.h.b16 %v459
    %v1622 = vunpack.c.l.b16 %v460
    %v1623 = vunpack.c.h.b16 %v460
    %v1624 = vunpack.c.l.b16 %v461
    %v1625 = vunpack.c.h.b16 %v461
    %v1626 = vunpack.c.l.b16 %v462
    %v1627 = vunpack.c.h.b16 %v462
    %v1628 = vunpack.c.l.b16 %v463
    %v1629 = vunpack.c.h.b16 %v463
    %v1630 = vunpack.c.l.b16 %v464
    %v1631 = vunpack.c.h.b16 %v464
    %v1632 = vunpack.c.l.b16 %v465
    %v1633 = vunpack.c.h.b16 %v465
    %v1634 = vunpack.c.l.b16 %v466
    %v1635 = vunpack.c.h.b16 %v466
    %v1636 = vunpack.c.l.b16 %v467
    %v1637 = vunpack.c.h.b16 %v467
    %v1638 = vunpack.c.l.b16 %v468
    %v1639 = vunpack.c.h.b16 %v468
    %v1640 = vunpack.c.l.b16 %v469
    %v1641 = vunpack.c.h.b16 %v469
    %v1642 = vunpack.c.l.b16 %v470
    %v1643 = vunpack.c.h.b16 %v470
    %v1644 = vunpack.c.l.b16 %v471
    %v1645 = vunpack.c.h.b16 %v471
    %v1646 = vunpack.c.l.b16 %v472
    %v1647 = vunpack.c.h.b16 %v472
    %v1648 = vunpack.c.l.b16 %v473
    %v1649 = vunpack.c.h.b16 %v473
    %v1650 = vunpack.c.l.b16 %v474
    %v1651 = vunpack.c.h.b16 %v474
    %v1652 = vunpack.c.l.b16 %v475
    %v1653 = vunpack.c.h.b16 %v475
    %v1654 = vunpack.c.l.b16 %v476
    %v1655 = vunpack.c.h.b16 %v476
    %v1656 = vunpack.c.l.b16 %v477
    %v1657 = vunpack.c.h.b16 %v477
    %v1658 = vunpack.c.l.b16 %v478
    %v1659 = vunpack.c.h.b16 %v478
    %v1660 = vunpack.c.l.b16 %v479
    %v1661 = vunpack.c.h.b16 %v479
    %v1662 = vunpack.c.l.b16 %v480
    %v1663 = vunpack.c.h.b16 %v480
    %v1664 = vunpack.c.l.b16 %v481
    %v1665 = vunpack.c.h.b16 %v481
    %v1666 = vunpack.c.l.b16 %v482
    %v1667 = vunpack.c.h.b16 %v482
    %v1668 = vunpack.c.l.b16 %v483
    %v1669 = vunpack.c.h.b16 %v483
    %v1670 = vunpack.c.l.b16 %v484
    %v1671 = vunpack.c.h.b16 %v484
    %v1672 = vunpack.c.l.b16 %v485
    %v1673 = vunpack.c.h.b16 %v485
    %v1674 = vunpack.c.l.b16 %v486
    %v1675 = vunpack.c.h.b16 %v486
    %v1676 = vunpack.c.l.b16 %v487
    %v1677 = vunpack.c.h.b16 %v487
    %v1678 = vunpack.c.l.b16 %v488
    %v1679 = vunpack.c.h.b16 %v488
    %v1680 = vunpack.c.l.b16 %v489
    %v1681 = vunpack.c.h.b16 %v489
    %v1682 = vunpack.c.l.b16 %v490
    %v1683 = vunpack.c.h.b16 %v490
    %v1684 = vunpack.c.l.b16 %v491
    %v1685 = vunpack.c.h.b16 %v491
    %v1686 = vunpack.c.l.b16 %v492
    %v1687 = vunpack.c.h.b16 %v492
    %v1688 = vunpack.c.l.b16 %v493
    %v1689 = vunpack.c.h.b16 %v493
    %v1690 = vunpack.c.l.b16 %v494
    %v1691 = vunpack.c.h.b16 %v494
    %v1692 = vunpack.c.l.b16 %v495
    %v1693 = vunpack.c.h.b16 %v495
    %v1694 = vunpack.c.l.b16 %v496
    %v1695 = vunpack.c.h.b16 %v496
    %v1696 = vunpack.c.l.b16 %v497
    %v1697 = vunpack.c.h.b16 %v497
    %v1698 = vunpack.c.l.b16 %v498
    %v1699 = vunpack.c.h.b16 %v498
    %v1700 = vunpack.c.l.b16 %v499
    %v1701 = vunpack.c.h.b16 %v499
    %v1702 = vunpack.c.l.b16 %v500
    %v1703 = vunpack.c.h.b16 %v500
    %v1704 = vunpack.c.l.b16 %v501
    %v1705 = vunpack.c.h.b16 %v501
    %v1706 = vunpack.c.l.b16 %v502
    %v1707 = vunpack.c.h.b16 %v502
    %v1708 = vunpack.c.l.b16 %v503
    %v1709 = vunpack.c.h.b16 %v503
    %v1710 = vunpack.c.l.b16 %v504
    %v1711 = vunpack.c.h.b16 %v504
    %v1712 = vunpack.c.l.b16 %v505
    %v1713 = vunpack.c.h.b16 %v505
    %v1714 = vunpack.c.l.b16 %v506
    %v1715 = vunpack.c.h.b16 %v506
    %v1716 = vunpack.c.l.b16 %v507
    %v1717 = vunpack.c.h.b16 %v507
    %v1718 = vunpack.c.l.b16 %v508
    %v1719 = vunpack.c.h.b16 %v508
    %v1720 = vunpack.c.l.b16 %v509
    %v1721 = vunpack.c.h.b16 %v509
    %v1722 = vunpack.c.l.b16 %v510
    %v1723 = vunpack.c.h.b16 %v510
    %v1724 = vunpack.c.l.b16 %v511
    %v1725 = vunpack.c.h.b16 %v511
    %v1726 = vunpack.c.l.b16 %v512
    %v1727 = vunpack.c.h.b16 %v512
    %v1728 = vunpack.c.l.b16 %v513
    %v1729 = vunpack.c.h.b16 %v513
    %v1730 = vunpack.c.l.b16 %v514
    %v1731 = vunpack.c.h.b16 %v514
    %v1732 = vunpack.c.l.b16 %v515
    %v1733 = vunpack.c.h.b16 %v515
    %v1734 = vunpack.c.l.b16 %v516
    %v1735 = vunpack.c.h.b16 %v516
    %v1736 = vunpack.c.l.b16 %v517
    %v1737 = vunpack.c.h.b16 %v517
    %v1738 = vunpack.c.l.b16 %v518
    %v1739 = vunpack.c.h.b16 %v518
    %v1740 = vunpack.c.l.b16 %v519
    %v1741 = vunpack.c.h.b16 %v519
    %v1742 = vunpack.c.l.b16 %v520
    %v1743 = vunpack.c.h.b16 %v520
    %v1744 = vunpack.c.l.b16 %v521
    %v1745 = vunpack.c.h.b16 %v521
    %v1746 = vunpack.c.l.b16 %v522
    %v1747 = vunpack.c.h.b16 %v522
    %v1748 = vunpack.c.l.b16 %v523
    %v1749 = vunpack.c.h.b16 %v523
    %v1750 = vunpack.c.l.b16 %v524
    %v1751 = vunpack.c.h.b16 %v524
    %v1752 = vunpack.c.l.b16 %v525
    %v1753 = vunpack.c.h.b16 %v525
    %v1754 = vunpack.c.l.b16 %v526
    %v1755 = vunpack.c.h.b16 %v526
    %v1756 = vunpack.c.l.b16 %v527
    %v1757 = vunpack.c.h.b16 %v527
    %v1758 = vunpack.c.l.b16 %v528
    %v1759 = vunpack.c.h.b16 %v528
    %v1760 = vunpack.c.l.b16 %v529
    %v1761 = vunpack.c.h.b16 %v529
    %v1762 = vunpack.c.l.b16 %v530
    %v1763 = vunpack.c.h.b16 %v530
    %v1764 = vunpack.c.l.b16 %v531
    %v1765 = vunpack.c.h.b16 %v531
    %v1766 = vunpack.c.l.b16 %v532
    %v1767 = vunpack.c.h.b16 %v532
    %v1768 = vunpack.c.l.b16 %v533
    %v1769 = vunpack.c.h.b16 %v533
    %v1770 = vunpack.c.l.b16 %v534
    %v1771 = vunpack.c.h.b16 %v534
    %v1772 = vunpack.c.l.b16 %v535
    %v1773 = vunpack.c.h.b16 %v535
    %v1774 = vunpack.c.l.b16 %v536
    %v1775 = vunpack.c.h.b16 %v536
    %v1776 = vunpack.c.l.b16 %v537
    %v1777 = vunpack.c.h.b16 %v537
    %v1778 = vunpack.c.l.b16 %v538
    %v1779 = vunpack.c.h.b16 %v538
    %v1780 = vunpack.c.l.b16 %v539
    %v1781 = vunpack.c.h.b16 %v539
    %v1782 = vunpack.c.l.b16 %v540
    %v1783 = vunpack.c.h.b16 %v540
    %v1784 = vunpack.c.l.b16 %v541
    %v1785 = vunpack.c.h.b16 %v541
    %v1786 = vunpack.c.l.b16 %v542
    %v1787 = vunpack.c.h.b16 %v542
    %v1788 = vunpack.c.l.b16 %v543
    %v1789 = vunpack.c.h.b16 %v543
    %v1790 = vunpack.c.l.b16 %v544
    %v1791 = vunpack.c.h.b16 %v544
    %v1792 = vunpack.c.l.b16 %v545
    %v1793 = vunpack.c.h.b16 %v545
    %v1794 = vunpack.c.l.b16 %v546
    %v1795 = vunpack.c.h.b16 %v546
    %v1796 = vunpack.c.l.b16 %v547
    %v1797 = vunpack.c.h.b16 %v547
    %v1798 = vunpack.c.l.b16 %v548
    %v1799 = vunpack.c.h.b16 %v548
    %v1800 = vunpack.c.l.b16 %v549
    %v1801 = vunpack.c.h.b16 %v549
    %v1802 = vunpack.c.l.b16 %v550
    %v1803 = vunpack.c.h.b16 %v550
    %v1804 = vunpack.c.l.b16 %v551
    %v1805 = vunpack.c.h.b16 %v551
    %v1806 = vunpack.c.l.b16 %v552
    %v1807 = vunpack.c.h.b16 %v552
    %v1808 = vunpack.c.l.b16 %v553
    %v1809 = vunpack.c.h.b16 %v553
    %v1810 = vunpack.c.l.b16 %v554
    %v1811 = vunpack.c.h.b16 %v554
    %v1812 = vunpack.c.l.b16 %v555
    %v1813 = vunpack.c.h.b16 %v555
    %v1814 = vunpack.c.l.b16 %v556
    %v1815 = vunpack.c.h.b16 %v556
    %v1816 = vunpack.c.l.b16 %v557
    %v1817 = vunpack.c.h.b16 %v557
    %v1818 = vunpack.c.l.b16 %v558
    %v1819 = vunpack.c.h.b16 %v558
    %v1820 = vunpack.c.l.b16 %v559
    %v1821 = vunpack.c.h.b16 %v559
    %v1822 = vunpack.c.l.b16 %v560
    %v1823 = vunpack.c.h.b16 %v560
    %v1824 = vunpack.c.l.b16 %v561
    %v1825 = vunpack.c.h.b16 %v561
    %v1826 = vunpack.c.l.b16 %v562
    %v1827 = vunpack.c.h.b16 %v562
    %v1828 = vunpack.c.l.b16 %v563
    %v1829 = vunpack.c.h.b16 %v563
    %v1830 = vunpack.c.l.b16 %v564
    %v1831 = vunpack.c.h.b16 %v564
    %v1832 = vunpack.c.l.b16 %v565
    %v1833 = vunpack.c.h.b16 %v565
    %v1834 = vunpack.c.l.b16 %v566
    %v1835 = vunpack.c.h.b16 %v566
    %v1836 = vunpack.c.l.b16 %v567
    %v1837 = vunpack.c.h.b16 %v567
    %v1838 = vunpack.c.l.b16 %v568
    %v1839 = vunpack.c.h.b16 %v568
    %v1840 = vunpack.c.l.b16 %v569
    %v1841 = vunpack.c.h.b16 %v569
    %v1842 = vunpack.c.l.b16 %v570
    %v1843 = vunpack.c.h.b16 %v570
    %v1844 = vunpack.c.l.b16 %v571
    %v1845 = vunpack.c.h.b16 %v571
    %v1846 = vunpack.c.l.b16 %v572
    %v1847 = vunpack.c.h.b16 %v572
    %v1848 = vunpack.c.l.b16 %v573
    %v1849 = vunpack.c.h.b16 %v573
    %v1850 = vunpack.c.l.b16 %v574
    %v1851 = vunpack.c.h.b16 %v574
    %v1852 = vunpack.c.l.b16 %v575
    %v1853 = vunpack.c.h.b16 %v575
    %v1854 = vunpack.c.l.b16 %v576
    %v1855 = vunpack.c.h.b16 %v576
    %v1856 = vunpack.c.l.b16 %v577
    %v1857 = vunpack.c.h.b16 %v577
    %v1858 = vunpack.c.l.b16 %v578
    %v1859 = vunpack.c.h.b16 %v578
    %v1860 = vunpack.c.l.b16 %v579
    %v1861 = vunpack.c.h.b16 %v579
    %v1862 = vunpack.c.l.b16 %v580
    %v1863 = vunpack.c.h.b16 %v580
    %v1864 = vunpack.c.l.b16 %v581
    %v1865 = vunpack.c.h.b16 %v581
    %v1866 = vunpack.c.l.b16 %v582
    %v1867 = vunpack.c.h.b16 %v582
    %v1868 = vunpack.c.l.b16 %v583
    %v1869 = vunpack.c.h.b16 %v583
    %v1870 = vunpack.c.l.b16 %v584
    %v1871 = vunpack.c.h.b16 %v584
    %v1872 = vunpack.c.l.b16 %v585
    %v1873 = vunpack.c.h.b16 %v585
    %v1874 = vunpack.c.l.b16 %v586
    %v1875 = vunpack.c.h.b16 %v586
    %v1876 = vunpack.c.l.b16 %v587
    %v1877 = vunpack.c.h.b16 %v587
    %v1878 = vunpack.c.l.b16 %v588
    %v1879 = vunpack.c.h.b16 %v588
    %v1880 = vunpack.c.l.b16 %v589
    %v1881 = vunpack.c.h.b16 %v589
    %v1882 = vunpack.c.l.b16 %v590
    %v1883 = vunpack.c.h.b16 %v590
    %v1884 = vunpack.c.l.b16 %v591
    %v1885 = vunpack.c.h.b16 %v591
    %v1886 = vunpack.c.l.b16 %v592
    %v1887 = vunpack.c.h.b16 %v592
    %v1888 = vunpack.c.l.b16 %v593
    %v1889 = vunpack.c.h.b16 %v593
    %v1890 = vunpack.c.l.b16 %v594
    %v1891 = vunpack.c.h.b16 %v594
    %v1892 = vunpack.c.l.b16 %v595
    %v1893 = vunpack.c.h.b16 %v595
    %v1894 = vunpack.c.l.b16 %v596
    %v1895 = vunpack.c.h.b16 %v596
    %v1896 = vunpack.c.l.b16 %v597
    %v1897 = vunpack.c.h.b16 %v597
    %v1898 = vunpack.c.l.b16 %v598
    %v1899 = vunpack.c.h.b16 %v598
    %v1900 = vunpack.c.l.b16 %v599
    %v1901 = vunpack.c.h.b16 %v599
    %v1902 = vunpack.c.l.b16 %v600
    %v1903 = vunpack.c.h.b16 %v600
    %v1904 = vunpack.c.l.b16 %v601
    %v1905 = vunpack.c.h.b16 %v601
    %v1906 = vunpack.c.l.b16 %v602
    %v1907 = vunpack.c.h.b16 %v602
    %v1908 = vunpack.c.l.b16 %v603
    %v1909 = vunpack.c.h.b16 %v603
    %v1910 = vunpack.c.l.b16 %v604
    %v1911 = vunpack.c.h.b16 %v604
    %v1912 = vunpack.c.l.b16 %v605
    %v1913 = vunpack.c.h.b16 %v605
    %v1914 = vunpack.c.l.b16 %v606
    %v1915 = vunpack.c.h.b16 %v606
    %v1916 = vunpack.c.l.b16 %v607
    %v1917 = vunpack.c.h.b16 %v607
    %v1918 = vunpack.c.l.b16 %v608
    %v1919 = vunpack.c.h.b16 %v608
    %v1920 = vunpack.c.l.b16 %v609
    %v1921 = vunpack.c.h.b16 %v609
    %v1922 = vunpack.c.l.b16 %v610
    %v1923 = vunpack.c.h.b16 %v610
    %v1924 = vunpack.c.l.b16 %v611
    %v1925 = vunpack.c.h.b16 %v611
    %v1926 = vunpack.c.l.b16 %v612
    %v1927 = vunpack.c.h.b16 %v612
    %v1928 = vunpack.c.l.b16 %v613
    %v1929 = vunpack.c.h.b16 %v613
    %v1930 = vunpack.c.l.b16 %v614
    %v1931 = vunpack.c.h.b16 %v614
    %v1932 = vunpack.c.l.b16 %v615
    %v1933 = vunpack.c.h.b16 %v615
    %v1934 = vunpack.c.l.b16 %v616
    %v1935 = vunpack.c.h.b16 %v616
    %v1936 = vunpack.c.l.b16 %v617
    %v1937 = vunpack.c.h.b16 %v617
    %v1938 = vunpack.c.l.b16 %v618
    %v1939 = vunpack.c.h.b16 %v618
    %v1940 = vunpack.c.l.b16 %v619
    %v1941 = vunpack.c.h.b16 %v619
    %v1942 = vunpack.c.l.b16 %v620
    %v1943 = vunpack.c.h.b16 %v620
    %v1944 = vunpack.c.l.b16 %v621
    %v1945 = vunpack.c.h.b16 %v621
    %v1946 = vunpack.c.l.b16 %v622
    %v1947 = vunpack.c.h.b16 %v622
    %v1948 = vunpack.c.l.b16 %v623
    %v1949 = vunpack.c.h.b16 %v623
    %v1950 = vunpack.c.l.b16 %v624
    %v1951 = vunpack.c.h.b16 %v624
    %v1952 = vunpack.c.l.b16 %v625
    %v1953 = vunpack.c.h.b16 %v625
    %v1954 = vunpack.c.l.b16 %v626
    %v1955 = vunpack.c.h.b16 %v626
    %v1956 = vunpack.c.l.b16 %v627
    %v1957 = vunpack.c.h.b16 %v627
    %v1958 = vunpack.c.l.b16 %v628
    %v1959 = vunpack.c.h.b16 %v628
    %v1960 = vunpack.c.l.b16 %v629
    %v1961 = vunpack.c.h.b16 %v629
    %v1962 = vunpack.c.l.b16 %v630
    %v1963 = vunpack.c.h.b16 %v630
    %v1964 = vunpack.c.l.b16 %v631
    %v1965 = vunpack.c.h.b16 %v631
    %v1966 = vunpack.c.l.b16 %v632
    %v1967 = vunpack.c.h.b16 %v632
    %v1968 = vunpack.c.l.b16 %v633
    %v1969 = vunpack.c.h.b16 %v633
    %v1970 = vunpack.c.l.b16 %v634
    %v1971 = vunpack.c.h.b16 %v634
    %v1972 = vunpack.c.l.b16 %v635
    %v1973 = vunpack.c.h.b16 %v635
    %v1974 = vunpack.c.l.b16 %v636
    %v1975 = vunpack.c.h.b16 %v636
    %v1976 = vunpack.c.l.b16 %v637
    %v1977 = vunpack.c.h.b16 %v637
    %v1978 = vunpack.c.l.b16 %v638
    %v1979 = vunpack.c.h.b16 %v638
    %v1980 = vunpack.c.l.b16 %v639
    %v1981 = vunpack.c.h.b16 %v639
    %v1982 = vunpack.c.l.b16 %v640
    %v1983 = vunpack.c.h.b16 %v640
    %v1984 = vunpack.c.l.b16 %v641
    %v1985 = vunpack.c.h.b16 %v641
    %v1986 = vunpack.c.l.b16 %v642
    %v1987 = vunpack.c.h.b16 %v642
    %v1988 = vunpack.c.l.b16 %v643
    %v1989 = vunpack.c.h.b16 %v643
    %v1990 = vunpack.c.l.b16 %v644
    %v1991 = vunpack.c.h.b16 %v644
    %v1992 = vunpack.c.l.b16 %v645
    %v1993 = vunpack.c.h.b16 %v645
    %v1994 = vunpack.c.l.b16 %v646
    %v1995 = vunpack.c.h.b16 %v646
    %v1996 = vunpack.c.l.b16 %v647
    %v1997 = vunpack.c.h.b16 %v647
    %v1998 = vunpack.c.l.b16 %v648
    %v1999 = vunpack.c.h.b16 %v648
    %v2000 = vunpack.c.l.b16 %v649
    %v2001 = vunpack.c.h.b16 %v649
    %v2002 = vunpack.c.l.b16 %v650
    %v2003 = vunpack.c.h.b16 %v650
    %v2004 = vunpack.c.l.b16 %v651
    %v2005 = vunpack.c.h.b16 %v651
    %v2006 = vunpack.c.l.b16 %v652
    %v2007 = vunpack.c.h.b16 %v652
    %v2008 = vunpack.c.l.b16 %v653
    %v2009 = vunpack.c.h.b16 %v653
    %v2010 = vunpack.c.l.b16 %v654
    %v2011 = vunpack.c.h.b16 %v654
    %v2012 = vunpack.c.l.b16 %v655
    %v2013 = vunpack.c.h.b16 %v655
    %v2014 = vunpack.c.l.b16 %v656
    %v2015 = vunpack.c.h.b16 %v656
    %v2016 = vunpack.c.l.b16 %v657
    %v2017 = vunpack.c.h.b16 %v657
    %v2018 = vunpack.c.l.b16 %v658
    %v2019 = vunpack.c.h.b16 %v658
    %v2020 = vunpack.c.l.b16 %v659
    %v2021 = vunpack.c.h.b16 %v659
    %v2022 = vunpack.c.l.b16 %v660
    %v2023 = vunpack.c.h.b16 %v660
    %v2024 = vunpack.c.l.b16 %v661
    %v2025 = vunpack.c.h.b16 %v661
    %v2026 = vunpack.c.l.b16 %v662
    %v2027 = vunpack.c.h.b16 %v662
    %v2028 = vunpack.c.l.b16 %v663
    %v2029 = vunpack.c.h.b16 %v663
    %v2030 = vunpack.c.l.b16 %v664
    %v2031 = vunpack.c.h.b16 %v664
    %v2032 = vunpack.c.l.b16 %v665
    %v2033 = vunpack.c.h.b16 %v665
    %v2034 = vunpack.c.l.b16 %v666
    %v2035 = vunpack.c.h.b16 %v666
    %v2036 = vunpack.c.l.b16 %v667
    %v2037 = vunpack.c.h.b16 %v667
    %v2038 = vunpack.c.l.b16 %v668
    %v2039 = vunpack.c.h.b16 %v668
    %v2040 = vunpack.c.l.b16 %v669
    %v2041 = vunpack.c.h.b16 %v669
    %v2042 = vunpack.c.l.b16 %v670
    %v2043 = vunpack.c.h.b16 %v670
    %v2044 = vunpack.c.l.b16 %v671
    %v2045 = vunpack.c.h.b16 %v671
    %v2046 = vunpack.c.l.b16 %v672
    %v2047 = vunpack.c.h.b16 %v672
    %v2048 = vunpack.c.l.b16 %v673
    %v2049 = vunpack.c.h.b16 %v673
    %v2050 = vunpack.c.l.b16 %v674
    %v2051 = vunpack.c.h.b16 %v674
    %v2052 = vunpack.c.l.b16 %v675
    %v2053 = vunpack.c.h.b16 %v675
    %v2054 = vunpack.c.l.b16 %v676
    %v2055 = vunpack.c.h.b16 %v676
    %v2056 = vunpack.c.l.b16 %v677
    %v2057 = vunpack.c.h.b16 %v677
    %v2058 = vunpack.c.l.b16 %v678
    %v2059 = vunpack.c.h.b16 %v678
    %v2060 = vunpack.c.l.b16 %v679
    %v2061 = vunpack.c.h.b16 %v679
    %v2062 = vunpack.c.l.b16 %v680
    %v2063 = vunpack.c.h.b16 %v680
    %v2064 = vunpack.c.l.b16 %v681
    %v2065 = vunpack.c.h.b16 %v681
    %v2066 = vunpack.c.l.b16 %v682
    %v2067 = vunpack.c.h.b16 %v682
    %v2068 = vunpack.c.l.b16 %v683
    %v2069 = vunpack.c.h.b16 %v683
    %v2070 = vunpack.c.l.b16 %v684
    %v2071 = vunpack.c.h.b16 %v684
    %v2072 = vunpack.c.l.b16 %v685
    %v2073 = vunpack.c.h.b16 %v685
    %v2074 = vunpack.c.l.b16 %v686
    %v2075 = vunpack.c.h.b16 %v686
    %v2076 = vunpack.c.l.b16 %v687
    %v2077 = vunpack.c.h.b16 %v687
    %v2078 = vunpack.c.l.b16 %v688
    %v2079 = vunpack.c.h.b16 %v688
    %v2080 = vunpack.c.l.b16 %v689
    %v2081 = vunpack.c.h.b16 %v689
    %v2082 = vunpack.c.l.b16 %v690
    %v2083 = vunpack.c.h.b16 %v690
    %v2084 = vunpack.c.l.b16 %v691
    %v2085 = vunpack.c.h.b16 %v691
    %v2086 = vunpack.c.l.b16 %v692
    %v2087 = vunpack.c.h.b16 %v692
    %v2088 = vunpack.c.l.b16 %v693
    %v2089 = vunpack.c.h.b16 %v693
    %v2090 = vunpack.c.l.b16 %v694
    %v2091 = vunpack.c.h.b16 %v694
    %v2092 = vunpack.c.l.b16 %v695
    %v2093 = vunpack.c.h.b16 %v695
    %v2094 = vunpack.c.l.b16 %v696
    %v2095 = vunpack.c.h.b16 %v696
    %v2096 = vunpack.c.l.b16 %v697
    %v2097 = vunpack.c.h.b16 %v697
    %v2098 = vunpack.c.l.b16 %v698
    %v2099 = vunpack.c.h.b16 %v698
    %v2100 = vunpack.c.l.b16 %v699
    %v2101 = vunpack.c.h.b16 %v699
    %v2102 = vunpack.c.l.b16 %v700
    %v2103 = vunpack.c.h.b16 %v700
    %v2104 = vunpack.c.l.b16 %v701
    %v2105 = vunpack.c.h.b16 %v701
    %v2106 = vunpack.c.l.b16 %v702
    %v2107 = vunpack.c.h.b16 %v702
    %v2108 = vunpack.c.l.b16 %v703
    %v2109 = vunpack.c.h.b16 %v703
    %v2110 = vunpack.c.l.b16 %v704
    %v2111 = vunpack.c.h.b16 %v704
    %v2112 = vunpack.c.l.b16 %v705
    %v2113 = vunpack.c.h.b16 %v705
    %v2114 = vunpack.c.l.b16 %v706
    %v2115 = vunpack.c.h.b16 %v706
    %v2116 = vunpack.c.l.b16 %v707
    %v2117 = vunpack.c.h.b16 %v707
    %v2118 = vunpack.c.l.b16 %v708
    %v2119 = vunpack.c.h.b16 %v708
    %v2120 = vunpack.c.l.b16 %v709
    %v2121 = vunpack.c.h.b16 %v709
    %v2122 = vunpack.c.l.b16 %v710
    %v2123 = vunpack.c.h.b16 %v710
    %v2124 = vunpack.c.l.b16 %v711
    %v2125 = vunpack.c.h.b16 %v711
    %v2126 = vunpack.c.l.b16 %v712
    %v2127 = vunpack.c.h.b16 %v712
    %v2128 = vunpack.c.l.b16 %v713
    %v2129 = vunpack.c.h.b16 %v713
    %v2130 = vunpack.c.l.b16 %v714
    %v2131 = vunpack.c.h.b16 %v714
    %v2132 = vunpack.c.l.b16 %v715
    %v2133 = vunpack.c.h.b16 %v715
    %v2134 = vunpack.c.l.b16 %v716
    %v2135 = vunpack.c.h.b16 %v716
    %v2136 = vunpack.c.l.b16 %v717
    %v2137 = vunpack.c.h.b16 %v717
    %v2138 = vunpack.c.l.b16 %v718
    %v2139 = vunpack.c.h.b16 %v718
    %v2140 = vunpack.c.l.b16 %v719
    %v2141 = vunpack.c.h.b16 %v719
    %v2142 = vunpack.c.l.b16 %v720
    %v2143 = vunpack.c.h.b16 %v720
    %v2144 = vunpack.c.l.b16 %v721
    %v2145 = vunpack.c.h.b16 %v721
    %v2146 = vunpack.c.l.b16 %v722
    %v2147 = vunpack.c.h.b16 %v722
    %v2148 = vunpack.c.l.b16 %v723
    %v2149 = vunpack.c.h.b16 %v723
    %v2150 = vunpack.c.l.b16 %v724
    %v2151 = vunpack.c.h.b16 %v724
    %v2152 = vunpack.c.l.b16 %v725
    %v2153 = vunpack.c.h.b16 %v725
    %v2154 = vunpack.c.l.b16 %v726
    %v2155 = vunpack.c.h.b16 %v726
    %v2156 = vunpack.c.l.b16 %v727
    %v2157 = vunpack.c.h.b16 %v727
    %v2158 = vunpack.c.l.b16 %v728
    %v2159 = vunpack.c.h.b16 %v728
    %v2160 = vunpack.c.l.b16 %v729
    %v2161 = vunpack.c.h.b16 %v729
    %v2162 = vunpack.c.l.b16 %v730
    %v2163 = vunpack.c.h.b16 %v730
    %v2164 = vunpack.c.l.b16 %v731
    %v2165 = vunpack.c.h.b16 %v731
    %v2166 = vunpack.c.l.b16 %v732
    %v2167 = vunpack.c.h.b16 %v732
    %v2168 = vunpack.c.l.b16 %v733
    %v2169 = vunpack.c.h.b16 %v733
    %v2170 = vunpack.c.l.b16 %v734
    %v2171 = vunpack.c.h.b16 %v734
    %v2172 = vunpack.c.l.b16 %v735
    %v2173 = vunpack.c.h.b16 %v735
    %v2174 = vunpack.c.l.b16 %v736
    %v2175 = vunpack.c.h.b16 %v736
    %v2176 = vunpack.c.l.b16 %v737
    %v2177 = vunpack.c.h.b16 %v737
    %v2178 = vunpack.c.l.b16 %v738
    %v2179 = vunpack.c.h.b16 %v738
    %v2180 = vunpack.c.l.b16 %v739
    %v2181 = vunpack.c.h.b16 %v739
    %v2182 = vunpack.c.l.b16 %v740
    %v2183 = vunpack.c.h.b16 %v740
    %v2184 = vunpack.c.l.b16 %v741
    %v2185 = vunpack.c.h.b16 %v741
    %v2186 = vunpack.c.l.b16 %v742
    %v2187 = vunpack.c.h.b16 %v742
    %v2188 = vunpack.c.l.b16 %v743
    %v2189 = vunpack.c.h.b16 %v743
    %v2190 = vunpack.c.l.b16 %v744
    %v2191 = vunpack.c.h.b16 %v744
    %v2192 = vunpack.c.l.b16 %v745
    %v2193 = vunpack.c.h.b16 %v745
    %v2194 = vunpack.c.l.b16 %v746
    %v2195 = vunpack.c.h.b16 %v746
    %v2196 = vunpack.c.l.b16 %v747
    %v2197 = vunpack.c.h.b16 %v747
    %v2198 = vunpack.c.l.b16 %v748
    %v2199 = vunpack.c.h.b16 %v748
    %v2200 = vunpack.c.l.b16 %v749
    %v2201 = vunpack.c.h.b16 %v749
    %v2202 = vunpack.c.l.b16 %v750
    %v2203 = vunpack.c.h.b16 %v750
    %v2204 = vunpack.c.l.b16 %v751
    %v2205 = vunpack.c.h.b16 %v751
    %v2206 = vunpack.c.l.b16 %v752
    %v2207 = vunpack.c.h.b16 %v752
    %v2208 = vunpack.c.l.b16 %v753
    %v2209 = vunpack.c.h.b16 %v753
    %v2210 = vunpack.c.l.b16 %v754
    %v2211 = vunpack.c.h.b16 %v754
    %v2212 = vunpack.c.l.b16 %v755
    %v2213 = vunpack.c.h.b16 %v755
    %v2214 = vunpack.c.l.b16 %v756
    %v2215 = vunpack.c.h.b16 %v756
    %v2216 = vunpack.c.l.b16 %v757
    %v2217 = vunpack.c.h.b16 %v757
    %v2218 = vunpack.c.l.b16 %v758
    %v2219 = vunpack.c.h.b16 %v758
    %v2220 = vunpack.c.l.b16 %v759
    %v2221 = vunpack.c.h.b16 %v759
    %v2222 = vunpack.c.l.b16 %v760
    %v2223 = vunpack.c.h.b16 %v760
    %v2224 = vunpack.c.l.b16 %v761
    %v2225 = vunpack.c.h.b16 %v761
    %v2226 = vunpack.c.l.b16 %v762
    %v2227 = vunpack.c.h.b16 %v762
    %v2228 = vunpack.c.l.b16 %v763
    %v2229 = vunpack.c.h.b16 %v763
    %v2230 = vunpack.c.l.b16 %v764
    %v2231 = vunpack.c.h.b16 %v764
    %v2232 = vunpack.c.l.b16 %v765
    %v2233 = vunpack.c.h.b16 %v765
    %v2234 = vunpack.c.l.b16 %v766
    %v2235 = vunpack.c.h.b16 %v766
    %v2236 = vunpack.c.l.b16 %v767
    %v2237 = vunpack.c.h.b16 %v767
    %v2238 = vunpack.c.l.b16 %v768
    %v2239 = vunpack.c.h.b16 %v768
    %v2240 = vunpack.c.l.b16 %v769
    %v2241 = vunpack.c.h.b16 %v769
    %v2242 = vunpack.c.l.b16 %v770
    %v2243 = vunpack.c.h.b16 %v770
    %v2244 = vunpack.c.l.b16 %v771
    %v2245 = vunpack.c.h.b16 %v771
    %v2246 = vunpack.c.l.b16 %v772
    %v2247 = vunpack.c.h.b16 %v772
    %v2248 = vunpack.c.l.b16 %v773
    %v2249 = vunpack.c.h.b16 %v773
    %v2250 = vunpack.c.l.b16 %v774
    %v2251 = vunpack.c.h.b16 %v774
    %v2252 = vunpack.c.l.b16 %v775
    %v2253 = vunpack.c.h.b16 %v775
    %v2254 = vunpack.c.l.b16 %v776
    %v2255 = vunpack.c.h.b16 %v776
    %v2256 = vunpack.c.l.b16 %v777
    %v2257 = vunpack.c.h.b16 %v777
    %v2258 = vunpack.c.l.b16 %v778
    %v2259 = vunpack.c.h.b16 %v778
    %v2260 = vunpack.c.l.b16 %v779
    %v2261 = vunpack.c.h.b16 %v779
    %v2262 = vunpack.c.l.b16 %v780
    %v2263 = vunpack.c.h.b16 %v780
    %v2264 = vunpack.c.l.b16 %v781
    %v2265 = vunpack.c.h.b16 %v781
    %v2266 = vunpack.c.l.b16 %v782
    %v2267 = vunpack.c.h.b16 %v782
    %v2268 = vunpack.c.l.b16 %v783
    %v2269 = vunpack.c.h.b16 %v783
    %v2270 = vunpack.c.l.b16 %v784
    %v2271 = vunpack.c.h.b16 %v784
    %v2272 = vunpack.c.l.b16 %v785
    %v2273 = vunpack.c.h.b16 %v785
    %v2274 = vunpack.c.l.b16 %v786
    %v2275 = vunpack.c.h.b16 %v786
    %v2276 = vunpack.c.l.b16 %v787
    %v2277 = vunpack.c.h.b16 %v787
    %v2278 = vunpack.c.l.b16 %v788
    %v2279 = vunpack.c.h.b16 %v788
    %v2280 = vunpack.c.l.b16 %v789
    %v2281 = vunpack.c.h.b16 %v789
    %v2282 = vunpack.c.l.b16 %v790
    %v2283 = vunpack.c.h.b16 %v790
    %v2284 = vunpack.c.l.b16 %v791
    %v2285 = vunpack.c.h.b16 %v791
    %v2286 = vunpack.c.l.b16 %v792
    %v2287 = vunpack.c.h.b16 %v792
    %v2288 = vunpack.c.l.b16 %v793
    %v2289 = vunpack.c.h.b16 %v793
    %v2290 = vunpack.c.l.b16 %v794
    %v2291 = vunpack.c.h.b16 %v794
    %v2292 = vunpack.c.l.b16 %v795
    %v2293 = vunpack.c.h.b16 %v795
    %v2294 = vunpack.c.l.b16 %v796
    %v2295 = vunpack.c.h.b16 %v796
    %v2296 = vunpack.c.l.b16 %v797
    %v2297 = vunpack.c.h.b16 %v797
    %v2298 = vunpack.c.l.b16 %v798
    %v2299 = vunpack.c.h.b16 %v798
    %v2300 = vunpack.c.l.b16 %v799
    %v2301 = vunpack.c.h.b16 %v799
    %v2302 = vunpack.c.l.b16 %v800
    %v2303 = vunpack.c.h.b16 %v800
    %v2304 = vunpack.c.l.b16 %v801
    %v2305 = vunpack.c.h.b16 %v801
    %v2306 = vunpack.c.l.b16 %v802
    %v2307 = vunpack.c.h.b16 %v802
    %v2308 = vunpack.c.l.b16 %v803
    %v2309 = vunpack.c.h.b16 %v803
    %v2310 = vunpack.c.l.b16 %v804
    %v2311 = vunpack.c.h.b16 %v804
    %v2312 = vunpack.c.l.b16 %v805
    %v2313 = vunpack.c.h.b16 %v805
    %v2314 = vunpack.c.l.b16 %v806
    %v2315 = vunpack.c.h.b16 %v806
    %v2316 = vunpack.c.l.b16 %v807
    %v2317 = vunpack.c.h.b16 %v807
    %v2318 = vunpack.c.l.b16 %v808
    %v2319 = vunpack.c.h.b16 %v808
    %v2320 = vunpack.c.l.b16 %v809
    %v2321 = vunpack.c.h.b16 %v809
    %v2322 = vunpack.c.l.b16 %v810
    %v2323 = vunpack.c.h.b16 %v810
    %v2324 = vunpack.c.l.b16 %v811
    %v2325 = vunpack.c.h.b16 %v811
    %v2326 = vunpack.c.l.b16 %v812
    %v2327 = vunpack.c.h.b16 %v812
    %v2328 = vunpack.c.l.b16 %v813
    %v2329 = vunpack.c.h.b16 %v813
    %v2330 = vunpack.c.l.b16 %v814
    %v2331 = vunpack.c.h.b16 %v814
    %v2332 = vunpack.c.l.b16 %v815
    %v2333 = vunpack.c.h.b16 %v815
    %v2334 = vunpack.c.l.b16 %v816
    %v2335 = vunpack.c.h.b16 %v816
    %v2336 = vunpack.c.l.b16 %v817
    %v2337 = vunpack.c.h.b16 %v817
    %v2338 = vunpack.c.l.b16 %v818
    %v2339 = vunpack.c.h.b16 %v818
    %v2340 = vunpack.c.l.b16 %v819
    %v2341 = vunpack.c.h.b16 %v819
    %v2342 = vunpack.c.l.b16 %v820
    %v2343 = vunpack.c.h.b16 %v820
    %v2344 = vunpack.c.l.b16 %v821
    %v2345 = vunpack.c.h.b16 %v821
    %v2346 = vunpack.c.l.b16 %v822
    %v2347 = vunpack.c.h.b16 %v822
    %v2348 = vunpack.c.l.b16 %v823
    %v2349 = vunpack.c.h.b16 %v823
    %v2350 = vunpack.c.l.b16 %v824
    %v2351 = vunpack.c.h.b16 %v824
    %v2352 = vunpack.c.l.b16 %v825
    %v2353 = vunpack.c.h.b16 %v825
    %v2354 = vunpack.c.l.b16 %v826
    %v2355 = vunpack.c.h.b16 %v826
    %v2356 = vunpack.c.l.b16 %v827
    %v2357 = vunpack.c.h.b16 %v827
    %v2358 = vunpack.c.l.b16 %v828
    %v2359 = vunpack.c.h.b16 %v828
    %v2360 = vunpack.c.l.b16 %v829
    %v2361 = vunpack.c.h.b16 %v829
    %v2362 = vunpack.c.l.b16 %v830
    %v2363 = vunpack.c.h.b16 %v830
    %v2364 = vunpack.c.l.b16 %v831
    %v2365 = vunpack.c.h.b16 %v831
    %v2366 = vunpack.c.l.b16 %v832
    %v2367 = vunpack.c.h.b16 %v832
    %v2368 = vunpack.c.l.b16 %v833
    %v2369 = vunpack.c.h.b16 %v833
    %v2370 = vunpack.c.l.b16 %v834
    %v2371 = vunpack.c.h.b16 %v834
    %v2372 = vunpack.c.l.b16 %v835
    %v2373 = vunpack.c.h.b16 %v835
    %v2374 = vunpack.c.l.b16 %v836
    %v2375 = vunpack.c.h.b16 %v836
    %v2376 = vunpack.c.l.b16 %v837
    %v2377 = vunpack.c.h.b16 %v837
    %v2378 = vunpack.c.l.b16 %v838
    %v2379 = vunpack.c.h.b16 %v838
    %v2380 = vunpack.c.l.b16 %v839
    %v2381 = vunpack.c.h.b16 %v839
    %v2382 = vunpack.c.l.b16 %v840
    %v2383 = vunpack.c.h.b16 %v840
    %v2384 = vunpack.c.l.b16 %v841
    %v2385 = vunpack.c.h.b16 %v841
    %v2386 = vunpack.c.l.b16 %v842
    %v2387 = vunpack.c.h.b16 %v842
    %v2388 = vunpack.c.l.b16 %v843
    %v2389 = vunpack.c.h.b16 %v843
    %v2390 = vunpack.c.l.b16 %v844
    %v2391 = vunpack.c.h.b16 %v844
    %v2392 = vunpack.c.l.b16 %v845
    %v2393 = vunpack.c.h.b16 %v845
    %v2394 = vunpack.c.l.b16 %v846
    %v2395 = vunpack.c.h.b16 %v846
    %v2396 = vunpack.c.l.b16 %v847
    %v2397 = vunpack.c.h.b16 %v847
    %v2398 = vunpack.c.l.b16 %v848
    %v2399 = vunpack.c.h.b16 %v848
    %v2400 = vunpack.c.l.b16 %v849
    %v2401 = vunpack.c.h.b16 %v849
    %v2402 = vunpack.c.l.b16 %v850
    %v2403 = vunpack.c.h.b16 %v850
    %v2404 = vunpack.c.l.b16 %v851
    %v2405 = vunpack.c.h.b16 %v851
    %v2406 = vunpack.c.l.b16 %v852
    %v2407 = vunpack.c.h.b16 %v852
    %v2408 = vunpack.c.l.b16 %v853
    %v2409 = vunpack.c.h.b16 %v853
    %v2410 = vunpack.c.l.b16 %v854
    %v2411 = vunpack.c.h.b16 %v854
    %v2412 = vunpack.c.l.b16 %v855
    %v2413 = vunpack.c.h.b16 %v855
    %v2414 = vpack.c.b16 %v1394, %v1390
    %v2415 = vpack.c.b16 %v1395, %v1391
    %v2416 = vpack.c.b16 %v1396, %v1392
    %v2417 = vpack.c.b16 %v1397, %v1393
    %v2418 = vpack.c.b16 %v1402, %v1398
    %v2419 = vpack.c.b16 %v1403, %v1399
    %v2420 = vpack.c.b16 %v1404, %v1400
    %v2421 = vpack.c.b16 %v1405, %v1401
    %v2422 = vpack.c.b16 %v1410, %v1406
    %v2423 = vpack.c.b16 %v1411, %v1407
    %v2424 = vpack.c.b16 %v1412, %v1408
    %v2425 = vpack.c.b16 %v1413, %v1409
    %v2426 = vpack.c.b16 %v1418, %v1414
    %v2427 = vpack.c.b16 %v1419, %v1415
    %v2428 = vpack.c.b16 %v1420, %v1416
    %v2429 = vpack.c.b16 %v1421, %v1417
    %v2430 = vpack.c.b16 %v1426, %v1422
    %v2431 = vpack.c.b16 %v1427, %v1423
    %v2432 = vpack.c.b16 %v1428, %v1424
    %v2433 = vpack.c.b16 %v1429, %v1425
    %v2434 = vpack.c.b16 %v1434, %v1430
    %v2435 = vpack.c.b16 %v1435, %v1431
    %v2436 = vpack.c.b16 %v1436, %v1432
    %v2437 = vpack.c.b16 %v1437, %v1433
    %v2438 = vpack.c.b16 %v1442, %v1438
    %v2439 = vpack.c.b16 %v1443, %v1439
    %v2440 = vpack.c.b16 %v1444, %v1440
    %v2441 = vpack.c.b16 %v1445, %v1441
    %v2442 = vpack.c.b16 %v1450, %v1446
    %v2443 = vpack.c.b16 %v1451, %v1447
    %v2444 = vpack.c.b16 %v1452, %v1448
    %v2445 = vpack.c.b16 %v1453, %v1449
    %v2446 = vpack.c.b16 %v1458, %v1454
    %v2447 = vpack.c.b16 %v1459, %v1455
    %v2448 = vpack.c.b16 %v1460, %v1456
    %v2449 = vpack.c.b16 %v1461, %v1457
    %v2450 = vpack.c.b16 %v1466, %v1462
    %v2451 = vpack.c.b16 %v1467, %v1463
    %v2452 = vpack.c.b16 %v1468, %v1464
    %v2453 = vpack.c.b16 %v1469, %v1465
    %v2454 = vpack.c.b16 %v1474, %v1470
    %v2455 = vpack.c.b16 %v1475, %v1471
    %v2456 = vpack.c.b16 %v1476, %v1472
    %v2457 = vpack.c.b16 %v1477, %v1473
    %v2458 = vpack.c.b16 %v1482, %v1478
    %v2459 = vpack.c.b16 %v1483, %v1479
    %v2460 = vpack.c.b16 %v1484, %v1480
    %v2461 = vpack.c.b16 %v1485, %v1481
    %v2462 = vpack.c.b16 %v1490, %v1486
    %v2463 = vpack.c.b16 %v1491, %v1487
    %v2464 = vpack.c.b16 %v1492, %v1488
    %v2465 = vpack.c.b16 %v1493, %v1489
    %v2466 = vpack.c.b16 %v1498, %v1494
    %v2467 = vpack.c.b16 %v1499, %v1495
    %v2468 = vpack.c.b16 %v1500, %v1496
    %v2469 = vpack.c.b16 %v1501, %v1497
    %v2470 = vpack.c.b16 %v1506, %v1502
    %v2471 = vpack.c.b16 %v1507, %v1503
    %v2472 = vpack.c.b16 %v1508, %v1504
    %v2473 = vpack.c.b16 %v1509, %v1505
    %v2474 = vpack.c.b16 %v1514, %v1510
    %v2475 = vpack.c.b16 %v1515, %v1511
    %v2476 = vpack.c.b16 %v1516, %v1512
    %v2477 = vpack.c.b16 %v1517, %v1513
    %v2478 = vpack.c.b16 %v1522, %v1518
    %v2479 = vpack.c.b16 %v1523, %v1519
    %v2480 = vpack.c.b16 %v1524, %v1520
    %v2481 = vpack.c.b16 %v1525, %v1521
    %v2482 = vpack.c.b16 %v1530, %v1526
    %v2483 = vpack.c.b16 %v1531, %v1527
    %v2484 = vpack.c.b16 %v1532, %v1528
    %v2485 = vpack.c.b16 %v1533, %v1529
    %v2486 = vpack.c.b16 %v1538, %v1534
    %v2487 = vpack.c.b16 %v1539, %v1535
    %v2488 = vpack.c.b16 %v1540, %v1536
    %v2489 = vpack.c.b16 %v1541, %v1537
    %v2490 = vpack.c.b16 %v1546, %v1542
    %v2491 = vpack.c.b16 %v1547, %v1543
    %v2492 = vpack.c.b16 %v1548, %v1544
    %v2493 = vpack.c.b16 %v1549, %v1545
    %v2494 = vpack.c.b16 %v1554, %v1550
    %v2495 = vpack.c.b16 %v1555, %v1551
    %v2496 = vpack.c.b16 %v1556, %v1552
    %v2497 = vpack.c.b16 %v1557, %v1553
    %v2498 = vpack.c.b16 %v1562, %v1558
    %v2499 = vpack.c.b16 %v1563, %v1559
    %v2500 = vpack.c.b16 %v1564, %v1560
    %v2501 = vpack.c.b16 %v1565, %v1561
    %v2502 = vpack.c.b16 %v1570, %v1566
    %v2503 = vpack.c.b16 %v1571, %v1567
    %v2504 = vpack.c.b16 %v1572, %v1568
    %v2505 = vpack.c.b16 %v1573, %v1569
    %v2506 = vpack.c.b16 %v1578, %v1574
    %v2507 = vpack.c.b16 %v1579, %v1575
    %v2508 = vpack.c.b16 %v1580, %v1576
    %v2509 = vpack.c.b16 %v1581, %v1577
    %v2510 = vpack.c.b16 %v1586, %v1582
    %v2511 = vpack.c.b16 %v1587, %v1583
    %v2512 = vpack.c.b16 %v1588, %v1584
    %v2513 = vpack.c.b16 %v1589, %v1585
    %v2514 = vpack.c.b16 %v1594, %v1590
    %v2515 = vpack.c.b16 %v1595, %v1591
    %v2516 = vpack.c.b16 %v1596, %v1592
    %v2517 = vpack.c.b16 %v1597, %v1593
    %v2518 = vpack.c.b16 %v1602, %v1598
    %v2519 = vpack.c.b16 %v1603, %v1599
    %v2520 = vpack.c.b16 %v1604, %v1600
    %v2521 = vpack.c.b16 %v1605, %v1601
    %v2522 = vpack.c.b16 %v1610, %v1606
    %v2523 = vpack.c.b16 %v1611, %v1607
    %v2524 = vpack.c.b16 %v1612, %v1608
    %v2525 = vpack.c.b16 %v1613, %v1609
    %v2526 = vpack.c.b16 %v1618, %v1614
    %v2527 = vpack.c.b16 %v1619, %v1615
    %v2528 = vpack.c.b16 %v1620, %v1616
    %v2529 = vpack.c.b16 %v1621, %v1617
    %v2530 = vpack.c.b16 %v1626, %v1622
    %v2531 = vpack.c.b16 %v1627, %v1623
    %v2532 = vpack.c.b16 %v1628, %v1624
    %v2533 = vpack.c.b16 %v1629, %v1625
    %v2534 = vpack.c.b16 %v1634, %v1630
    %v2535 = vpack.c.b16 %v1635, %v1631
    %v2536 = vpack.c.b16 %v1636, %v1632
    %v2537 = vpack.c.b16 %v1637, %v1633
    %v2538 = vpack.c.b16 %v1642, %v1638
    %v2539 = vpack.c.b16 %v1643, %v1639
    %v2540 = vpack.c.b16 %v1644, %v1640
    %v2541 = vpack.c.b16 %v1645, %v1641
    %v2542 = vpack.c.b16 %v1650, %v1646
    %v2543 = vpack.c.b16 %v1651, %v1647
    %v2544 = vpack.c.b16 %v1652, %v1648
    %v2545 = vpack.c.b16 %v1653, %v1649
    %v2546 = vpack.c.b16 %v1658, %v1654
    %v2547 = vpack.c.b16 %v1659, %v1655
    %v2548 = vpack.c.b16 %v1660, %v1656
    %v2549 = vpack.c.b16 %v1661, %v1657
    %v2550 = vpack.c.b16 %v1666, %v1662
    %v2551 = vpack.c.b16 %v1667, %v1663
    %v2552 = vpack.c.b16 %v1668, %v1664
    %v2553 = vpack.c.b16 %v1669, %v1665
    %v2554 = vpack.c.b16 %v1674, %v1670
    %v2555 = vpack.c.b16 %v1675, %v1671
    %v2556 = vpack.c.b16 %v1676, %v1672
    %v2557 = vpack.c.b16 %v1677, %v1673
    %v2558 = vpack.c.b16 %v1682, %v1678
    %v2559 = vpack.c.b16 %v1683, %v1679
    %v2560 = vpack.c.b16 %v1684, %v1680
    %v2561 = vpack.c.b16 %v1685, %v1681
    %v2562 = vpack.c.b16 %v1690, %v1686
    %v2563 = vpack.c.b16 %v1691, %v1687
    %v2564 = vpack.c.b16 %v1692, %v1688
    %v2565 = vpack.c.b16 %v1693, %v1689
    %v2566 = vpack.c.b16 %v1698, %v1694
    %v2567 = vpack.c.b16 %v1699, %v1695
    %v2568 = vpack.c.b16 %v1700, %v1696
    %v2569 = vpack.c.b16 %v1701, %v1697
    %v2570 = vpack.c.b16 %v1706, %v1702
    %v2571 = vpack.c.b16 %v1707, %v1703
    %v2572 = vpack.c.b16 %v1708, %v1704
    %v2573 = vpack.c.b16 %v1709, %v1705
    %v2574 = vpack.c.b16 %v1714, %v1710
    %v2575 = vpack.c.b16 %v1715, %v1711
    %v2576 = vpack.c.b16 %v1716, %v1712
    %v2577 = vpack.c.b16 %v1717, %v1713
    %v2578 = vpack.c.b16 %v1722, %v1718
    %v2579 = vpack.c.b16 %v1723, %v1719
    %v2580 = vpack.c.b16 %v1724, %v1720
    %v2581 = vpack.c.b16 %v1725, %v1721
    %v2582 = vpack.c.b16 %v1730, %v1726
    %v2583 = vpack.c.b16 %v1731, %v1727
    %v2584 = vpack.c.b16 %v1732, %v1728
    %v2585 = vpack.c.b16 %v1733, %v1729
    %v2586 = vpack.c.b16 %v1738, %v1734
    %v2587 = vpack.c.b16 %v1739, %v1735
    %v2588 = vpack.c.b16 %v1740, %v1736
    %v2589 = vpack.c.b16 %v1741, %v1737
    %v2590 = vpack.c.b16 %v1746, %v1742
    %v2591 = vpack.c.b16 %v1747, %v1743
    %v2592 = vpack.c.b16 %v1748, %v1744
    %v2593 = vpack.c.b16 %v1749, %v1745
    %v2594 = vpack.c.b16 %v1754, %v1750
    %v2595 = vpack.c.b16 %v1755, %v1751
    %v2596 = vpack.c.b16 %v1756, %v1752
    %v2597 = vpack.c.b16 %v1757, %v1753
    %v2598 = vpack.c.b16 %v1762, %v1758
    %v2599 = vpack.c.b16 %v1763, %v1759
    %v2600 = vpack.c.b16 %v1764, %v1760
    %v2601 = vpack.c.b16 %v1765, %v1761
    %v2602 = vpack.c.b16 %v1770, %v1766
    %v2603 = vpack.c.b16 %v1771, %v1767
    %v2604 = vpack.c.b16 %v1772, %v1768
    %v2605 = vpack.c.b16 %v1773, %v1769
    %v2606 = vpack.c.b16 %v1778, %v1774
    %v2607 = vpack.c.b16 %v1779, %v1775
    %v2608 = vpack.c.b16 %v1780, %v1776
    %v2609 = vpack.c.b16 %v1781, %v1777
    %v2610 = vpack.c.b16 %v1786, %v1782
    %v2611 = vpack.c.b16 %v1787, %v1783
    %v2612 = vpack.c.b16 %v1788, %v1784
    %v2613 = vpack.c.b16 %v1789, %v1785
    %v2614 = vpack.c.b16 %v1794, %v1790
    %v2615 = vpack.c.b16 %v1795, %v1791
    %v2616 = vpack.c.b16 %v1796, %v1792
    %v2617 = vpack.c.b16 %v1797, %v1793
    %v2618 = vpack.c.b16 %v1802, %v1798
    %v2619 = vpack.c.b16 %v1803, %v1799
    %v2620 = vpack.c.b16 %v1804, %v1800
    %v2621 = vpack.c.b16 %v1805, %v1801
    %v2622 = vpack.c.b16 %v1810, %v1806
    %v2623 = vpack.c.b16 %v1811, %v1807
    %v2624 = vpack.c.b16 %v1812, %v1808
    %v2625 = vpack.c.b16 %v1813, %v1809
    %v2626 = vpack.c.b16 %v1818, %v1814
    %v2627 = vpack.c.b16 %v1819, %v1815
    %v2628 = vpack.c.b16 %v1820, %v1816
    %v2629 = vpack.c.b16 %v1821, %v1817
    %v2630 = vpack.c.b16 %v1826, %v1822
    %v2631 = vpack.c.b16 %v1827, %v1823
    %v2632 = vpack.c.b16 %v1828, %v1824
    %v2633 = vpack.c.b16 %v1829, %v1825
    %v2634 = vpack.c.b16 %v1834, %v1830
    %v2635 = vpack.c.b16 %v1835, %v1831
    %v2636 = vpack.c.b16 %v1836, %v1832
    %v2637 = vpack.c.b16 %v1837, %v1833
    %v2638 = vpack.c.b16 %v1842, %v1838
    %v2639 = vpack.c.b16 %v1843, %v1839
    %v2640 = vpack.c.b16 %v1844, %v1840
    %v2641 = vpack.c.b16 %v1845, %v1841
    %v2642 = vpack.c.b16 %v1850, %v1846
    %v2643 = vpack.c.b16 %v1851, %v1847
    %v2644 = vpack.c.b16 %v1852, %v1848
    %v2645 = vpack.c.b16 %v1853, %v1849
    %v2646 = vpack.c.b16 %v1858, %v1854
    %v2647 = vpack.c.b16 %v1859, %v1855
    %v2648 = vpack.c.b16 %v1860, %v1856
    %v2649 = vpack.c.b16 %v1861, %v1857
    %v2650 = vpack.c.b16 %v1866, %v1862
    %v2651 = vpack.c.b16 %v1867, %v1863
    %v2652 = vpack.c.b16 %v1868, %v1864
    %v2653 = vpack.c.b16 %v1869, %v1865
    %v2654 = vpack.c.b16 %v1874, %v1870
    %v2655 = vpack.c.b16 %v1875, %v1871
    %v2656 = vpack.c.b16 %v1876, %v1872
    %v2657 = vpack.c.b16 %v1877, %v1873
    %v2658 = vpack.c.b16 %v1882, %v1878
    %v2659 = vpack.c.b16 %v1883, %v1879
    %v2660 = vpack.c.b16 %v1884, %v1880
    %v2661 = vpack.c.b16 %v1885, %v1881
    %v2662 = vpack.c.b16 %v1890, %v1886
    %v2663 = vpack.c.b16 %v1891, %v1887
    %v2664 = vpack.c.b16 %v1892, %v1888
    %v2665 = vpack.c.b16 %v1893, %v1889
    %v2666 = vpack.c.b16 %v1898, %v1894
    %v2667 = vpack.c.b16 %v1899, %v1895
    %v2668 = vpack.c.b16 %v1900, %v1896
    %v2669 = vpack.c.b16 %v1901, %v1897
    %v2670 = vpack.c.b16 %v1906, %v1902
    %v2671 = vpack.c.b16 %v1907, %v1903
    %v2672 = vpack.c.b16 %v1908, %v1904
    %v2673 = vpack.c.b16 %v1909, %v1905
    %v2674 = vpack.c.b16 %v1914, %v1910
    %v2675 = vpack.c.b16 %v1915, %v1911
    %v2676 = vpack.c.b16 %v1916, %v1912
    %v2677 = vpack.c.b16 %v1917, %v1913
    %v2678 = vpack.c.b16 %v1922, %v1918
    %v2679 = vpack.c.b16 %v1923, %v1919
    %v2680 = vpack.c.b16 %v1924, %v1920
    %v2681 = vpack.c.b16 %v1925, %v1921
    %v2682 = vpack.c.b16 %v1930, %v1926
    %v2683 = vpack.c.b16 %v1931, %v1927
    %v2684 = vpack.c.b16 %v1932, %v1928
    %v2685 = vpack.c.b16 %v1933, %v1929
    %v2686 = vpack.c.b16 %v1938, %v1934
    %v2687 = vpack.c.b16 %v1939, %v1935
    %v2688 = vpack.c.b16 %v1940, %v1936
    %v2689 = vpack.c.b16 %v1941, %v1937
    %v2690 = vpack.c.b16 %v1946, %v1942
    %v2691 = vpack.c.b16 %v1947, %v1943
    %v2692 = vpack.c.b16 %v1948, %v1944
    %v2693 = vpack.c.b16 %v1949, %v1945
    %v2694 = vpack.c.b16 %v1954, %v1950
    %v2695 = vpack.c.b16 %v1955, %v1951
    %v2696 = vpack.c.b16 %v1956, %v1952
    %v2697 = vpack.c.b16 %v1957, %v1953
    %v2698 = vpack.c.b16 %v1962, %v1958
    %v2699 = vpack.c.b16 %v1963, %v1959
    %v2700 = vpack.c.b16 %v1964, %v1960
    %v2701 = vpack.c.b16 %v1965, %v1961
    %v2702 = vpack.c.b16 %v1970, %v1966
    %v2703 = vpack.c.b16 %v1971, %v1967
    %v2704 = vpack.c.b16 %v1972, %v1968
    %v2705 = vpack.c.b16 %v1973, %v1969
    %v2706 = vpack.c.b16 %v1978, %v1974
    %v2707 = vpack.c.b16 %v1979, %v1975
    %v2708 = vpack.c.b16 %v1980, %v1976
    %v2709 = vpack.c.b16 %v1981, %v1977
    %v2710 = vpack.c.b16 %v1986, %v1982
    %v2711 = vpack.c.b16 %v1987, %v1983
    %v2712 = vpack.c.b16 %v1988, %v1984
    %v2713 = vpack.c.b16 %v1989, %v1985
    %v2714 = vpack.c.b16 %v1994, %v1990
    %v2715 = vpack.c.b16 %v1995, %v1991
    %v2716 = vpack.c.b16 %v1996, %v1992
    %v2717 = vpack.c.b16 %v1997, %v1993
    %v2718 = vpack.c.b16 %v2002, %v1998
    %v2719 = vpack.c.b16 %v2003, %v1999
    %v2720 = vpack.c.b16 %v2004, %v2000
    %v2721 = vpack.c.b16 %v2005, %v2001
    %v2722 = vpack.c.b16 %v2010, %v2006
    %v2723 = vpack.c.b16 %v2011, %v2007
    %v2724 = vpack.c.b16 %v2012, %v2008
    %v2725 = vpack.c.b16 %v2013, %v2009
    %v2726 = vpack.c.b16 %v2018, %v2014
    %v2727 = vpack.c.b16 %v2019, %v2015
    %v2728 = vpack.c.b16 %v2020, %v2016
    %v2729 = vpack.c.b16 %v2021, %v2017
    %v2730 = vpack.c.b16 %v2026, %v2022
    %v2731 = vpack.c.b16 %v2027, %v2023
    %v2732 = vpack.c.b16 %v2028, %v2024
    %v2733 = vpack.c.b16 %v2029, %v2025
    %v2734 = vpack.c.b16 %v2034, %v2030
    %v2735 = vpack.c.b16 %v2035, %v2031
    %v2736 = vpack.c.b16 %v2036, %v2032
    %v2737 = vpack.c.b16 %v2037, %v2033
    %v2738 = vpack.c.b16 %v2042, %v2038
    %v2739 = vpack.c.b16 %v2043, %v2039
    %v2740 = vpack.c.b16 %v2044, %v2040
    %v2741 = vpack.c.b16 %v2045, %v2041
    %v2742 = vpack.c.b16 %v2050, %v2046
    %v2743 = vpack.c.b16 %v2051, %v2047
    %v2744 = vpack.c.b16 %v2052, %v2048
    %v2745 = vpack.c.b16 %v2053, %v2049
    %v2746 = vpack.c.b16 %v2058, %v2054
    %v2747 = vpack.c.b16 %v2059, %v2055
    %v2748 = vpack.c.b16 %v2060, %v2056
    %v2749 = vpack.c.b16 %v2061, %v2057
    %v2750 = vpack.c.b16 %v2066, %v2062
    %v2751 = vpack.c.b16 %v2067, %v2063
    %v2752 = vpack.c.b16 %v2068, %v2064
    %v2753 = vpack.c.b16 %v2069, %v2065
    %v2754 = vpack.c.b16 %v2074, %v2070
    %v2755 = vpack.c.b16 %v2075, %v2071
    %v2756 = vpack.c.b16 %v2076, %v2072
    %v2757 = vpack.c.b16 %v2077, %v2073
    %v2758 = vpack.c.b16 %v2082, %v2078
    %v2759 = vpack.c.b16 %v2083, %v2079
    %v2760 = vpack.c.b16 %v2084, %v2080
    %v2761 = vpack.c.b16 %v2085, %v2081
    %v2762 = vpack.c.b16 %v2090, %v2086
    %v2763 = vpack.c.b16 %v2091, %v2087
    %v2764 = vpack.c.b16 %v2092, %v2088
    %v2765 = vpack.c.b16 %v2093, %v2089
    %v2766 = vpack.c.b16 %v2098, %v2094
    %v2767 = vpack.c.b16 %v2099, %v2095
    %v2768 = vpack.c.b16 %v2100, %v2096
    %v2769 = vpack.c.b16 %v2101, %v2097
    %v2770 = vpack.c.b16 %v2106, %v2102
    %v2771 = vpack.c.b16 %v2107, %v2103
    %v2772 = vpack.c.b16 %v2108, %v2104
    %v2773 = vpack.c.b16 %v2109, %v2105
    %v2774 = vpack.c.b16 %v2114, %v2110
    %v2775 = vpack.c.b16 %v2115, %v2111
    %v2776 = vpack.c.b16 %v2116, %v2112
    %v2777 = vpack.c.b16 %v2117, %v2113
    %v2778 = vpack.c.b16 %v2122, %v2118
    %v2779 = vpack.c.b16 %v2123, %v2119
    %v2780 = vpack.c.b16 %v2124, %v2120
    %v2781 = vpack.c.b16 %v2125, %v2121
    %v2782 = vpack.c.b16 %v2130, %v2126
    %v2783 = vpack.c.b16 %v2131, %v2127
    %v2784 = vpack.c.b16 %v2132, %v2128
    %v2785 = vpack.c.b16 %v2133, %v2129
    %v2786 = vpack.c.b16 %v2138, %v2134
    %v2787 = vpack.c.b16 %v2139, %v2135
    %v2788 = vpack.c.b16 %v2140, %v2136
    %v2789 = vpack.c.b16 %v2141, %v2137
    %v2790 = vpack.c.b16 %v2146, %v2142
    %v2791 = vpack.c.b16 %v2147, %v2143
    %v2792 = vpack.c.b16 %v2148, %v2144
    %v2793 = vpack.c.b16 %v2149, %v2145
    %v2794 = vpack.c.b16 %v2154, %v2150
    %v2795 = vpack.c.b16 %v2155, %v2151
    %v2796 = vpack.c.b16 %v2156, %v2152
    %v2797 = vpack.c.b16 %v2157, %v2153
    %v2798 = vpack.c.b16 %v2162, %v2158
    %v2799 = vpack.c.b16 %v2163, %v2159
    %v2800 = vpack.c.b16 %v2164, %v2160
    %v2801 = vpack.c.b16 %v2165, %v2161
    %v2802 = vpack.c.b16 %v2170, %v2166
    %v2803 = vpack.c.b16 %v2171, %v2167
    %v2804 = vpack.c.b16 %v2172, %v2168
    %v2805 = vpack.c.b16 %v2173, %v2169
    %v2806 = vpack.c.b16 %v2178, %v2174
    %v2807 = vpack.c.b16 %v2179, %v2175
    %v2808 = vpack.c.b16 %v2180, %v2176
    %v2809 = vpack.c.b16 %v2181, %v2177
    %v2810 = vpack.c.b16 %v2186, %v2182
    %v2811 = vpack.c.b16 %v2187, %v2183
    %v2812 = vpack.c.b16 %v2188, %v2184
    %v2813 = vpack.c.b16 %v2189, %v2185
    %v2814 = vpack.c.b16 %v2194, %v2190
    %v2815 = vpack.c.b16 %v2195, %v2191
    %v2816 = vpack.c.b16 %v2196, %v2192
    %v2817 = vpack.c.b16 %v2197, %v2193
    %v2818 = vpack.c.b16 %v2202, %v2198
    %v2819 = vpack.c.b16 %v2203, %v2199
    %v2820 = vpack.c.b16 %v2204, %v2200
    %v2821 = vpack.c.b16 %v2205, %v2201
    %v2822 = vpack.c.b16 %v2210, %v2206
    %v2823 = vpack.c.b16 %v2211, %v2207
    %v2824 = vpack.c.b16 %v2212, %v2208
    %v2825 = vpack.c.b16 %v2213, %v2209
    %v2826 = vpack.c.b16 %v2218, %v2214
    %v2827 = vpack.c.b16 %v2219, %v2215
    %v2828 = vpack.c.b16 %v2220, %v2216
    %v2829 = vpack.c.b16 %v2221, %v2217
    %v2830 = vpack.c.b16 %v2226, %v2222
    %v2831 = vpack.c.b16 %v2227, %v2223
    %v2832 = vpack.c.b16 %v2228, %v2224
    %v2833 = vpack.c.b16 %v2229, %v2225
    %v2834 = vpack.c.b16 %v2234, %v2230
    %v2835 = vpack.c.b16 %v2235, %v2231
    %v2836 = vpack.c.b16 %v2236, %v2232
    %v2837 = vpack.c.b16 %v2237, %v2233
    %v2838 = vpack.c.b16 %v2242, %v2238
    %v2839 = vpack.c.b16 %v2243, %v2239
    %v2840 = vpack.c.b16 %v2244, %v2240
    %v2841 = vpack.c.b16 %v2245, %v2241
    %v2842 = vpack.c.b16 %v2250, %v2246
    %v2843 = vpack.c.b16 %v2251, %v2247
    %v2844 = vpack.c.b16 %v2252, %v2248
    %v2845 = vpack.c.b16 %v2253, %v2249
    %v2846 = vpack.c.b16 %v2258, %v2254
    %v2847 = vpack.c.b16 %v2259, %v2255
    %v2848 = vpack.c.b16 %v2260, %v2256
    %v2849 = vpack.c.b16 %v2261, %v2257
    %v2850 = vpack.c.b16 %v2266, %v2262
    %v2851 = vpack.c.b16 %v2267, %v2263
    %v2852 = vpack.c.b16 %v2268, %v2264
    %v2853 = vpack.c.b16 %v2269, %v2265
    %v2854 = vpack.c.b16 %v2274, %v2270
    %v2855 = vpack.c.b16 %v2275, %v2271
    %v2856 = vpack.c.b16 %v2276, %v2272
    %v2857 = vpack.c.b16 %v2277, %v2273
    %v2858 = vpack.c.b16 %v2282, %v2278
    %v2859 = vpack.c.b16 %v2283, %v2279
    %v2860 = vpack.c.b16 %v2284, %v2280
    %v2861 = vpack.c.b16 %v2285, %v2281
    %v2862 = vpack.c.b16 %v2290, %v2286
    %v2863 = vpack.c.b16 %v2291, %v2287
    %v2864 = vpack.c.b16 %v2292, %v2288
    %v2865 = vpack.c.b16 %v2293, %v2289
    %v2866 = vpack.c.b16 %v2298, %v2294
    %v2867 = vpack.c.b16 %v2299, %v2295
    %v2868 = vpack.c.b16 %v2300, %v2296
    %v2869 = vpack.c.b16 %v2301, %v2297
    %v2870 = vpack.c.b16 %v2306, %v2302
    %v2871 = vpack.c.b16 %v2307, %v2303
    %v2872 = vpack.c.b16 %v2308, %v2304
    %v2873 = vpack.c.b16 %v2309, %v2305
    %v2874 = vpack.c.b16 %v2314, %v2310
    %v2875 = vpack.c.b16 %v2315, %v2311
    %v2876 = vpack.c.b16 %v2316, %v2312
    %v2877 = vpack.c.b16 %v2317, %v2313
    %v2878 = vpack.c.b16 %v2322, %v2318
    %v2879 = vpack.c.b16 %v2323, %v2319
    %v2880 = vpack.c.b16 %v2324, %v2320
    %v2881 = vpack.c.b16 %v2325, %v2321
    %v2882 = vpack.c.b16 %v2330, %v2326
    %v2883 = vpack.c.b16 %v2331, %v2327
    %v2884 = vpack.c.b16 %v2332, %v2328
    %v2885 = vpack.c.b16 %v2333, %v2329
    %v2886 = vpack.c.b16 %v2338, %v2334
    %v2887 = vpack.c.b16 %v2339, %v2335
    %v2888 = vpack.c.b16 %v2340, %v2336
    %v2889 = vpack.c.b16 %v2341, %v2337
    %v2890 = vpack.c.b16 %v2346, %v2342
    %v2891 = vpack.c.b16 %v2347, %v2343
    %v2892 = vpack.c.b16 %v2348, %v2344
    %v2893 = vpack.c.b16 %v2349, %v2345
    %v2894 = vpack.c.b16 %v2354, %v2350
    %v2895 = vpack.c.b16 %v2355, %v2351
    %v2896 = vpack.c.b16 %v2356, %v2352
    %v2897 = vpack.c.b16 %v2357, %v2353
    %v2898 = vpack.c.b16 %v2362, %v2358
    %v2899 = vpack.c.b16 %v2363, %v2359
    %v2900 = vpack.c.b16 %v2364, %v2360
    %v2901 = vpack.c.b16 %v2365, %v2361
    %v2902 = vpack.c.b16 %v2370, %v2366
    %v2903 = vpack.c.b16 %v2371, %v2367
    %v2904 = vpack.c.b16 %v2372, %v2368
    %v2905 = vpack.c.b16 %v2373, %v2369
    %v2906 = vpack.c.b16 %v2378, %v2374
    %v2907 = vpack.c.b16 %v2379, %v2375
    %v2908 = vpack.c.b16 %v2380, %v2376
    %v2909 = vpack.c.b16 %v2381, %v2377
    %v2910 = vpack.c.b16 %v2386, %v2382
    %v2911 = vpack.c.b16 %v2387, %v2383
    %v2912 = vpack.c.b16 %v2388, %v2384
    %v2913 = vpack.c.b16 %v2389, %v2385
    %v2914 = vpack.c.b16 %v2394, %v2390
    %v2915 = vpack.c.b16 %v2395, %v2391
    %v2916 = vpack.c.b16 %v2396, %v2392
    %v2917 = vpack.c.b16 %v2397, %v2393
    %v2918 = vpack.c.b16 %v2402, %v2398
    %v2919 = vpack.c.b16 %v2403, %v2399
    %v2920 = vpack.c.b16 %v2404, %v2400
    %v2921 = vpack.c.b16 %v2405, %v2401
    %v2922 = vpack.c.b16 %v2410, %v2406
    %v2923 = vpack.c.b16 %v2411, %v2407
    %v2924 = vpack.c.b16 %v2412, %v2408
    %v2925 = vpack.c.b16 %v2413, %v2409
    %3438 = vmatprep.subr.bf16.mxu0 %v2443
    %3439 = vmatpush1.bf16.msra.mxu0 %v2442
    %3440 = vmatprep.subr.bf16.mxu0 %v2439
    %3441 = vmatpush1.bf16.msra.mxu0 %v2438
    %3442 = vmatprep.subr.bf16.mxu0 %v2435
    %3443 = vmatpush1.bf16.msra.mxu0 %v2434
    %3444 = vmatprep.subr.bf16.mxu0 %v2431
    %3445 = vmatpush1.bf16.msra.mxu0 %v2430
    %3446 = vmatprep.subr.bf16.mxu0 %v2427
    %3447 = vmatpush1.bf16.msra.mxu0 %v2426
    %3448 = vmatprep.subr.bf16.mxu0 %v2423
    %3449 = vmatpush1.bf16.msra.mxu0 %v2422
    %3450 = vmatprep.subr.bf16.mxu0 %v2419
    %3451 = vmatpush1.bf16.msra.mxu0 %v2418
    %3452 = vmatprep.subr.bf16.mxu0 %v2415
    %3453 = vmatpush1.bf16.msra.mxu0 %v2414
    %3454 = vmatprep.subr.bf16.mxu0 %v2475
    %3455 = vmatpush2.bf16.msra.mxu0 %v2474
    %3456 = vmatprep.subr.bf16.mxu0 %v2471
    %3457 = vmatpush2.bf16.msra.mxu0 %v2470
    %3458 = vmatprep.subr.bf16.mxu0 %v2467
    %3459 = vmatpush2.bf16.msra.mxu0 %v2466
    %3460 = vmatprep.subr.bf16.mxu0 %v2463
    %3461 = vmatpush2.bf16.msra.mxu0 %v2462
    %3462 = vmatprep.subr.bf16.mxu0 %v2459
    %3463 = vmatpush2.bf16.msra.mxu0 %v2458
    %3464 = vmatprep.subr.bf16.mxu0 %v2455
    %3465 = vmatpush2.bf16.msra.mxu0 %v2454
    %3466 = vmatprep.subr.bf16.mxu0 %v2451
    %3467 = vmatpush2.bf16.msra.mxu0 %v2450
    %3468 = vmatprep.subr.bf16.mxu0 %v2447
    %3469 = vmatpush2.bf16.msra.mxu0 %v2446
    %3470 = vmatprep.mubr.bf16.mxu0 %v329
    %3471 = vmatmul.mubr.bf16.gmra.mxu0 %v328
    %v3472 = vpop.f32.mrf.mxu0
    %v3473 = vadd.f32 %v861, %v3472
    %v3474 = vpop.f32.mrf.mxu0
    %v3475 = vadd.f32 %v865, %v3474
    %v3476 = vpop.f32.mrf.mxu0
    %v3477 = vpop.f32.mrf.mxu0
    %3478 = vdwg.mxu0
    %3479 = vmatprep.subr.bf16.mxu0 %v2507
    %3480 = vmatpush1.bf16.msra.mxu0 %v2506
    %3481 = vmatprep.subr.bf16.mxu0 %v2503
    %3482 = vmatpush1.bf16.msra.mxu0 %v2502
    %3483 = vmatprep.subr.bf16.mxu0 %v2499
    %3484 = vmatpush1.bf16.msra.mxu0 %v2498
    %3485 = vmatprep.subr.bf16.mxu0 %v2495
    %3486 = vmatpush1.bf16.msra.mxu0 %v2494
    %3487 = vmatprep.subr.bf16.mxu0 %v2491
    %3488 = vmatpush1.bf16.msra.mxu0 %v2490
    %3489 = vmatprep.subr.bf16.mxu0 %v2487
    %3490 = vmatpush1.bf16.msra.mxu0 %v2486
    %3491 = vmatprep.subr.bf16.mxu0 %v2483
    %3492 = vmatpush1.bf16.msra.mxu0 %v2482
    %3493 = vmatprep.subr.bf16.mxu0 %v2479
    %3494 = vmatpush1.bf16.msra.mxu0 %v2478
    %3495 = vmatprep.subr.bf16.mxu0 %v2539
    %3496 = vmatpush2.bf16.msra.mxu0 %v2538
    %3497 = vmatprep.subr.bf16.mxu0 %v2535
    %3498 = vmatpush2.bf16.msra.mxu0 %v2534
    %3499 = vmatprep.subr.bf16.mxu0 %v2531
    %3500 = vmatpush2.bf16.msra.mxu0 %v2530
    %3501 = vmatprep.subr.bf16.mxu0 %v2527
    %3502 = vmatpush2.bf16.msra.mxu0 %v2526
    %3503 = vmatprep.subr.bf16.mxu0 %v2523
    %3504 = vmatpush2.bf16.msra.mxu0 %v2522
    %3505 = vmatprep.subr.bf16.mxu0 %v2519
    %3506 = vmatpush2.bf16.msra.mxu0 %v2518
    %3507 = vmatprep.subr.bf16.mxu0 %v2515
    %3508 = vmatpush2.bf16.msra.mxu0 %v2514
    %3509 = vmatprep.subr.bf16.mxu0 %v2511
    %3510 = vmatpush2.bf16.msra.mxu0 %v2510
    %3511 = vmatprep.mubr.bf16.mxu0 %v331
    %3512 = vmatmul.mubr.bf16.gmra.mxu0 %v330
    %v3513 = vpop.f32.mrf.mxu0
    %v3514 = vadd.f32 %v3473, %v3513
    %v3515 = vpop.f32.mrf.mxu0
    %v3516 = vadd.f32 %v3475, %v3515
    %v3517 = vpop.f32.mrf.mxu0
    %v3518 = vpop.f32.mrf.mxu0
    %3519 = vdwg.mxu0
    %3520 = vmatprep.subr.bf16.mxu0 %v2571
    %3521 = vmatpush1.bf16.msra.mxu0 %v2570
    %3522 = vmatprep.subr.bf16.mxu0 %v2567
    %3523 = vmatpush1.bf16.msra.mxu0 %v2566
    %3524 = vmatprep.subr.bf16.mxu0 %v2563
    %3525 = vmatpush1.bf16.msra.mxu0 %v2562
    %3526 = vmatprep.subr.bf16.mxu0 %v2559
    %3527 = vmatpush1.bf16.msra.mxu0 %v2558
    %3528 = vmatprep.subr.bf16.mxu0 %v2555
    %3529 = vmatpush1.bf16.msra.mxu0 %v2554
    %3530 = vmatprep.subr.bf16.mxu0 %v2551
    %3531 = vmatpush1.bf16.msra.mxu0 %v2550
    %3532 = vmatprep.subr.bf16.mxu0 %v2547
    %3533 = vmatpush1.bf16.msra.mxu0 %v2546
    %3534 = vmatprep.subr.bf16.mxu0 %v2543
    %3535 = vmatpush1.bf16.msra.mxu0 %v2542
    %3536 = vmatprep.subr.bf16.mxu0 %v2603
    %3537 = vmatpush2.bf16.msra.mxu0 %v2602
    %3538 = vmatprep.subr.bf16.mxu0 %v2599
    %3539 = vmatpush2.bf16.msra.mxu0 %v2598
    %3540 = vmatprep.subr.bf16.mxu0 %v2595
    %3541 = vmatpush2.bf16.msra.mxu0 %v2594
    %3542 = vmatprep.subr.bf16.mxu0 %v2591
    %3543 = vmatpush2.bf16.msra.mxu0 %v2590
    %3544 = vmatprep.subr.bf16.mxu0 %v2587
    %3545 = vmatpush2.bf16.msra.mxu0 %v2586
    %3546 = vmatprep.subr.bf16.mxu0 %v2583
    %3547 = vmatpush2.bf16.msra.mxu0 %v2582
    %3548 = vmatprep.subr.bf16.mxu0 %v2579
    %3549 = vmatpush2.bf16.msra.mxu0 %v2578
    %3550 = vmatprep.subr.bf16.mxu0 %v2575
    %3551 = vmatpush2.bf16.msra.mxu0 %v2574
    %3552 = vmatprep.mubr.bf16.mxu0 %v333
    %3553 = vmatmul.mubr.bf16.gmra.mxu0 %v332
    %v3554 = vpop.f32.mrf.mxu0
    %v3555 = vadd.f32 %v3514, %v3554
    %v3556 = vpop.f32.mrf.mxu0
    %v3557 = vadd.f32 %v3516, %v3556
    %v3558 = vpop.f32.mrf.mxu0
    %v3559 = vpop.f32.mrf.mxu0
    %3560 = vdwg.mxu0
    %3561 = vmatprep.subr.bf16.mxu0 %v2635
    %3562 = vmatpush1.bf16.msra.mxu0 %v2634
    %3563 = vmatprep.subr.bf16.mxu0 %v2631
    %3564 = vmatpush1.bf16.msra.mxu0 %v2630
    %3565 = vmatprep.subr.bf16.mxu0 %v2627
    %3566 = vmatpush1.bf16.msra.mxu0 %v2626
    %3567 = vmatprep.subr.bf16.mxu0 %v2623
    %3568 = vmatpush1.bf16.msra.mxu0 %v2622
    %3569 = vmatprep.subr.bf16.mxu0 %v2619
    %3570 = vmatpush1.bf16.msra.mxu0 %v2618
    %3571 = vmatprep.subr.bf16.mxu0 %v2615
    %3572 = vmatpush1.bf16.msra.mxu0 %v2614
    %3573 = vmatprep.subr.bf16.mxu0 %v2611
    %3574 = vmatpush1.bf16.msra.mxu0 %v2610
    %3575 = vmatprep.subr.bf16.mxu0 %v2607
    %3576 = vmatpush1.bf16.msra.mxu0 %v2606
    %3577 = vmatprep.subr.bf16.mxu0 %v2667
    %3578 = vmatpush2.bf16.msra.mxu0 %v2666
    %3579 = vmatprep.subr.bf16.mxu0 %v2663
    %3580 = vmatpush2.bf16.msra.mxu0 %v2662
    %3581 = vmatprep.subr.bf16.mxu0 %v2659
    %3582 = vmatpush2.bf16.msra.mxu0 %v2658
    %3583 = vmatprep.subr.bf16.mxu0 %v2655
    %3584 = vmatpush2.bf16.msra.mxu0 %v2654
    %3585 = vmatprep.subr.bf16.mxu0 %v2651
    %3586 = vmatpush2.bf16.msra.mxu0 %v2650
    %3587 = vmatprep.subr.bf16.mxu0 %v2647
    %3588 = vmatpush2.bf16.msra.mxu0 %v2646
    %3589 = vmatprep.subr.bf16.mxu0 %v2643
    %3590 = vmatpush2.bf16.msra.mxu0 %v2642
    %3591 = vmatprep.subr.bf16.mxu0 %v2639
    %3592 = vmatpush2.bf16.msra.mxu0 %v2638
    %3593 = vmatprep.mubr.bf16.mxu0 %v335
    %3594 = vmatmul.mubr.bf16.gmra.mxu0 %v334
    %v3595 = vpop.f32.mrf.mxu0
    %v3596 = vadd.f32 %v3555, %v3595
    %v3597 = vpop.f32.mrf.mxu0
    %v3598 = vadd.f32 %v3557, %v3597
    %v3599 = vpop.f32.mrf.mxu0
    %v3600 = vpop.f32.mrf.mxu0
    %3601 = vdwg.mxu0
    %3602 = vmatprep.subr.bf16.mxu0 %v2699
    %3603 = vmatpush1.bf16.msra.mxu0 %v2698
    %3604 = vmatprep.subr.bf16.mxu0 %v2695
    %3605 = vmatpush1.bf16.msra.mxu0 %v2694
    %3606 = vmatprep.subr.bf16.mxu0 %v2691
    %3607 = vmatpush1.bf16.msra.mxu0 %v2690
    %3608 = vmatprep.subr.bf16.mxu0 %v2687
    %3609 = vmatpush1.bf16.msra.mxu0 %v2686
    %3610 = vmatprep.subr.bf16.mxu0 %v2683
    %3611 = vmatpush1.bf16.msra.mxu0 %v2682
    %3612 = vmatprep.subr.bf16.mxu0 %v2679
    %3613 = vmatpush1.bf16.msra.mxu0 %v2678
    %3614 = vmatprep.subr.bf16.mxu0 %v2675
    %3615 = vmatpush1.bf16.msra.mxu0 %v2674
    %3616 = vmatprep.subr.bf16.mxu0 %v2671
    %3617 = vmatpush1.bf16.msra.mxu0 %v2670
    %3618 = vmatprep.subr.bf16.mxu0 %v2731
    %3619 = vmatpush2.bf16.msra.mxu0 %v2730
    %3620 = vmatprep.subr.bf16.mxu0 %v2727
    %3621 = vmatpush2.bf16.msra.mxu0 %v2726
    %3622 = vmatprep.subr.bf16.mxu0 %v2723
    %3623 = vmatpush2.bf16.msra.mxu0 %v2722
    %3624 = vmatprep.subr.bf16.mxu0 %v2719
    %3625 = vmatpush2.bf16.msra.mxu0 %v2718
    %3626 = vmatprep.subr.bf16.mxu0 %v2715
    %3627 = vmatpush2.bf16.msra.mxu0 %v2714
    %3628 = vmatprep.subr.bf16.mxu0 %v2711
    %3629 = vmatpush2.bf16.msra.mxu0 %v2710
    %3630 = vmatprep.subr.bf16.mxu0 %v2707
    %3631 = vmatpush2.bf16.msra.mxu0 %v2706
    %3632 = vmatprep.subr.bf16.mxu0 %v2703
    %3633 = vmatpush2.bf16.msra.mxu0 %v2702
    %3634 = vmatprep.mubr.bf16.mxu0 %v337
    %3635 = vmatmul.mubr.bf16.gmra.mxu0 %v336
    %v3636 = vpop.f32.mrf.mxu0
    %v3637 = vadd.f32 %v3596, %v3636
    %v3638 = vpop.f32.mrf.mxu0
    %v3639 = vadd.f32 %v3598, %v3638
    %v3640 = vpop.f32.mrf.mxu0
    %v3641 = vpop.f32.mrf.mxu0
    %3642 = vdwg.mxu0
    %3643 = vmatprep.subr.bf16.mxu0 %v2763
    %3644 = vmatpush1.bf16.msra.mxu0 %v2762
    %3645 = vmatprep.subr.bf16.mxu0 %v2759
    %3646 = vmatpush1.bf16.msra.mxu0 %v2758
    %3647 = vmatprep.subr.bf16.mxu0 %v2755
    %3648 = vmatpush1.bf16.msra.mxu0 %v2754
    %3649 = vmatprep.subr.bf16.mxu0 %v2751
    %3650 = vmatpush1.bf16.msra.mxu0 %v2750
    %3651 = vmatprep.subr.bf16.mxu0 %v2747
    %3652 = vmatpush1.bf16.msra.mxu0 %v2746
    %3653 = vmatprep.subr.bf16.mxu0 %v2743
    %3654 = vmatpush1.bf16.msra.mxu0 %v2742
    %3655 = vmatprep.subr.bf16.mxu0 %v2739
    %3656 = vmatpush1.bf16.msra.mxu0 %v2738
    %3657 = vmatprep.subr.bf16.mxu0 %v2735
    %3658 = vmatpush1.bf16.msra.mxu0 %v2734
    %3659 = vmatprep.subr.bf16.mxu0 %v2795
    %3660 = vmatpush2.bf16.msra.mxu0 %v2794
    %3661 = vmatprep.subr.bf16.mxu0 %v2791
    %3662 = vmatpush2.bf16.msra.mxu0 %v2790
    %3663 = vmatprep.subr.bf16.mxu0 %v2787
    %3664 = vmatpush2.bf16.msra.mxu0 %v2786
    %3665 = vmatprep.subr.bf16.mxu0 %v2783
    %3666 = vmatpush2.bf16.msra.mxu0 %v2782
    %3667 = vmatprep.subr.bf16.mxu0 %v2779
    %3668 = vmatpush2.bf16.msra.mxu0 %v2778
    %3669 = vmatprep.subr.bf16.mxu0 %v2775
    %3670 = vmatpush2.bf16.msra.mxu0 %v2774
    %3671 = vmatprep.subr.bf16.mxu0 %v2771
    %3672 = vmatpush2.bf16.msra.mxu0 %v2770
    %3673 = vmatprep.subr.bf16.mxu0 %v2767
    %3674 = vmatpush2.bf16.msra.mxu0 %v2766
    %3675 = vmatprep.mubr.bf16.mxu0 %v339
    %3676 = vmatmul.mubr.bf16.gmra.mxu0 %v338
    %v3677 = vpop.f32.mrf.mxu0
    %v3678 = vadd.f32 %v3637, %v3677
    %v3679 = vpop.f32.mrf.mxu0
    %v3680 = vadd.f32 %v3639, %v3679
    %v3681 = vpop.f32.mrf.mxu0
    %v3682 = vpop.f32.mrf.mxu0
    %3683 = vdwg.mxu0
    %3684 = vmatprep.subr.bf16.mxu0 %v2827
    %3685 = vmatpush1.bf16.msra.mxu0 %v2826
    %3686 = vmatprep.subr.bf16.mxu0 %v2823
    %3687 = vmatpush1.bf16.msra.mxu0 %v2822
    %3688 = vmatprep.subr.bf16.mxu0 %v2819
    %3689 = vmatpush1.bf16.msra.mxu0 %v2818
    %3690 = vmatprep.subr.bf16.mxu0 %v2815
    %3691 = vmatpush1.bf16.msra.mxu0 %v2814
    %3692 = vmatprep.subr.bf16.mxu0 %v2811
    %3693 = vmatpush1.bf16.msra.mxu0 %v2810
    %3694 = vmatprep.subr.bf16.mxu0 %v2807
    %3695 = vmatpush1.bf16.msra.mxu0 %v2806
    %3696 = vmatprep.subr.bf16.mxu0 %v2803
    %3697 = vmatpush1.bf16.msra.mxu0 %v2802
    %3698 = vmatprep.subr.bf16.mxu0 %v2799
    %3699 = vmatpush1.bf16.msra.mxu0 %v2798
    %3700 = vmatprep.subr.bf16.mxu0 %v2859
    %3701 = vmatpush2.bf16.msra.mxu0 %v2858
    %3702 = vmatprep.subr.bf16.mxu0 %v2855
    %3703 = vmatpush2.bf16.msra.mxu0 %v2854
    %3704 = vmatprep.subr.bf16.mxu0 %v2851
    %3705 = vmatpush2.bf16.msra.mxu0 %v2850
    %3706 = vmatprep.subr.bf16.mxu0 %v2847
    %3707 = vmatpush2.bf16.msra.mxu0 %v2846
    %3708 = vmatprep.subr.bf16.mxu0 %v2843
    %3709 = vmatpush2.bf16.msra.mxu0 %v2842
    %3710 = vmatprep.subr.bf16.mxu0 %v2839
    %3711 = vmatpush2.bf16.msra.mxu0 %v2838
    %3712 = vmatprep.subr.bf16.mxu0 %v2835
    %3713 = vmatpush2.bf16.msra.mxu0 %v2834
    %3714 = vmatprep.subr.bf16.mxu0 %v2831
    %3715 = vmatpush2.bf16.msra.mxu0 %v2830
    %3716 = vmatprep.mubr.bf16.mxu0 %v341
    %3717 = vmatmul.mubr.bf16.gmra.mxu0 %v340
    %v3718 = vpop.f32.mrf.mxu0
    %v3719 = vadd.f32 %v3678, %v3718
    %v3720 = vpop.f32.mrf.mxu0
    %v3721 = vadd.f32 %v3680, %v3720
    %v3722 = vpop.f32.mrf.mxu0
    %v3723 = vpop.f32.mrf.mxu0
    %3724 = vdwg.mxu0
    %3725 = vmatprep.subr.bf16.mxu0 %v2891
    %3726 = vmatpush1.bf16.msra.mxu0 %v2890
    %3727 = vmatprep.subr.bf16.mxu0 %v2887
    %3728 = vmatpush1.bf16.msra.mxu0 %v2886
    %3729 = vmatprep.subr.bf16.mxu0 %v2883
    %3730 = vmatpush1.bf16.msra.mxu0 %v2882
    %3731 = vmatprep.subr.bf16.mxu0 %v2879
    %3732 = vmatpush1.bf16.msra.mxu0 %v2878
    %3733 = vmatprep.subr.bf16.mxu0 %v2875
    %3734 = vmatpush1.bf16.msra.mxu0 %v2874
    %3735 = vmatprep.subr.bf16.mxu0 %v2871
    %3736 = vmatpush1.bf16.msra.mxu0 %v2870
    %3737 = vmatprep.subr.bf16.mxu0 %v2867
    %3738 = vmatpush1.bf16.msra.mxu0 %v2866
    %3739 = vmatprep.subr.bf16.mxu0 %v2863
    %3740 = vmatpush1.bf16.msra.mxu0 %v2862
    %3741 = vmatprep.subr.bf16.mxu0 %v2923
    %3742 = vmatpush2.bf16.msra.mxu0 %v2922
    %3743 = vmatprep.subr.bf16.mxu0 %v2919
    %3744 = vmatpush2.bf16.msra.mxu0 %v2918
    %3745 = vmatprep.subr.bf16.mxu0 %v2915
    %3746 = vmatpush2.bf16.msra.mxu0 %v2914
    %3747 = vmatprep.subr.bf16.mxu0 %v2911
    %3748 = vmatpush2.bf16.msra.mxu0 %v2910
    %3749 = vmatprep.subr.bf16.mxu0 %v2907
    %3750 = vmatpush2.bf16.msra.mxu0 %v2906
    %3751 = vmatprep.subr.bf16.mxu0 %v2903
    %3752 = vmatpush2.bf16.msra.mxu0 %v2902
    %3753 = vmatprep.subr.bf16.mxu0 %v2899
    %3754 = vmatpush2.bf16.msra.mxu0 %v2898
    %3755 = vmatprep.subr.bf16.mxu0 %v2895
    %3756 = vmatpush2.bf16.msra.mxu0 %v2894
    %3757 = vmatprep.mubr.bf16.mxu0 %v343
    %3758 = vmatmul.mubr.bf16.gmra.mxu0 %v342
    %v3759 = vpop.f32.mrf.mxu0
    %v3760 = vadd.f32 %v3719, %v3759
    %v3761 = vpop.f32.mrf.mxu0
    %v3762 = vadd.f32 %v3721, %v3761
    %v3763 = vpop.f32.mrf.mxu0
    %v3764 = vpop.f32.mrf.mxu0
    %3765 = vdwg.mxu0
    %3766 = vmatprep.subr.bf16.mxu0 %v2445
    %3767 = vmatpush1.bf16.msra.mxu0 %v2444
    %3768 = vmatprep.subr.bf16.mxu0 %v2441
    %3769 = vmatpush1.bf16.msra.mxu0 %v2440
    %3770 = vmatprep.subr.bf16.mxu0 %v2437
    %3771 = vmatpush1.bf16.msra.mxu0 %v2436
    %3772 = vmatprep.subr.bf16.mxu0 %v2433
    %3773 = vmatpush1.bf16.msra.mxu0 %v2432
    %3774 = vmatprep.subr.bf16.mxu0 %v2429
    %3775 = vmatpush1.bf16.msra.mxu0 %v2428
    %3776 = vmatprep.subr.bf16.mxu0 %v2425
    %3777 = vmatpush1.bf16.msra.mxu0 %v2424
    %3778 = vmatprep.subr.bf16.mxu0 %v2421
    %3779 = vmatpush1.bf16.msra.mxu0 %v2420
    %3780 = vmatprep.subr.bf16.mxu0 %v2417
    %3781 = vmatpush1.bf16.msra.mxu0 %v2416
    %3782 = vmatprep.subr.bf16.mxu0 %v2477
    %3783 = vmatpush2.bf16.msra.mxu0 %v2476
    %3784 = vmatprep.subr.bf16.mxu0 %v2473
    %3785 = vmatpush2.bf16.msra.mxu0 %v2472
    %3786 = vmatprep.subr.bf16.mxu0 %v2469
    %3787 = vmatpush2.bf16.msra.mxu0 %v2468
    %3788 = vmatprep.subr.bf16.mxu0 %v2465
    %3789 = vmatpush2.bf16.msra.mxu0 %v2464
    %3790 = vmatprep.subr.bf16.mxu0 %v2461
    %3791 = vmatpush2.bf16.msra.mxu0 %v2460
    %3792 = vmatprep.subr.bf16.mxu0 %v2457
    %3793 = vmatpush2.bf16.msra.mxu0 %v2456
    %3794 = vmatprep.subr.bf16.mxu0 %v2453
    %3795 = vmatpush2.bf16.msra.mxu0 %v2452
    %3796 = vmatprep.subr.bf16.mxu0 %v2449
    %3797 = vmatpush2.bf16.msra.mxu0 %v2448
    %3798 = vmatprep.mubr.bf16.mxu0 %v329
    %3799 = vmatmul.mubr.bf16.gmra.mxu0 %v328
    %v3800 = vpop.f32.mrf.mxu0
    %v3801 = vadd.f32 %v869, %v3800
    %v3802 = vpop.f32.mrf.mxu0
    %v3803 = vadd.f32 %v873, %v3802
    %v3804 = vpop.f32.mrf.mxu0
    %v3805 = vpop.f32.mrf.mxu0
    %3806 = vdwg.mxu0
    %3807 = vmatprep.subr.bf16.mxu0 %v2509
    %3808 = vmatpush1.bf16.msra.mxu0 %v2508
    %3809 = vmatprep.subr.bf16.mxu0 %v2505
    %3810 = vmatpush1.bf16.msra.mxu0 %v2504
    %3811 = vmatprep.subr.bf16.mxu0 %v2501
    %3812 = vmatpush1.bf16.msra.mxu0 %v2500
    %3813 = vmatprep.subr.bf16.mxu0 %v2497
    %3814 = vmatpush1.bf16.msra.mxu0 %v2496
    %3815 = vmatprep.subr.bf16.mxu0 %v2493
    %3816 = vmatpush1.bf16.msra.mxu0 %v2492
    %3817 = vmatprep.subr.bf16.mxu0 %v2489
    %3818 = vmatpush1.bf16.msra.mxu0 %v2488
    %3819 = vmatprep.subr.bf16.mxu0 %v2485
    %3820 = vmatpush1.bf16.msra.mxu0 %v2484
    %3821 = vmatprep.subr.bf16.mxu0 %v2481
    %3822 = vmatpush1.bf16.msra.mxu0 %v2480
    %3823 = vmatprep.subr.bf16.mxu0 %v2541
    %3824 = vmatpush2.bf16.msra.mxu0 %v2540
    %3825 = vmatprep.subr.bf16.mxu0 %v2537
    %3826 = vmatpush2.bf16.msra.mxu0 %v2536
    %3827 = vmatprep.subr.bf16.mxu0 %v2533
    %3828 = vmatpush2.bf16.msra.mxu0 %v2532
    %3829 = vmatprep.subr.bf16.mxu0 %v2529
    %3830 = vmatpush2.bf16.msra.mxu0 %v2528
    %3831 = vmatprep.subr.bf16.mxu0 %v2525
    %3832 = vmatpush2.bf16.msra.mxu0 %v2524
    %3833 = vmatprep.subr.bf16.mxu0 %v2521
    %3834 = vmatpush2.bf16.msra.mxu0 %v2520
    %3835 = vmatprep.subr.bf16.mxu0 %v2517
    %3836 = vmatpush2.bf16.msra.mxu0 %v2516
    %3837 = vmatprep.subr.bf16.mxu0 %v2513
    %3838 = vmatpush2.bf16.msra.mxu0 %v2512
    %3839 = vmatprep.mubr.bf16.mxu0 %v331
    %3840 = vmatmul.mubr.bf16.gmra.mxu0 %v330
    %v3841 = vpop.f32.mrf.mxu0
    %v3842 = vadd.f32 %v3801, %v3841
    %v3843 = vpop.f32.mrf.mxu0
    %v3844 = vadd.f32 %v3803, %v3843
    %v3845 = vpop.f32.mrf.mxu0
    %v3846 = vpop.f32.mrf.mxu0
    %3847 = vdwg.mxu0
    %3848 = vmatprep.subr.bf16.mxu0 %v2573
    %3849 = vmatpush1.bf16.msra.mxu0 %v2572
    %3850 = vmatprep.subr.bf16.mxu0 %v2569
    %3851 = vmatpush1.bf16.msra.mxu0 %v2568
    %3852 = vmatprep.subr.bf16.mxu0 %v2565
    %3853 = vmatpush1.bf16.msra.mxu0 %v2564
    %3854 = vmatprep.subr.bf16.mxu0 %v2561
    %3855 = vmatpush1.bf16.msra.mxu0 %v2560
    %3856 = vmatprep.subr.bf16.mxu0 %v2557
    %3857 = vmatpush1.bf16.msra.mxu0 %v2556
    %3858 = vmatprep.subr.bf16.mxu0 %v2553
    %3859 = vmatpush1.bf16.msra.mxu0 %v2552
    %3860 = vmatprep.subr.bf16.mxu0 %v2549
    %3861 = vmatpush1.bf16.msra.mxu0 %v2548
    %3862 = vmatprep.subr.bf16.mxu0 %v2545
    %3863 = vmatpush1.bf16.msra.mxu0 %v2544
    %3864 = vmatprep.subr.bf16.mxu0 %v2605
    %3865 = vmatpush2.bf16.msra.mxu0 %v2604
    %3866 = vmatprep.subr.bf16.mxu0 %v2601
    %3867 = vmatpush2.bf16.msra.mxu0 %v2600
    %3868 = vmatprep.subr.bf16.mxu0 %v2597
    %3869 = vmatpush2.bf16.msra.mxu0 %v2596
    %3870 = vmatprep.subr.bf16.mxu0 %v2593
    %3871 = vmatpush2.bf16.msra.mxu0 %v2592
    %3872 = vmatprep.subr.bf16.mxu0 %v2589
    %3873 = vmatpush2.bf16.msra.mxu0 %v2588
    %3874 = vmatprep.subr.bf16.mxu0 %v2585
    %3875 = vmatpush2.bf16.msra.mxu0 %v2584
    %3876 = vmatprep.subr.bf16.mxu0 %v2581
    %3877 = vmatpush2.bf16.msra.mxu0 %v2580
    %3878 = vmatprep.subr.bf16.mxu0 %v2577
    %3879 = vmatpush2.bf16.msra.mxu0 %v2576
    %3880 = vmatprep.mubr.bf16.mxu0 %v333
    %3881 = vmatmul.mubr.bf16.gmra.mxu0 %v332
    %v3882 = vpop.f32.mrf.mxu0
    %v3883 = vadd.f32 %v3842, %v3882
    %v3884 = vpop.f32.mrf.mxu0
    %v3885 = vadd.f32 %v3844, %v3884
    %v3886 = vpop.f32.mrf.mxu0
    %v3887 = vpop.f32.mrf.mxu0
    %3888 = vdwg.mxu0
    %3889 = vmatprep.subr.bf16.mxu0 %v2637
    %3890 = vmatpush1.bf16.msra.mxu0 %v2636
    %3891 = vmatprep.subr.bf16.mxu0 %v2633
    %3892 = vmatpush1.bf16.msra.mxu0 %v2632
    %3893 = vmatprep.subr.bf16.mxu0 %v2629
    %3894 = vmatpush1.bf16.msra.mxu0 %v2628
    %3895 = vmatprep.subr.bf16.mxu0 %v2625
    %3896 = vmatpush1.bf16.msra.mxu0 %v2624
    %3897 = vmatprep.subr.bf16.mxu0 %v2621
    %3898 = vmatpush1.bf16.msra.mxu0 %v2620
    %3899 = vmatprep.subr.bf16.mxu0 %v2617
    %3900 = vmatpush1.bf16.msra.mxu0 %v2616
    %3901 = vmatprep.subr.bf16.mxu0 %v2613
    %3902 = vmatpush1.bf16.msra.mxu0 %v2612
    %3903 = vmatprep.subr.bf16.mxu0 %v2609
    %3904 = vmatpush1.bf16.msra.mxu0 %v2608
    %3905 = vmatprep.subr.bf16.mxu0 %v2669
    %3906 = vmatpush2.bf16.msra.mxu0 %v2668
    %3907 = vmatprep.subr.bf16.mxu0 %v2665
    %3908 = vmatpush2.bf16.msra.mxu0 %v2664
    %3909 = vmatprep.subr.bf16.mxu0 %v2661
    %3910 = vmatpush2.bf16.msra.mxu0 %v2660
    %3911 = vmatprep.subr.bf16.mxu0 %v2657
    %3912 = vmatpush2.bf16.msra.mxu0 %v2656
    %3913 = vmatprep.subr.bf16.mxu0 %v2653
    %3914 = vmatpush2.bf16.msra.mxu0 %v2652
    %3915 = vmatprep.subr.bf16.mxu0 %v2649
    %3916 = vmatpush2.bf16.msra.mxu0 %v2648
    %3917 = vmatprep.subr.bf16.mxu0 %v2645
    %3918 = vmatpush2.bf16.msra.mxu0 %v2644
    %3919 = vmatprep.subr.bf16.mxu0 %v2641
    %3920 = vmatpush2.bf16.msra.mxu0 %v2640
    %3921 = vmatprep.mubr.bf16.mxu0 %v335
    %3922 = vmatmul.mubr.bf16.gmra.mxu0 %v334
    %v3923 = vpop.f32.mrf.mxu0
    %v3924 = vadd.f32 %v3883, %v3923
    %v3925 = vpop.f32.mrf.mxu0
    %v3926 = vadd.f32 %v3885, %v3925
    %v3927 = vpop.f32.mrf.mxu0
    %v3928 = vpop.f32.mrf.mxu0
    %3929 = vdwg.mxu0
    %3930 = vmatprep.subr.bf16.mxu0 %v2701
    %3931 = vmatpush1.bf16.msra.mxu0 %v2700
    %3932 = vmatprep.subr.bf16.mxu0 %v2697
    %3933 = vmatpush1.bf16.msra.mxu0 %v2696
    %3934 = vmatprep.subr.bf16.mxu0 %v2693
    %3935 = vmatpush1.bf16.msra.mxu0 %v2692
    %3936 = vmatprep.subr.bf16.mxu0 %v2689
    %3937 = vmatpush1.bf16.msra.mxu0 %v2688
    %3938 = vmatprep.subr.bf16.mxu0 %v2685
    %3939 = vmatpush1.bf16.msra.mxu0 %v2684
    %3940 = vmatprep.subr.bf16.mxu0 %v2681
    %3941 = vmatpush1.bf16.msra.mxu0 %v2680
    %3942 = vmatprep.subr.bf16.mxu0 %v2677
    %3943 = vmatpush1.bf16.msra.mxu0 %v2676
    %3944 = vmatprep.subr.bf16.mxu0 %v2673
    %3945 = vmatpush1.bf16.msra.mxu0 %v2672
    %3946 = vmatprep.subr.bf16.mxu0 %v2733
    %3947 = vmatpush2.bf16.msra.mxu0 %v2732
    %3948 = vmatprep.subr.bf16.mxu0 %v2729
    %3949 = vmatpush2.bf16.msra.mxu0 %v2728
    %3950 = vmatprep.subr.bf16.mxu0 %v2725
    %3951 = vmatpush2.bf16.msra.mxu0 %v2724
    %3952 = vmatprep.subr.bf16.mxu0 %v2721
    %3953 = vmatpush2.bf16.msra.mxu0 %v2720
    %3954 = vmatprep.subr.bf16.mxu0 %v2717
    %3955 = vmatpush2.bf16.msra.mxu0 %v2716
    %3956 = vmatprep.subr.bf16.mxu0 %v2713
    %3957 = vmatpush2.bf16.msra.mxu0 %v2712
    %3958 = vmatprep.subr.bf16.mxu0 %v2709
    %3959 = vmatpush2.bf16.msra.mxu0 %v2708
    %3960 = vmatprep.subr.bf16.mxu0 %v2705
    %3961 = vmatpush2.bf16.msra.mxu0 %v2704
    %3962 = vmatprep.mubr.bf16.mxu0 %v337
    %3963 = vmatmul.mubr.bf16.gmra.mxu0 %v336
    %v3964 = vpop.f32.mrf.mxu0
    %v3965 = vadd.f32 %v3924, %v3964
    %v3966 = vpop.f32.mrf.mxu0
    %v3967 = vadd.f32 %v3926, %v3966
    %v3968 = vpop.f32.mrf.mxu0
    %v3969 = vpop.f32.mrf.mxu0
    %3970 = vdwg.mxu0
    %3971 = vmatprep.subr.bf16.mxu0 %v2765
    %3972 = vmatpush1.bf16.msra.mxu0 %v2764
    %3973 = vmatprep.subr.bf16.mxu0 %v2761
    %3974 = vmatpush1.bf16.msra.mxu0 %v2760
    %3975 = vmatprep.subr.bf16.mxu0 %v2757
    %3976 = vmatpush1.bf16.msra.mxu0 %v2756
    %3977 = vmatprep.subr.bf16.mxu0 %v2753
    %3978 = vmatpush1.bf16.msra.mxu0 %v2752
    %3979 = vmatprep.subr.bf16.mxu0 %v2749
    %3980 = vmatpush1.bf16.msra.mxu0 %v2748
    %3981 = vmatprep.subr.bf16.mxu0 %v2745
    %3982 = vmatpush1.bf16.msra.mxu0 %v2744
    %3983 = vmatprep.subr.bf16.mxu0 %v2741
    %3984 = vmatpush1.bf16.msra.mxu0 %v2740
    %3985 = vmatprep.subr.bf16.mxu0 %v2737
    %3986 = vmatpush1.bf16.msra.mxu0 %v2736
    %3987 = vmatprep.subr.bf16.mxu0 %v2797
    %3988 = vmatpush2.bf16.msra.mxu0 %v2796
    %3989 = vmatprep.subr.bf16.mxu0 %v2793
    %3990 = vmatpush2.bf16.msra.mxu0 %v2792
    %3991 = vmatprep.subr.bf16.mxu0 %v2789
    %3992 = vmatpush2.bf16.msra.mxu0 %v2788
    %3993 = vmatprep.subr.bf16.mxu0 %v2785
    %3994 = vmatpush2.bf16.msra.mxu0 %v2784
    %3995 = vmatprep.subr.bf16.mxu0 %v2781
    %3996 = vmatpush2.bf16.msra.mxu0 %v2780
    %3997 = vmatprep.subr.bf16.mxu0 %v2777
    %3998 = vmatpush2.bf16.msra.mxu0 %v2776
    %3999 = vmatprep.subr.bf16.mxu0 %v2773
    %4000 = vmatpush2.bf16.msra.mxu0 %v2772
    %4001 = vmatprep.subr.bf16.mxu0 %v2769
    %4002 = vmatpush2.bf16.msra.mxu0 %v2768
    %4003 = vmatprep.mubr.bf16.mxu0 %v339
    %4004 = vmatmul.mubr.bf16.gmra.mxu0 %v338
    %v4005 = vpop.f32.mrf.mxu0
    %v4006 = vadd.f32 %v3965, %v4005
    %v4007 = vpop.f32.mrf.mxu0
    %v4008 = vadd.f32 %v3967, %v4007
    %v4009 = vpop.f32.mrf.mxu0
    %v4010 = vpop.f32.mrf.mxu0
    %4011 = vdwg.mxu0
    %4012 = vmatprep.subr.bf16.mxu0 %v2829
    %4013 = vmatpush1.bf16.msra.mxu0 %v2828
    %4014 = vmatprep.subr.bf16.mxu0 %v2825
    %4015 = vmatpush1.bf16.msra.mxu0 %v2824
    %4016 = vmatprep.subr.bf16.mxu0 %v2821
    %4017 = vmatpush1.bf16.msra.mxu0 %v2820
    %4018 = vmatprep.subr.bf16.mxu0 %v2817
    %4019 = vmatpush1.bf16.msra.mxu0 %v2816
    %4020 = vmatprep.subr.bf16.mxu0 %v2813
    %4021 = vmatpush1.bf16.msra.mxu0 %v2812
    %4022 = vmatprep.subr.bf16.mxu0 %v2809
    %4023 = vmatpush1.bf16.msra.mxu0 %v2808
    %4024 = vmatprep.subr.bf16.mxu0 %v2805
    %4025 = vmatpush1.bf16.msra.mxu0 %v2804
    %4026 = vmatprep.subr.bf16.mxu0 %v2801
    %4027 = vmatpush1.bf16.msra.mxu0 %v2800
    %4028 = vmatprep.subr.bf16.mxu0 %v2861
    %4029 = vmatpush2.bf16.msra.mxu0 %v2860
    %4030 = vmatprep.subr.bf16.mxu0 %v2857
    %4031 = vmatpush2.bf16.msra.mxu0 %v2856
    %4032 = vmatprep.subr.bf16.mxu0 %v2853
    %4033 = vmatpush2.bf16.msra.mxu0 %v2852
    %4034 = vmatprep.subr.bf16.mxu0 %v2849
    %4035 = vmatpush2.bf16.msra.mxu0 %v2848
    %4036 = vmatprep.subr.bf16.mxu0 %v2845
    %4037 = vmatpush2.bf16.msra.mxu0 %v2844
    %4038 = vmatprep.subr.bf16.mxu0 %v2841
    %4039 = vmatpush2.bf16.msra.mxu0 %v2840
    %4040 = vmatprep.subr.bf16.mxu0 %v2837
    %4041 = vmatpush2.bf16.msra.mxu0 %v2836
    %4042 = vmatprep.subr.bf16.mxu0 %v2833
    %4043 = vmatpush2.bf16.msra.mxu0 %v2832
    %4044 = vmatprep.mubr.bf16.mxu0 %v341
    %4045 = vmatmul.mubr.bf16.gmra.mxu0 %v340
    %v4046 = vpop.f32.mrf.mxu0
    %v4047 = vadd.f32 %v4006, %v4046
    %v4048 = vpop.f32.mrf.mxu0
    %v4049 = vadd.f32 %v4008, %v4048
    %v4050 = vpop.f32.mrf.mxu0
    %v4051 = vpop.f32.mrf.mxu0
    %4052 = vdwg.mxu0
    %4053 = vmatprep.subr.bf16.mxu0 %v2893
    %4054 = vmatpush1.bf16.msra.mxu0 %v2892
    %4055 = vmatprep.subr.bf16.mxu0 %v2889
    %4056 = vmatpush1.bf16.msra.mxu0 %v2888
    %4057 = vmatprep.subr.bf16.mxu0 %v2885
    %4058 = vmatpush1.bf16.msra.mxu0 %v2884
    %4059 = vmatprep.subr.bf16.mxu0 %v2881
    %4060 = vmatpush1.bf16.msra.mxu0 %v2880
    %4061 = vmatprep.subr.bf16.mxu0 %v2877
    %4062 = vmatpush1.bf16.msra.mxu0 %v2876
    %4063 = vmatprep.subr.bf16.mxu0 %v2873
    %4064 = vmatpush1.bf16.msra.mxu0 %v2872
    %4065 = vmatprep.subr.bf16.mxu0 %v2869
    %4066 = vmatpush1.bf16.msra.mxu0 %v2868
    %4067 = vmatprep.subr.bf16.mxu0 %v2865
    %4068 = vmatpush1.bf16.msra.mxu0 %v2864
    %4069 = vmatprep.subr.bf16.mxu0 %v2925
    %4070 = vmatpush2.bf16.msra.mxu0 %v2924
    %4071 = vmatprep.subr.bf16.mxu0 %v2921
    %4072 = vmatpush2.bf16.msra.mxu0 %v2920
    %4073 = vmatprep.subr.bf16.mxu0 %v2917
    %4074 = vmatpush2.bf16.msra.mxu0 %v2916
    %4075 = vmatprep.subr.bf16.mxu0 %v2913
    %4076 = vmatpush2.bf16.msra.mxu0 %v2912
    %4077 = vmatprep.subr.bf16.mxu0 %v2909
    %4078 = vmatpush2.bf16.msra.mxu0 %v2908
    %4079 = vmatprep.subr.bf16.mxu0 %v2905
    %4080 = vmatpush2.bf16.msra.mxu0 %v2904
    %4081 = vmatprep.subr.bf16.mxu0 %v2901
    %4082 = vmatpush2.bf16.msra.mxu0 %v2900
    %4083 = vmatprep.subr.bf16.mxu0 %v2897
    %4084 = vmatpush2.bf16.msra.mxu0 %v2896
    %4085 = vmatprep.mubr.bf16.mxu0 %v343
    %4086 = vmatmul.mubr.bf16.gmra.mxu0 %v342
    %v4087 = vpop.f32.mrf.mxu0
    %v4088 = vadd.f32 %v4047, %v4087
    %v4089 = vpop.f32.mrf.mxu0
    %v4090 = vadd.f32 %v4049, %v4089
    %v4091 = vpop.f32.mrf.mxu0
    %v4092 = vpop.f32.mrf.mxu0
    %4093 = vdwg.mxu0
    %v4094 = vmax.f32 %v3760, 0.0
    %v4095 = vmax.f32 %v3762, 0.0
    %v4096 = vmax.f32 %v4088, 0.0
    %v4097 = vmax.f32 %v4090, 0.0
    %v4098 = vpack.c.bf16 %v4094, %v4094
    %v4099 = vpack.c.bf16 %v4095, %v4095
    %v4100 = vpack.c.bf16 %v4096, %v4096
    %v4101 = vpack.c.bf16 %v4097, %v4097
    %v4102 = vld [vmem:[#allocation8] sm:$0xf]
    %v4103 = vld [vmem:[#allocation8 + $0x4] sm:$0xf]
    %v4104 = vld [vmem:[#allocation8 + $0x8] sm:$0xf]
    %v4105 = vld [vmem:[#allocation8 + $0xc] sm:$0xf]
    %v4106 = vld [vmem:[#allocation8 + $0x10] sm:$0xf]
    %v4107 = vld [vmem:[#allocation8 + $0x14] sm:$0xf]
    %v4108 = vld [vmem:[#allocation8 + $0x18] sm:$0xf]
    %v4109 = vld [vmem:[#allocation8 + $0x1c] sm:$0xf]
    %v4110 = vld [vmem:[#allocation8 + $0x20] sm:$0xf]
    %v4111 = vld [vmem:[#allocation8 + $0x24] sm:$0xf]
    %v4112 = vld [vmem:[#allocation8 + $0x28] sm:$0xf]
    %v4113 = vld [vmem:[#allocation8 + $0x2c] sm:$0xf]
    %v4114 = vld [vmem:[#allocation8 + $0x30] sm:$0xf]
    %v4115 = vld [vmem:[#allocation8 + $0x34] sm:$0xf]
    %v4116 = vld [vmem:[#allocation8 + $0x38] sm:$0xf]
    %v4117 = vld [vmem:[#allocation8 + $0x3c] sm:$0xf]
    %v4118 = vld [vmem:[#allocation8 + $0x40] sm:$0xf]
    %v4119 = vld [vmem:[#allocation8 + $0x44] sm:$0xf]
    %v4120 = vld [vmem:[#allocation8 + $0x48] sm:$0xf]
    %v4121 = vld [vmem:[#allocation8 + $0x4c] sm:$0xf]
    %v4122 = vld [vmem:[#allocation8 + $0x50] sm:$0xf]
    %v4123 = vld [vmem:[#allocation8 + $0x54] sm:$0xf]
    %v4124 = vld [vmem:[#allocation8 + $0x58] sm:$0xf]
    %v4125 = vld [vmem:[#allocation8 + $0x5c] sm:$0xf]
    %v4126 = vld [vmem:[#allocation8 + $0x60] sm:$0xf]
    %v4127 = vld [vmem:[#allocation8 + $0x64] sm:$0xf]
    %v4128 = vld [vmem:[#allocation8 + $0x68] sm:$0xf]
    %v4129 = vld [vmem:[#allocation8 + $0x6c] sm:$0xf]
    %v4130 = vld [vmem:[#allocation8 + $0x70] sm:$0xf]
    %v4131 = vld [vmem:[#allocation8 + $0x74] sm:$0xf]
    %v4132 = vld [vmem:[#allocation8 + $0x78] sm:$0xf]
    %v4133 = vld [vmem:[#allocation8 + $0x7c] sm:$0xf]
    %v4134 = vld [vmem:[#allocation8 + $0x80] sm:$0xf]
    %v4135 = vld [vmem:[#allocation8 + $0x84] sm:$0xf]
    %v4136 = vld [vmem:[#allocation8 + $0x88] sm:$0xf]
    %v4137 = vld [vmem:[#allocation8 + $0x8c] sm:$0xf]
    %v4138 = vld [vmem:[#allocation8 + $0x90] sm:$0xf]
    %v4139 = vld [vmem:[#allocation8 + $0x94] sm:$0xf]
    %v4140 = vld [vmem:[#allocation8 + $0x98] sm:$0xf]
    %v4141 = vld [vmem:[#allocation8 + $0x9c] sm:$0xf]
    %v4142 = vld [vmem:[#allocation8 + $0xa0] sm:$0xf]
    %v4143 = vld [vmem:[#allocation8 + $0xa4] sm:$0xf]
    %v4144 = vld [vmem:[#allocation8 + $0xa8] sm:$0xf]
    %v4145 = vld [vmem:[#allocation8 + $0xac] sm:$0xf]
    %v4146 = vld [vmem:[#allocation8 + $0xb0] sm:$0xf]
    %v4147 = vld [vmem:[#allocation8 + $0xb4] sm:$0xf]
    %v4148 = vld [vmem:[#allocation8 + $0xb8] sm:$0xf]
    %v4149 = vld [vmem:[#allocation8 + $0xbc] sm:$0xf]
    %v4150 = vld [vmem:[#allocation8 + $0xc0] sm:$0xf]
    %v4151 = vld [vmem:[#allocation8 + $0xc4] sm:$0xf]
    %v4152 = vld [vmem:[#allocation8 + $0xc8] sm:$0xf]
    %v4153 = vld [vmem:[#allocation8 + $0xcc] sm:$0xf]
    %v4154 = vld [vmem:[#allocation8 + $0xd0] sm:$0xf]
    %v4155 = vld [vmem:[#allocation8 + $0xd4] sm:$0xf]
    %v4156 = vld [vmem:[#allocation8 + $0xd8] sm:$0xf]
    %v4157 = vld [vmem:[#allocation8 + $0xdc] sm:$0xf]
    %v4158 = vld [vmem:[#allocation8 + $0xe0] sm:$0xf]
    %v4159 = vld [vmem:[#allocation8 + $0xe4] sm:$0xf]
    %v4160 = vld [vmem:[#allocation8 + $0xe8] sm:$0xf]
    %v4161 = vld [vmem:[#allocation8 + $0xec] sm:$0xf]
    %v4162 = vld [vmem:[#allocation8 + $0xf0] sm:$0xf]
    %v4163 = vld [vmem:[#allocation8 + $0xf4] sm:$0xf]
    %v4164 = vld [vmem:[#allocation8 + $0xf8] sm:$0xf]
    %v4165 = vld [vmem:[#allocation8 + $0xfc] sm:$0xf]
    %v4166 = vld [vmem:[#allocation10] sm:$0x1]
    %v4168 = vlaneseq
    %v4169 = vshrl.u32 %v4168, 7
    %v4170 = vsub.s32 0, %v4169
    %v4171 = vrot.slane %v4166, %v4170
    %v4237 = vunpack.c.l.b16 %v4102
    %v4238 = vunpack.c.l.b16 %v4103
    %v4239 = vunpack.c.l.b16 %v4104
    %v4240 = vunpack.c.l.b16 %v4105
    %v4241 = vunpack.c.l.b16 %v4106
    %v4242 = vunpack.c.l.b16 %v4107
    %v4243 = vunpack.c.l.b16 %v4108
    %v4244 = vunpack.c.l.b16 %v4109
    %v4245 = vunpack.c.l.b16 %v4110
    %v4246 = vunpack.c.l.b16 %v4111
    %v4247 = vunpack.c.l.b16 %v4112
    %v4248 = vunpack.c.l.b16 %v4113
    %v4249 = vunpack.c.l.b16 %v4114
    %v4250 = vunpack.c.l.b16 %v4115
    %v4251 = vunpack.c.l.b16 %v4116
    %v4252 = vunpack.c.l.b16 %v4117
    %v4253 = vunpack.c.l.b16 %v4118
    %v4254 = vunpack.c.l.b16 %v4119
    %v4255 = vunpack.c.l.b16 %v4120
    %v4256 = vunpack.c.l.b16 %v4121
    %v4257 = vunpack.c.l.b16 %v4122
    %v4258 = vunpack.c.l.b16 %v4123
    %v4259 = vunpack.c.l.b16 %v4124
    %v4260 = vunpack.c.l.b16 %v4125
    %v4261 = vunpack.c.l.b16 %v4126
    %v4262 = vunpack.c.l.b16 %v4127
    %v4263 = vunpack.c.l.b16 %v4128
    %v4264 = vunpack.c.l.b16 %v4129
    %v4265 = vunpack.c.l.b16 %v4130
    %v4266 = vunpack.c.l.b16 %v4131
    %v4267 = vunpack.c.l.b16 %v4132
    %v4268 = vunpack.c.l.b16 %v4133
    %v4269 = vunpack.c.l.b16 %v4134
    %v4270 = vunpack.c.l.b16 %v4135
    %v4271 = vunpack.c.l.b16 %v4136
    %v4272 = vunpack.c.l.b16 %v4137
    %v4273 = vunpack.c.l.b16 %v4138
    %v4274 = vunpack.c.l.b16 %v4139
    %v4275 = vunpack.c.l.b16 %v4140
    %v4276 = vunpack.c.l.b16 %v4141
    %v4277 = vunpack.c.l.b16 %v4142
    %v4278 = vunpack.c.l.b16 %v4143
    %v4279 = vunpack.c.l.b16 %v4144
    %v4280 = vunpack.c.l.b16 %v4145
    %v4281 = vunpack.c.l.b16 %v4146
    %v4282 = vunpack.c.l.b16 %v4147
    %v4283 = vunpack.c.l.b16 %v4148
    %v4284 = vunpack.c.l.b16 %v4149
    %v4285 = vunpack.c.l.b16 %v4150
    %v4286 = vunpack.c.l.b16 %v4151
    %v4287 = vunpack.c.l.b16 %v4152
    %v4288 = vunpack.c.l.b16 %v4153
    %v4289 = vunpack.c.l.b16 %v4154
    %v4290 = vunpack.c.l.b16 %v4155
    %v4291 = vunpack.c.l.b16 %v4156
    %v4292 = vunpack.c.l.b16 %v4157
    %v4293 = vunpack.c.l.b16 %v4158
    %v4294 = vunpack.c.l.b16 %v4159
    %v4295 = vunpack.c.l.b16 %v4160
    %v4296 = vunpack.c.l.b16 %v4161
    %v4297 = vunpack.c.l.b16 %v4162
    %v4298 = vunpack.c.l.b16 %v4163
    %v4299 = vunpack.c.l.b16 %v4164
    %v4300 = vunpack.c.l.b16 %v4165
    %v4301 = vpack.c.b16 %v4238, %v4237
    %v4302 = vpack.c.b16 %v4240, %v4239
    %v4303 = vpack.c.b16 %v4242, %v4241
    %v4304 = vpack.c.b16 %v4244, %v4243
    %v4305 = vpack.c.b16 %v4246, %v4245
    %v4306 = vpack.c.b16 %v4248, %v4247
    %v4307 = vpack.c.b16 %v4250, %v4249
    %v4308 = vpack.c.b16 %v4252, %v4251
    %v4309 = vpack.c.b16 %v4254, %v4253
    %v4310 = vpack.c.b16 %v4256, %v4255
    %v4311 = vpack.c.b16 %v4258, %v4257
    %v4312 = vpack.c.b16 %v4260, %v4259
    %v4313 = vpack.c.b16 %v4262, %v4261
    %v4314 = vpack.c.b16 %v4264, %v4263
    %v4315 = vpack.c.b16 %v4266, %v4265
    %v4316 = vpack.c.b16 %v4268, %v4267
    %v4317 = vpack.c.b16 %v4270, %v4269
    %v4318 = vpack.c.b16 %v4272, %v4271
    %v4319 = vpack.c.b16 %v4274, %v4273
    %v4320 = vpack.c.b16 %v4276, %v4275
    %v4321 = vpack.c.b16 %v4278, %v4277
    %v4322 = vpack.c.b16 %v4280, %v4279
    %v4323 = vpack.c.b16 %v4282, %v4281
    %v4324 = vpack.c.b16 %v4284, %v4283
    %v4325 = vpack.c.b16 %v4286, %v4285
    %v4326 = vpack.c.b16 %v4288, %v4287
    %v4327 = vpack.c.b16 %v4290, %v4289
    %v4328 = vpack.c.b16 %v4292, %v4291
    %v4329 = vpack.c.b16 %v4294, %v4293
    %v4330 = vpack.c.b16 %v4296, %v4295
    %v4331 = vpack.c.b16 %v4298, %v4297
    %v4332 = vpack.c.b16 %v4300, %v4299
    %4365 = vmatprep.subr.bf16.mxu0 0
    %4366 = vmatpush1.bf16.msra.mxu0 %v4308
    %4367 = vmatprep.subr.bf16.mxu0 0
    %4368 = vmatpush1.bf16.msra.mxu0 %v4307
    %4369 = vmatprep.subr.bf16.mxu0 0
    %4370 = vmatpush1.bf16.msra.mxu0 %v4306
    %4371 = vmatprep.subr.bf16.mxu0 0
    %4372 = vmatpush1.bf16.msra.mxu0 %v4305
    %4373 = vmatprep.subr.bf16.mxu0 0
    %4374 = vmatpush1.bf16.msra.mxu0 %v4304
    %4375 = vmatprep.subr.bf16.mxu0 0
    %4376 = vmatpush1.bf16.msra.mxu0 %v4303
    %4377 = vmatprep.subr.bf16.mxu0 0
    %4378 = vmatpush1.bf16.msra.mxu0 %v4302
    %4379 = vmatprep.subr.bf16.mxu0 0
    %4380 = vmatpush1.bf16.msra.mxu0 %v4301
    %4381 = vmatprep.subr.bf16.mxu0 0
    %4382 = vmatpush2.bf16.msra.mxu0 %v4316
    %4383 = vmatprep.subr.bf16.mxu0 0
    %4384 = vmatpush2.bf16.msra.mxu0 %v4315
    %4385 = vmatprep.subr.bf16.mxu0 0
    %4386 = vmatpush2.bf16.msra.mxu0 %v4314
    %4387 = vmatprep.subr.bf16.mxu0 0
    %4388 = vmatpush2.bf16.msra.mxu0 %v4313
    %4389 = vmatprep.subr.bf16.mxu0 0
    %4390 = vmatpush2.bf16.msra.mxu0 %v4312
    %4391 = vmatprep.subr.bf16.mxu0 0
    %4392 = vmatpush2.bf16.msra.mxu0 %v4311
    %4393 = vmatprep.subr.bf16.mxu0 0
    %4394 = vmatpush2.bf16.msra.mxu0 %v4310
    %4395 = vmatprep.subr.bf16.mxu0 0
    %4396 = vmatpush2.bf16.msra.mxu0 %v4309
    %4397 = vmatprep.mubr.bf16.mxu0 %v4099
    %4398 = vmatmul.mubr.bf16.gmra.mxu0 %v4098
    %v4399 = vpop.f32.mrf.mxu0
    %v4400 = vadd.f32 %v4171, %v4399
    %v4401 = vpop.f32.mrf.mxu0
    %v4402 = vpop.f32.mrf.mxu0
    %v4403 = vpop.f32.mrf.mxu0
    %4404 = vdwg.mxu0
    %4405 = vmatprep.subr.bf16.mxu0 0
    %4406 = vmatpush1.bf16.msra.mxu0 %v4324
    %4407 = vmatprep.subr.bf16.mxu0 0
    %4408 = vmatpush1.bf16.msra.mxu0 %v4323
    %4409 = vmatprep.subr.bf16.mxu0 0
    %4410 = vmatpush1.bf16.msra.mxu0 %v4322
    %4411 = vmatprep.subr.bf16.mxu0 0
    %4412 = vmatpush1.bf16.msra.mxu0 %v4321
    %4413 = vmatprep.subr.bf16.mxu0 0
    %4414 = vmatpush1.bf16.msra.mxu0 %v4320
    %4415 = vmatprep.subr.bf16.mxu0 0
    %4416 = vmatpush1.bf16.msra.mxu0 %v4319
    %4417 = vmatprep.subr.bf16.mxu0 0
    %4418 = vmatpush1.bf16.msra.mxu0 %v4318
    %4419 = vmatprep.subr.bf16.mxu0 0
    %4420 = vmatpush1.bf16.msra.mxu0 %v4317
    %4421 = vmatprep.subr.bf16.mxu0 0
    %4422 = vmatpush2.bf16.msra.mxu0 %v4332
    %4423 = vmatprep.subr.bf16.mxu0 0
    %4424 = vmatpush2.bf16.msra.mxu0 %v4331
    %4425 = vmatprep.subr.bf16.mxu0 0
    %4426 = vmatpush2.bf16.msra.mxu0 %v4330
    %4427 = vmatprep.subr.bf16.mxu0 0
    %4428 = vmatpush2.bf16.msra.mxu0 %v4329
    %4429 = vmatprep.subr.bf16.mxu0 0
    %4430 = vmatpush2.bf16.msra.mxu0 %v4328
    %4431 = vmatprep.subr.bf16.mxu0 0
    %4432 = vmatpush2.bf16.msra.mxu0 %v4327
    %4433 = vmatprep.subr.bf16.mxu0 0
    %4434 = vmatpush2.bf16.msra.mxu0 %v4326
    %4435 = vmatprep.subr.bf16.mxu0 0
    %4436 = vmatpush2.bf16.msra.mxu0 %v4325
    %4437 = vmatprep.mubr.bf16.mxu0 %v4101
    %4438 = vmatmul.mubr.bf16.gmra.mxu0 %v4100
    %v4439 = vpop.f32.mrf.mxu0
    %v4440 = vadd.f32 %v4400, %v4439
    %v4441 = vpop.f32.mrf.mxu0
    %v4442 = vpop.f32.mrf.mxu0
    %v4443 = vpop.f32.mrf.mxu0
    %4444 = vdwg.mxu0
    %4445 = vst [vmem:[#allocation11] sm:$0x3] %v4440
    // Predicated region
    $region42: #{tpu_custom_call.1} parent=1 // pred_check
      _
    $region43: #{tpu_custom_call.1} parent=1 // pred_check_branch
      %4447 = sbr.rel (0) target = $region45
    $region44: #{tpu_custom_call.1} parent=1 // pred_region
      %s4449 = ssub.s32 32, 32
      %4450 = vsyncadd [#allocation4], %s4449
      %s4452 = sshll.u32 [#allocation11], 4
      %s4453 = int_to_ptr.vmem [resolvable:$true] %s4452
      %4455 = dma.vmem_to_hbm [thread:$0]  %s4453, 32, %s5, [#allocation4]
    $region45: #{tpu_custom_call.1} parent=1 // pred_fallthru
      _
    // Predicated region
    $region46: #{tpu_custom_call.1} parent=1 // pred_check
      _
    $region47: #{tpu_custom_call.1} parent=1 // pred_check_branch
      %4457 = sbr.rel (0) target = $region49
    $region48: #{tpu_custom_call.1} parent=1 // pred_region
      %4458 = dma.done [#allocation4], 32
    $region49: #{tpu_custom_call.1} parent=1 // pred_fallthru
      _
    %4459 = vsyncpa [#allocation3], 1
    %4460 = vsyncpa [#allocation6], 1
    %4461 = vsyncpa [#allocation9], 1
    %4462 = vsyncpa [#allocation4], 1

</llo_original>
